<compile_context>
chip_gen: v7x
topology: tpu7x:2x2x1
jax: 0.10.0
libtpu: 0.0.40
codegen_flags: <defaults>
</compile_context>

<pallas_src>
import functools

import jax
import jax.numpy as jnp
from jax.experimental import pallas as pl
from jax.experimental.pallas import tpu as pltpu


# ----------------------------------------------------------------------------
# AWQ pseudo-quantization (setup glue, mirrors awq pseudo_quantize_tensor with
# zero_point=True).  Groups run along the input dimension K.  Two int4 values
# are packed per int8 byte: within each group, byte row j holds q[j] (low
# nibble) and q[j + G/2] (high nibble), so the in-kernel unpack writes two
# contiguous half-group slabs and needs no sublane interleave.
# ----------------------------------------------------------------------------
def pseudo_quantize(w, w_bit=4, group_size=128):
    assert w_bit == 4, "only 4-bit packing implemented"
    K, N = w.shape
    assert K % group_size == 0
    g = K // group_size
    wg = w.reshape(g, group_size, N)
    max_int = (1 << w_bit) - 1
    max_val = wg.max(axis=1, keepdims=True)
    min_val = wg.min(axis=1, keepdims=True)
    scales = jnp.clip(max_val - min_val, 1e-5, None) / max_int
    zeros = jnp.round(-min_val / scales)
    q = jnp.clip(jnp.round(wg / scales) + zeros, 0, max_int).astype(jnp.int32)

    G2 = group_size // 2
    lo = q[:, :G2, :]
    hi = q[:, G2:, :]
    packed_u8 = (lo | (hi << 4)).astype(jnp.uint8).reshape(K // 2, N)
    packed = jax.lax.bitcast_convert_type(packed_u8, jnp.int8)       # [K/2, N]

    scales_b = scales.reshape(g, N).astype(jnp.bfloat16)              # per-group scale
    zscaled_b = (zeros * scales).reshape(g, N).astype(jnp.bfloat16)   # zero*scale
    return packed, scales_b, zscaled_b


# ----------------------------------------------------------------------------
# Pallas kernel: fused int4 unpack + AWQ dequant + matmul (WQLinear_GEMM fwd).
#   x_ref  : [tm, tk]      bf16 activation tile
#   qw_ref : [tk//2, tn]   int8 packed int4 weight tile
#   s_ref  : [gpt, tn]     bf16 per-group scales for this K tile
#   zs_ref : [gpt, tn]     bf16 per-group zero*scale for this K tile
#   o_ref  : [tm, tn]      bf16 output tile
#   w_ref  : [tk, tn]      bf16 VMEM scratch: dequantized weight tile
#   acc_ref: [tm, tn]      f32  VMEM scratch: K accumulator
# Grid is (N//tn, M//tm, K//tk).  If K is not split (k_tiles == 1) the weight
# tile only changes with the N index, so dequant runs once per weight tile
# (guarded on program_id(1) == 0) and is reused across all M tiles.  If K is
# split, dequant runs every step and the f32 accumulator carries the K sum.
# ----------------------------------------------------------------------------
def awq_linear_kernel(x_ref, qw_ref, s_ref, zs_ref, o_ref, w_ref, acc_ref,
                      *, k_tiles, activation):
    gpt = s_ref.shape[0]          # groups per K tile
    tk = w_ref.shape[0]
    G = tk // gpt                 # quant group size along K
    G2 = G // 2

    def dequant_group(gi, dynamic=False):
        p_start = gi * G2
        w_start = gi * G
        if dynamic:
            p_start = pl.multiple_of(p_start, G2)
            w_start = pl.multiple_of(w_start, G)
        # int8 packed byte -> two int4 nibbles (arithmetic shift + mask is
        # correct for sign-extended bytes), bf16 dequant math on the VPU.
        p = qw_ref[pl.ds(p_start, G2), :].astype(jnp.int32)
        s = s_ref[pl.ds(gi, 1), :]
        zs = zs_ref[pl.ds(gi, 1), :]
        lo = (p & 0xF).astype(jnp.float32).astype(jnp.bfloat16)
        hi = ((p >> 4) & 0xF).astype(jnp.float32).astype(jnp.bfloat16)
        w_ref[pl.ds(w_start, G2), :] = lo * s - zs
        w_ref[pl.ds(w_start + G2, G2), :] = hi * s - zs

    def dequant_tile():
        if gpt <= 16:
            # Small static group count: full unroll keeps everything static.
            for gi in range(gpt):
                dequant_group(gi)
        else:
            # Large group count (real LLM K): bounded live ranges via fori.
            def body(gi, carry):
                dequant_group(gi, dynamic=True)
                return carry
            jax.lax.fori_loop(0, gpt, body, 0, unroll=2)

    if k_tiles > 1:
        # Weight tile changes every grid step -> dequant every step.
        dequant_tile()
    else:
        # Weight tile fixed across the M axis -> dequant once per N tile.
        @pl.when(pl.program_id(1) == 0)
        def _():
            dequant_tile()

    @pl.when(pl.program_id(2) == 0)
    def _init():
        acc_ref[...] = jnp.zeros_like(acc_ref)

    acc_ref[...] += jnp.dot(x_ref[...], w_ref[...],
                            preferred_element_type=jnp.float32)

    @pl.when(pl.program_id(2) == k_tiles - 1)
    def _finalize():
        y = acc_ref[...]
        if activation == "gelu":
            y = jax.nn.gelu(y)       # EUP slot, essentially free in epilogue
        o_ref[...] = y.astype(o_ref.dtype)


def _round_up(x, m):
    return (x + m - 1) // m * m


def _pick_vmem_limit(tile_bytes):
    """Generation-aware VMEM limit: actual need + headroom, capped at 3/4 of
    physical VMEM (64 MiB on v7x, 128 MiB on v5e/v6e)."""
    cap = 96 * 1024 * 1024
    try:
        info = pltpu.get_tpu_info()
        cap = int(getattr(info, "vmem_capacity_bytes", 128 * 1024 * 1024)) * 3 // 4
    except Exception:
        pass
    want = int(tile_bytes * 1.25) + (4 << 20)
    return max(16 << 20, min(want, cap))


def _pick_tk(K, G, max_tk=2048):
    """Largest multiple of G that divides K and is <= max_tk (full K if it fits)."""
    if K <= max_tk:
        return K
    best = G
    t = G
    while t <= max_tk:
        if K % t == 0:
            best = t
        t += G
    return best


def awq_linear(x2d, qweight, scales, zscaled, *, tm=128, tn=512, tk=None,
               activation=None, out_dtype=jnp.bfloat16):
    """y[M, N] = act(x2d[M, K] @ dequant(packed int4, scales, zero*scale))."""
    M, K = x2d.shape
    K2, N = qweight.shape
    assert K == 2 * K2
    g_total = scales.shape[0]
    assert K % g_total == 0
    G = K // g_total

    # Lane-dense output tile (multiple of 128 lanes, or the whole N).
    tn = min(tn, N)
    assert N % tn == 0 and (tn % 128 == 0 or tn == N), (N, tn)
    # TODO(synk): pad N for vocab sizes that are not multiples of 128 / tn.

    # K split (feedback: required for real LLM K on v7x's 64 MiB VMEM).
    if tk is None:
        tk = _pick_tk(K, G)
    tk = min(tk, K)
    assert tk % G == 0 and K % tk == 0, (K, tk, G)
    nK = K // tk
    gpt = tk // G

    # Activations in bf16 (halves x HBM traffic, native MXU operand).
    x_bf = x2d.astype(jnp.bfloat16)
    tm = min(tm, _round_up(M, 16))
    Mp = _round_up(M, tm)
    if Mp != M:
        x_bf = jnp.pad(x_bf, ((0, Mp - M), (0, 0)))

    # Scales reshaped so each K tile's groups are a full, statically-indexed
    # block (avoids sub-8-row BlockSpec blocks and dynamic sublane slicing).
    s_r = scales.reshape(nK, gpt, N)
    zs_r = zscaled.reshape(nK, gpt, N)

    # N outermost so (when nK == 1) the dequantized weight tile stays resident
    # across M tiles; K innermost so the f32 accumulator is revisited
    # consecutively.
    grid = (N // tn, Mp // tm, nK)

    out_isize = jnp.dtype(out_dtype).itemsize
    tile_bytes = (2 * (tm * tk * 2 + (tk // 2) * tn + 2 * gpt * tn * 2)  # dbl-buf inputs
                  + 2 * tm * tn * out_isize                               # dbl-buf output
                  + tk * tn * 2 + tm * tn * 4)                            # scratches
    vmem_limit = _pick_vmem_limit(tile_bytes)

    cost = pl.CostEstimate(
        flops=2 * Mp * K * N,
        transcendentals=(Mp * N if activation == "gelu" else 0),
        bytes_accessed=int((N // tn) * Mp * K * 2                    # x re-read per N tile
                           + (Mp // tm if nK > 1 else 1) * (K // 2) * N  # packed int4
                           + (N // tn) * 2 * g_total * N * 2         # scales + zero*scale
                           + Mp * N * out_isize),                    # output
    )

    kernel = functools.partial(awq_linear_kernel, k_tiles=nK, activation=activation)

    out = pl.pallas_call(
        kernel,
        out_shape=jax.ShapeDtypeStruct((Mp, N), out_dtype),
        grid_spec=pltpu.PrefetchScalarGridSpec(
            num_scalar_prefetch=0,
            grid=grid,
            in_specs=[
                pl.BlockSpec((tm, tk), lambda n, m, k: (m, k)),
                pl.BlockSpec((tk // 2, tn), lambda n, m, k: (k, n)),
                pl.BlockSpec((None, gpt, tn), lambda n, m, k: (k, 0, n)),
                pl.BlockSpec((None, gpt, tn), lambda n, m, k: (k, 0, n)),
            ],
            out_specs=pl.BlockSpec((tm, tn), lambda n, m, k: (m, n)),
            scratch_shapes=[pltpu.VMEM((tk, tn), jnp.bfloat16),
                            pltpu.VMEM((tm, tn), jnp.float32)],
        ),
        compiler_params=pltpu.CompilerParams(
            # N axis parallel (megacore sharding); M and K must stay sequential
            # (weight-scratch reuse across M, accumulator carry across K).
            dimension_semantics=("parallel", "arbitrary", "arbitrary"),
            vmem_limit_bytes=vmem_limit,
        ),
        cost_estimate=cost,
    )(x_bf, qweight, s_r, zs_r)

    return out[:M] if Mp != M else out


# ----------------------------------------------------------------------------
# Tiny synthetic AWQ-quantized causal LM ("the wrapped self.model").
# ----------------------------------------------------------------------------
class BaseAWQForCausalLMPallas:
    def __init__(self, params, quant_config):
        self.params = params
        self.quant_config = quant_config
        self.is_quantized = True
        self.model_type = "synthetic"
        self.search_result = None

    def forward(self, input_ids):
        """input_ids: int32 [B, S] -> logits float32 [B, S, V]."""
        p = self.params
        B, S = input_ids.shape
        H = p["embed"].shape[1]

        # Embedding lookup (glue).
        h = jnp.take(p["embed"], input_ids, axis=0)            # [B, S, H] f32
        x2d = h.reshape(B * S, H)

        # AWQ-quantized MLP block with residual (hot path = Pallas kernel).
        up = awq_linear(x2d, *p["w1"], activation="gelu")       # [B*S, FFN] bf16, fused GELU
        down = awq_linear(up, *p["w2"], tk=256)                 # [B*S, H] bf16 (K-split path)
        # TODO(synk): fuse the residual add into the kernel epilogue via an
        # extra input / input_output_aliases.
        x2d = x2d + down.astype(jnp.float32)

        # AWQ-quantized lm_head.
        logits = awq_linear(x2d, *p["lm_head"]).astype(jnp.float32)
        return logits.reshape(B, S, -1)

    __call__ = forward

    def generate(self, input_ids):
        # Greedy next-token from the last position (inference-mode equivalent).
        logits = self.forward(input_ids)
        return jnp.argmax(logits[:, -1, :], axis=-1)


def build_model(key, *, vocab=512, hidden=256, ffn=512, w_bit=4, group_size=128):
    quant_config = {"zero_point": True, "q_group_size": group_size,
                    "w_bit": w_bit, "version": "GEMM"}
    k_e, k1, k2, k3 = jax.random.split(key, 4)
    quant = functools.partial(pseudo_quantize, w_bit=w_bit, group_size=group_size)
    params = {
        "embed": jax.random.normal(k_e, (vocab, hidden), jnp.float32) * 0.02,
        "w1": quant(jax.random.normal(k1, (hidden, ffn), jnp.float32) * 0.05),
        "w2": quant(jax.random.normal(k2, (ffn, hidden), jnp.float32) * 0.05),
        "lm_head": quant(jax.random.normal(k3, (hidden, vocab), jnp.float32) * 0.05),
    }
    return BaseAWQForCausalLMPallas(params, quant_config)


# TODO(synk): quantize()/_awq_search()/save_quantized()/from_quantized() are
# calibration-search and checkpoint/HF-hub machinery (datasets, hooks, file
# I/O) with no kernel equivalent; only the quantized forward pass is here.
# TODO(synk): int8-direct MXU path (v5e/v6e) and decode-regime per-group
# dequant/matmul interleave are further optimizations left out for clarity.

if __name__ == "__main__":
    key = jax.random.PRNGKey(0)
    k_model, k_inp = jax.random.split(key)

    VOCAB, HIDDEN, FFN, GROUP = 512, 256, 512, 128
    model = build_model(k_model, vocab=VOCAB, hidden=HIDDEN, ffn=FFN,
                        group_size=GROUP)

    B, S = 2, 64
    input_ids = jax.random.randint(k_inp, (B, S), 0, VOCAB, jnp.int32)

    fwd = jax.jit(model.forward)
    logits = fwd(input_ids)
    jax.block_until_ready(logits)

    # Reference: plain-JAX int4 unpack + bf16 dequant + matmul (same math).
    def ref_dequant(qpacked, s, zs):
        K2, N = qpacked.shape
        g = s.shape[0]
        G = (K2 * 2) // g
        p = qpacked.astype(jnp.int32)
        lo = (p & 0xF).astype(jnp.bfloat16).reshape(g, G // 2, N)
        hi = ((p >> 4) & 0xF).astype(jnp.bfloat16).reshape(g, G // 2, N)
        q = jnp.concatenate([lo, hi], axis=1)                  # (g, G, N)
        w = q * s[:, None, :] - zs[:, None, :]
        return w.reshape(K2 * 2, N)

    def ref_linear(x2d, qw, s, zs, activation=None):
        y = jnp.dot(x2d.astype(jnp.bfloat16), ref_dequant(qw, s, zs),
                    preferred_element_type=jnp.float32)
        if activation == "gelu":
            y = jax.nn.gelu(y)
        return y.astype(jnp.bfloat16)

    p = model.params
    h = jnp.take(p["embed"], input_ids, axis=0).reshape(B * S, HIDDEN)
    ref_up = ref_linear(h, *p["w1"], activation="gelu")
    ref_down = ref_linear(ref_up, *p["w2"])
    ref_x = h + ref_down.astype(jnp.float32)
    ref_logits = ref_linear(ref_x, *p["lm_head"]).astype(jnp.float32)
    ref_logits = ref_logits.reshape(B, S, VOCAB)

    assert logits.shape == (B, S, VOCAB)
    max_err = float(jnp.max(jnp.abs(logits - ref_logits)))
    assert jnp.allclose(logits, ref_logits, atol=5e-3, rtol=5e-2), max_err

    print("KERNEL_OK")
</pallas_src>

<mosaic_0001>
module attributes {stable_mosaic.version = 11 : i64} {
  func.func @awq_linear_kernel(%arg0: i32, %arg1: i32, %arg2: i32, %arg3: memref<128x256xbf16, #tpu.memory_space<vmem>>, %arg4: memref<128x512xi8, #tpu.memory_space<vmem>>, %arg5: memref<1x2x512xbf16, #tpu.memory_space<vmem>>, %arg6: memref<1x2x512xbf16, #tpu.memory_space<vmem>>, %arg7: memref<128x512xbf16, #tpu.memory_space<vmem>>, %arg8: memref<256x512xbf16, #tpu.memory_space<vmem>>, %arg9: memref<128x512xf32, #tpu.memory_space<vmem>>) attributes {dimension_semantics = [#tpu.dimension_semantics<parallel>, #tpu.dimension_semantics<arbitrary>, #tpu.dimension_semantics<arbitrary>], iteration_bounds = array<i64: 1, 1, 1>, scalar_prefetch = 0 : i64, scratch_operands = 2 : i64, tpu.core_type = #tpu.core_type<tc>, window_params = [{transform_indices = @transform_0, window_bounds = array<i64: 128, 256>}, {transform_indices = @transform_1, window_bounds = array<i64: 128, 512>}, {transform_indices = @transform_2, window_bounds = array<i64: 1, 2, 512>}, {transform_indices = @transform_3, window_bounds = array<i64: 1, 2, 512>}, {transform_indices = @transform_4, window_bounds = array<i64: 128, 512>}]} {
    %c0_i32 = arith.constant 0 : i32
    %0 = arith.cmpi eq, %arg1, %c0_i32 : i32
    %1 = arith.extui %0 : i1 to i32
    %c0_i32_0 = arith.constant 0 : i32
    %2 = arith.cmpi ne, %1, %c0_i32_0 : i32
    scf.if %2 {
      %c0_12 = arith.constant 0 : index
      %c0_13 = arith.constant 0 : index
      %15 = vector.load %arg4[%c0_12, %c0_13] : memref<128x512xi8, #tpu.memory_space<vmem>>, vector<64x512xi8>
      %16 = arith.extsi %15 : vector<64x512xi8> to vector<64x512xi32>
      %c0_14 = arith.constant 0 : index
      %c0_15 = arith.constant 0 : index
      %c0_16 = arith.constant 0 : index
      %17 = vector.load %arg5[%c0_14, %c0_15, %c0_16] : memref<1x2x512xbf16, #tpu.memory_space<vmem>>, vector<1x1x512xbf16>
      %18 = vector.shape_cast %17 : vector<1x1x512xbf16> to vector<1x512xbf16>
      %c0_17 = arith.constant 0 : index
      %c0_18 = arith.constant 0 : index
      %c0_19 = arith.constant 0 : index
      %19 = vector.load %arg6[%c0_17, %c0_18, %c0_19] : memref<1x2x512xbf16, #tpu.memory_space<vmem>>, vector<1x1x512xbf16>
      %20 = vector.shape_cast %19 : vector<1x1x512xbf16> to vector<1x512xbf16>
      %c15_i32 = arith.constant 15 : i32
      %21 = vector.broadcast %c15_i32 : i32 to vector<64x512xi32>
      %22 = arith.andi %16, %21 : vector<64x512xi32>
      %23 = arith.sitofp %22 : vector<64x512xi32> to vector<64x512xf32>
      %24 = arith.truncf %23 : vector<64x512xf32> to vector<64x512xbf16>
      %c4_i32 = arith.constant 4 : i32
      %25 = vector.broadcast %c4_i32 : i32 to vector<64x512xi32>
      %26 = arith.shrsi %16, %25 : vector<64x512xi32>
      %c15_i32_20 = arith.constant 15 : i32
      %27 = vector.broadcast %c15_i32_20 : i32 to vector<64x512xi32>
      %28 = arith.andi %26, %27 : vector<64x512xi32>
      %29 = arith.sitofp %28 : vector<64x512xi32> to vector<64x512xf32>
      %30 = arith.truncf %29 : vector<64x512xf32> to vector<64x512xbf16>
      %31 = vector.broadcast %18 : vector<1x512xbf16> to vector<64x512xbf16>
      %32 = arith.mulf %24, %31 : vector<64x512xbf16>
      %33 = vector.broadcast %20 : vector<1x512xbf16> to vector<64x512xbf16>
      %34 = arith.subf %32, %33 : vector<64x512xbf16>
      %c0_21 = arith.constant 0 : index
      %c0_22 = arith.constant 0 : index
      %35 = vector.load %arg8[%c0_21, %c0_22] : memref<256x512xbf16, #tpu.memory_space<vmem>>, vector<64x512xbf16>
      tpu.vector_store %arg8[%c0_21, %c0_22], %34 {strides = array<i32>} : memref<256x512xbf16, #tpu.memory_space<vmem>>, vector<64x512xbf16>,
      %36 = vector.broadcast %18 : vector<1x512xbf16> to vector<64x512xbf16>
      %37 = arith.mulf %30, %36 : vector<64x512xbf16>
      %38 = vector.broadcast %20 : vector<1x512xbf16> to vector<64x512xbf16>
      %39 = arith.subf %37, %38 : vector<64x512xbf16>
      %c64 = arith.constant 64 : index
      %c0_23 = arith.constant 0 : index
      %40 = vector.load %arg8[%c64, %c0_23] : memref<256x512xbf16, #tpu.memory_space<vmem>>, vector<64x512xbf16>
      tpu.vector_store %arg8[%c64, %c0_23], %39 {strides = array<i32>} : memref<256x512xbf16, #tpu.memory_space<vmem>>, vector<64x512xbf16>,
      %c64_24 = arith.constant 64 : index
      %c0_25 = arith.constant 0 : index
      %41 = vector.load %arg4[%c64_24, %c0_25] : memref<128x512xi8, #tpu.memory_space<vmem>>, vector<64x512xi8>
      %42 = arith.extsi %41 : vector<64x512xi8> to vector<64x512xi32>
      %c0_26 = arith.constant 0 : index
      %c1 = arith.constant 1 : index
      %c0_27 = arith.constant 0 : index
      %43 = vector.load %arg5[%c0_26, %c1, %c0_27] : memref<1x2x512xbf16, #tpu.memory_space<vmem>>, vector<1x1x512xbf16>
      %44 = vector.shape_cast %43 : vector<1x1x512xbf16> to vector<1x512xbf16>
      %c0_28 = arith.constant 0 : index
      %c1_29 = arith.constant 1 : index
      %c0_30 = arith.constant 0 : index
      %45 = vector.load %arg6[%c0_28, %c1_29, %c0_30] : memref<1x2x512xbf16, #tpu.memory_space<vmem>>, vector<1x1x512xbf16>
      %46 = vector.shape_cast %45 : vector<1x1x512xbf16> to vector<1x512xbf16>
      %c15_i32_31 = arith.constant 15 : i32
      %47 = vector.broadcast %c15_i32_31 : i32 to vector<64x512xi32>
      %48 = arith.andi %42, %47 : vector<64x512xi32>
      %49 = arith.sitofp %48 : vector<64x512xi32> to vector<64x512xf32>
      %50 = arith.truncf %49 : vector<64x512xf32> to vector<64x512xbf16>
      %c4_i32_32 = arith.constant 4 : i32
      %51 = vector.broadcast %c4_i32_32 : i32 to vector<64x512xi32>
      %52 = arith.shrsi %42, %51 : vector<64x512xi32>
      %c15_i32_33 = arith.constant 15 : i32
      %53 = vector.broadcast %c15_i32_33 : i32 to vector<64x512xi32>
      %54 = arith.andi %52, %53 : vector<64x512xi32>
      %55 = arith.sitofp %54 : vector<64x512xi32> to vector<64x512xf32>
      %56 = arith.truncf %55 : vector<64x512xf32> to vector<64x512xbf16>
      %57 = vector.broadcast %44 : vector<1x512xbf16> to vector<64x512xbf16>
      %58 = arith.mulf %50, %57 : vector<64x512xbf16>
      %59 = vector.broadcast %46 : vector<1x512xbf16> to vector<64x512xbf16>
      %60 = arith.subf %58, %59 : vector<64x512xbf16>
      %c128 = arith.constant 128 : index
      %c0_34 = arith.constant 0 : index
      %61 = vector.load %arg8[%c128, %c0_34] : memref<256x512xbf16, #tpu.memory_space<vmem>>, vector<64x512xbf16>
      tpu.vector_store %arg8[%c128, %c0_34], %60 {strides = array<i32>} : memref<256x512xbf16, #tpu.memory_space<vmem>>, vector<64x512xbf16>,
      %62 = vector.broadcast %44 : vector<1x512xbf16> to vector<64x512xbf16>
      %63 = arith.mulf %56, %62 : vector<64x512xbf16>
      %64 = vector.broadcast %46 : vector<1x512xbf16> to vector<64x512xbf16>
      %65 = arith.subf %63, %64 : vector<64x512xbf16>
      %c192 = arith.constant 192 : index
      %c0_35 = arith.constant 0 : index
      %66 = vector.load %arg8[%c192, %c0_35] : memref<256x512xbf16, #tpu.memory_space<vmem>>, vector<64x512xbf16>
      tpu.vector_store %arg8[%c192, %c0_35], %65 {strides = array<i32>} : memref<256x512xbf16, #tpu.memory_space<vmem>>, vector<64x512xbf16>,
    } else {
    }
    %c0_i32_1 = arith.constant 0 : i32
    %3 = arith.cmpi eq, %arg2, %c0_i32_1 : i32
    %4 = arith.extui %3 : i1 to i32
    %c0_i32_2 = arith.constant 0 : i32
    %5 = arith.cmpi ne, %4, %c0_i32_2 : i32
    scf.if %5 {
      %cst_12 = arith.constant 0.000000e+00 : f32
      %15 = vector.broadcast %cst_12 : f32 to vector<128x512xf32>
      %c0_13 = arith.constant 0 : index
      %c0_14 = arith.constant 0 : index
      %16 = vector.load %arg9[%c0_13, %c0_14] : memref<128x512xf32, #tpu.memory_space<vmem>>, vector<128x512xf32>
      tpu.vector_store %arg9[%c0_13, %c0_14], %15 {strides = array<i32>} : memref<128x512xf32, #tpu.memory_space<vmem>>, vector<128x512xf32>,
    } else {
    }
    %c0 = arith.constant 0 : index
    %c0_3 = arith.constant 0 : index
    %6 = vector.load %arg9[%c0, %c0_3] : memref<128x512xf32, #tpu.memory_space<vmem>>, vector<128x512xf32>
    %c0_4 = arith.constant 0 : index
    %c0_5 = arith.constant 0 : index
    %7 = vector.load %arg3[%c0_4, %c0_5] : memref<128x256xbf16, #tpu.memory_space<vmem>>, vector<128x256xbf16>
    %c0_6 = arith.constant 0 : index
    %c0_7 = arith.constant 0 : index
    %8 = vector.load %arg8[%c0_6, %c0_7] : memref<256x512xbf16, #tpu.memory_space<vmem>>, vector<256x512xbf16>
    %cst = arith.constant dense<0.000000e+00> : vector<128x512xf32>
    %9 = tpu.matmul %7, %8, %cst {dimension_numbers = #tpu.dot_dimension_numbers<[1], [0], [0], [1], [0, 0, 1, 1], [], []>} : vector<128x256xbf16>, vector<256x512xbf16>, vector<128x512xf32> -> vector<128x512xf32>
    %10 = arith.addf %6, %9 : vector<128x512xf32>
    %c0_8 = arith.constant 0 : index
    %c0_9 = arith.constant 0 : index
    %11 = vector.load %arg9[%c0_8, %c0_9] : memref<128x512xf32, #tpu.memory_space<vmem>>, vector<128x512xf32>
    tpu.vector_store %arg9[%c0_8, %c0_9], %10 {strides = array<i32>} : memref<128x512xf32, #tpu.memory_space<vmem>>, vector<128x512xf32>,
    %c0_i32_10 = arith.constant 0 : i32
    %12 = arith.cmpi eq, %arg2, %c0_i32_10 : i32
    %13 = arith.extui %12 : i1 to i32
    %c0_i32_11 = arith.constant 0 : i32
    %14 = arith.cmpi ne, %13, %c0_i32_11 : i32
    scf.if %14 {
      %c0_12 = arith.constant 0 : index
      %c0_13 = arith.constant 0 : index
      %15 = vector.load %arg9[%c0_12, %c0_13] : memref<128x512xf32, #tpu.memory_space<vmem>>, vector<128x512xf32>
      %16 = arith.mulf %15, %15 : vector<128x512xf32>
      %17 = arith.mulf %15, %16 : vector<128x512xf32>
      %cst_14 = arith.constant 4.471500e-02 : f32
      %18 = vector.broadcast %cst_14 : f32 to vector<128x512xf32>
      %19 = arith.mulf %18, %17 : vector<128x512xf32>
      %20 = arith.addf %15, %19 : vector<128x512xf32>
      %cst_15 = arith.constant 0.797884583 : f32
      %21 = vector.broadcast %cst_15 : f32 to vector<128x512xf32>
      %22 = arith.mulf %21, %20 : vector<128x512xf32>
      %23 = math.tanh %22 : vector<128x512xf32>
      %cst_16 = arith.constant 1.000000e+00 : f32
      %24 = vector.broadcast %cst_16 : f32 to vector<128x512xf32>
      %25 = arith.addf %24, %23 : vector<128x512xf32>
      %cst_17 = arith.constant 5.000000e-01 : f32
      %26 = vector.broadcast %cst_17 : f32 to vector<128x512xf32>
      %27 = arith.mulf %26, %25 : vector<128x512xf32>
      %28 = arith.mulf %15, %27 : vector<128x512xf32>
      %29 = arith.truncf %28 : vector<128x512xf32> to vector<128x512xbf16>
      %c0_18 = arith.constant 0 : index
      %c0_19 = arith.constant 0 : index
      %30 = vector.load %arg7[%c0_18, %c0_19] : memref<128x512xbf16, #tpu.memory_space<vmem>>, vector<128x512xbf16>
      tpu.vector_store %arg7[%c0_18, %c0_19], %29 {strides = array<i32>} : memref<128x512xbf16, #tpu.memory_space<vmem>>, vector<128x512xbf16>,
    } else {
    }
    return
  }
  func.func @transform_0(%arg0: i32, %arg1: i32, %arg2: i32) -> (i32, i32) {
    %c0_i32 = arith.constant 0 : i32
    return %arg1, %arg2 : i32, i32
  }
  func.func @transform_1(%arg0: i32, %arg1: i32, %arg2: i32) -> (i32, i32) {
    %c0_i32 = arith.constant 0 : i32
    return %arg2, %arg0 : i32, i32
  }
  func.func @transform_2(%arg0: i32, %arg1: i32, %arg2: i32) -> (i32, i32, i32) {
    %c0_i32 = arith.constant 0 : i32
    %c0_i32_0 = arith.constant 0 : i32
    return %arg2, %c0_i32, %arg0 : i32, i32, i32
  }
  func.func @transform_3(%arg0: i32, %arg1: i32, %arg2: i32) -> (i32, i32, i32) {
    %c0_i32 = arith.constant 0 : i32
    %c0_i32_0 = arith.constant 0 : i32
    return %arg2, %c0_i32, %arg0 : i32, i32, i32
  }
  func.func @transform_4(%arg0: i32, %arg1: i32, %arg2: i32) -> (i32, i32) {
    %c0_i32 = arith.constant 0 : i32
    return %arg1, %arg0 : i32, i32
  }
}

module attributes {stable_mosaic.version = 11 : i64} {
  func.func @awq_linear_kernel(%arg0: i32, %arg1: i32, %arg2: i32, %arg3: memref<128x256xbf16, #tpu.memory_space<vmem>>, %arg4: memref<128x256xi8, #tpu.memory_space<vmem>>, %arg5: memref<1x2x256xbf16, #tpu.memory_space<vmem>>, %arg6: memref<1x2x256xbf16, #tpu.memory_space<vmem>>, %arg7: memref<128x256xbf16, #tpu.memory_space<vmem>>, %arg8: memref<256x256xbf16, #tpu.memory_space<vmem>>, %arg9: memref<128x256xf32, #tpu.memory_space<vmem>>) attributes {dimension_semantics = [#tpu.dimension_semantics<parallel>, #tpu.dimension_semantics<arbitrary>, #tpu.dimension_semantics<arbitrary>], iteration_bounds = array<i64: 1, 1, 2>, scalar_prefetch = 0 : i64, scratch_operands = 2 : i64, tpu.core_type = #tpu.core_type<tc>, window_params = [{transform_indices = @transform_0, window_bounds = array<i64: 128, 256>}, {transform_indices = @transform_1, window_bounds = array<i64: 128, 256>}, {transform_indices = @transform_2, window_bounds = array<i64: 1, 2, 256>}, {transform_indices = @transform_3, window_bounds = array<i64: 1, 2, 256>}, {transform_indices = @transform_4, window_bounds = array<i64: 128, 256>}]} {
    %c0 = arith.constant 0 : index
    %c0_0 = arith.constant 0 : index
    %0 = vector.load %arg4[%c0, %c0_0] : memref<128x256xi8, #tpu.memory_space<vmem>>, vector<64x256xi8>
    %1 = arith.extsi %0 : vector<64x256xi8> to vector<64x256xi32>
    %c0_1 = arith.constant 0 : index
    %c0_2 = arith.constant 0 : index
    %c0_3 = arith.constant 0 : index
    %2 = vector.load %arg5[%c0_1, %c0_2, %c0_3] : memref<1x2x256xbf16, #tpu.memory_space<vmem>>, vector<1x1x256xbf16>
    %3 = vector.shape_cast %2 : vector<1x1x256xbf16> to vector<1x256xbf16>
    %c0_4 = arith.constant 0 : index
    %c0_5 = arith.constant 0 : index
    %c0_6 = arith.constant 0 : index
    %4 = vector.load %arg6[%c0_4, %c0_5, %c0_6] : memref<1x2x256xbf16, #tpu.memory_space<vmem>>, vector<1x1x256xbf16>
    %5 = vector.shape_cast %4 : vector<1x1x256xbf16> to vector<1x256xbf16>
    %c15_i32 = arith.constant 15 : i32
    %6 = vector.broadcast %c15_i32 : i32 to vector<64x256xi32>
    %7 = arith.andi %1, %6 : vector<64x256xi32>
    %8 = arith.sitofp %7 : vector<64x256xi32> to vector<64x256xf32>
    %9 = arith.truncf %8 : vector<64x256xf32> to vector<64x256xbf16>
    %c4_i32 = arith.constant 4 : i32
    %10 = vector.broadcast %c4_i32 : i32 to vector<64x256xi32>
    %11 = arith.shrsi %1, %10 : vector<64x256xi32>
    %c15_i32_7 = arith.constant 15 : i32
    %12 = vector.broadcast %c15_i32_7 : i32 to vector<64x256xi32>
    %13 = arith.andi %11, %12 : vector<64x256xi32>
    %14 = arith.sitofp %13 : vector<64x256xi32> to vector<64x256xf32>
    %15 = arith.truncf %14 : vector<64x256xf32> to vector<64x256xbf16>
    %16 = vector.broadcast %3 : vector<1x256xbf16> to vector<64x256xbf16>
    %17 = arith.mulf %9, %16 : vector<64x256xbf16>
    %18 = vector.broadcast %5 : vector<1x256xbf16> to vector<64x256xbf16>
    %19 = arith.subf %17, %18 : vector<64x256xbf16>
    %c0_8 = arith.constant 0 : index
    %c0_9 = arith.constant 0 : index
    %20 = vector.load %arg8[%c0_8, %c0_9] : memref<256x256xbf16, #tpu.memory_space<vmem>>, vector<64x256xbf16>
    tpu.vector_store %arg8[%c0_8, %c0_9], %19 {strides = array<i32>} : memref<256x256xbf16, #tpu.memory_space<vmem>>, vector<64x256xbf16>,
    %21 = vector.broadcast %3 : vector<1x256xbf16> to vector<64x256xbf16>
    %22 = arith.mulf %15, %21 : vector<64x256xbf16>
    %23 = vector.broadcast %5 : vector<1x256xbf16> to vector<64x256xbf16>
    %24 = arith.subf %22, %23 : vector<64x256xbf16>
    %c64 = arith.constant 64 : index
    %c0_10 = arith.constant 0 : index
    %25 = vector.load %arg8[%c64, %c0_10] : memref<256x256xbf16, #tpu.memory_space<vmem>>, vector<64x256xbf16>
    tpu.vector_store %arg8[%c64, %c0_10], %24 {strides = array<i32>} : memref<256x256xbf16, #tpu.memory_space<vmem>>, vector<64x256xbf16>,
    %c64_11 = arith.constant 64 : index
    %c0_12 = arith.constant 0 : index
    %26 = vector.load %arg4[%c64_11, %c0_12] : memref<128x256xi8, #tpu.memory_space<vmem>>, vector<64x256xi8>
    %27 = arith.extsi %26 : vector<64x256xi8> to vector<64x256xi32>
    %c0_13 = arith.constant 0 : index
    %c1 = arith.constant 1 : index
    %c0_14 = arith.constant 0 : index
    %28 = vector.load %arg5[%c0_13, %c1, %c0_14] : memref<1x2x256xbf16, #tpu.memory_space<vmem>>, vector<1x1x256xbf16>
    %29 = vector.shape_cast %28 : vector<1x1x256xbf16> to vector<1x256xbf16>
    %c0_15 = arith.constant 0 : index
    %c1_16 = arith.constant 1 : index
    %c0_17 = arith.constant 0 : index
    %30 = vector.load %arg6[%c0_15, %c1_16, %c0_17] : memref<1x2x256xbf16, #tpu.memory_space<vmem>>, vector<1x1x256xbf16>
    %31 = vector.shape_cast %30 : vector<1x1x256xbf16> to vector<1x256xbf16>
    %c15_i32_18 = arith.constant 15 : i32
    %32 = vector.broadcast %c15_i32_18 : i32 to vector<64x256xi32>
    %33 = arith.andi %27, %32 : vector<64x256xi32>
    %34 = arith.sitofp %33 : vector<64x256xi32> to vector<64x256xf32>
    %35 = arith.truncf %34 : vector<64x256xf32> to vector<64x256xbf16>
    %c4_i32_19 = arith.constant 4 : i32
    %36 = vector.broadcast %c4_i32_19 : i32 to vector<64x256xi32>
    %37 = arith.shrsi %27, %36 : vector<64x256xi32>
    %c15_i32_20 = arith.constant 15 : i32
    %38 = vector.broadcast %c15_i32_20 : i32 to vector<64x256xi32>
    %39 = arith.andi %37, %38 : vector<64x256xi32>
    %40 = arith.sitofp %39 : vector<64x256xi32> to vector<64x256xf32>
    %41 = arith.truncf %40 : vector<64x256xf32> to vector<64x256xbf16>
    %42 = vector.broadcast %29 : vector<1x256xbf16> to vector<64x256xbf16>
    %43 = arith.mulf %35, %42 : vector<64x256xbf16>
    %44 = vector.broadcast %31 : vector<1x256xbf16> to vector<64x256xbf16>
    %45 = arith.subf %43, %44 : vector<64x256xbf16>
    %c128 = arith.constant 128 : index
    %c0_21 = arith.constant 0 : index
    %46 = vector.load %arg8[%c128, %c0_21] : memref<256x256xbf16, #tpu.memory_space<vmem>>, vector<64x256xbf16>
    tpu.vector_store %arg8[%c128, %c0_21], %45 {strides = array<i32>} : memref<256x256xbf16, #tpu.memory_space<vmem>>, vector<64x256xbf16>,
    %47 = vector.broadcast %29 : vector<1x256xbf16> to vector<64x256xbf16>
    %48 = arith.mulf %41, %47 : vector<64x256xbf16>
    %49 = vector.broadcast %31 : vector<1x256xbf16> to vector<64x256xbf16>
    %50 = arith.subf %48, %49 : vector<64x256xbf16>
    %c192 = arith.constant 192 : index
    %c0_22 = arith.constant 0 : index
    %51 = vector.load %arg8[%c192, %c0_22] : memref<256x256xbf16, #tpu.memory_space<vmem>>, vector<64x256xbf16>
    tpu.vector_store %arg8[%c192, %c0_22], %50 {strides = array<i32>} : memref<256x256xbf16, #tpu.memory_space<vmem>>, vector<64x256xbf16>,
    %c0_i32 = arith.constant 0 : i32
    %52 = arith.cmpi eq, %arg2, %c0_i32 : i32
    %53 = arith.extui %52 : i1 to i32
    %c0_i32_23 = arith.constant 0 : i32
    %54 = arith.cmpi ne, %53, %c0_i32_23 : i32
    scf.if %54 {
      %cst_33 = arith.constant 0.000000e+00 : f32
      %64 = vector.broadcast %cst_33 : f32 to vector<128x256xf32>
      %c0_34 = arith.constant 0 : index
      %c0_35 = arith.constant 0 : index
      %65 = vector.load %arg9[%c0_34, %c0_35] : memref<128x256xf32, #tpu.memory_space<vmem>>, vector<128x256xf32>
      tpu.vector_store %arg9[%c0_34, %c0_35], %64 {strides = array<i32>} : memref<128x256xf32, #tpu.memory_space<vmem>>, vector<128x256xf32>,
    } else {
    }
    %c0_24 = arith.constant 0 : index
    %c0_25 = arith.constant 0 : index
    %55 = vector.load %arg9[%c0_24, %c0_25] : memref<128x256xf32, #tpu.memory_space<vmem>>, vector<128x256xf32>
    %c0_26 = arith.constant 0 : index
    %c0_27 = arith.constant 0 : index
    %56 = vector.load %arg3[%c0_26, %c0_27] : memref<128x256xbf16, #tpu.memory_space<vmem>>, vector<128x256xbf16>
    %c0_28 = arith.constant 0 : index
    %c0_29 = arith.constant 0 : index
    %57 = vector.load %arg8[%c0_28, %c0_29] : memref<256x256xbf16, #tpu.memory_space<vmem>>, vector<256x256xbf16>
    %cst = arith.constant dense<0.000000e+00> : vector<128x256xf32>
    %58 = tpu.matmul %56, %57, %cst {dimension_numbers = #tpu.dot_dimension_numbers<[1], [0], [0], [1], [0, 0, 1, 1], [], []>} : vector<128x256xbf16>, vector<256x256xbf16>, vector<128x256xf32> -> vector<128x256xf32>
    %59 = arith.addf %55, %58 : vector<128x256xf32>
    %c0_30 = arith.constant 0 : index
    %c0_31 = arith.constant 0 : index
    %60 = vector.load %arg9[%c0_30, %c0_31] : memref<128x256xf32, #tpu.memory_space<vmem>>, vector<128x256xf32>
    tpu.vector_store %arg9[%c0_30, %c0_31], %59 {strides = array<i32>} : memref<128x256xf32, #tpu.memory_space<vmem>>, vector<128x256xf32>,
    %c1_i32 = arith.constant 1 : i32
    %61 = arith.cmpi eq, %arg2, %c1_i32 : i32
    %62 = arith.extui %61 : i1 to i32
    %c0_i32_32 = arith.constant 0 : i32
    %63 = arith.cmpi ne, %62, %c0_i32_32 : i32
    scf.if %63 {
      %c0_33 = arith.constant 0 : index
      %c0_34 = arith.constant 0 : index
      %64 = vector.load %arg9[%c0_33, %c0_34] : memref<128x256xf32, #tpu.memory_space<vmem>>, vector<128x256xf32>
      %65 = arith.truncf %64 : vector<128x256xf32> to vector<128x256xbf16>
      %c0_35 = arith.constant 0 : index
      %c0_36 = arith.constant 0 : index
      %66 = vector.load %arg7[%c0_35, %c0_36] : memref<128x256xbf16, #tpu.memory_space<vmem>>, vector<128x256xbf16>
      tpu.vector_store %arg7[%c0_35, %c0_36], %65 {strides = array<i32>} : memref<128x256xbf16, #tpu.memory_space<vmem>>, vector<128x256xbf16>,
    } else {
    }
    return
  }
  func.func @transform_0(%arg0: i32, %arg1: i32, %arg2: i32) -> (i32, i32) {
    %c0_i32 = arith.constant 0 : i32
    return %arg1, %arg2 : i32, i32
  }
  func.func @transform_1(%arg0: i32, %arg1: i32, %arg2: i32) -> (i32, i32) {
    %c0_i32 = arith.constant 0 : i32
    return %arg2, %arg0 : i32, i32
  }
  func.func @transform_2(%arg0: i32, %arg1: i32, %arg2: i32) -> (i32, i32, i32) {
    %c0_i32 = arith.constant 0 : i32
    %c0_i32_0 = arith.constant 0 : i32
    return %arg2, %c0_i32, %arg0 : i32, i32, i32
  }
  func.func @transform_3(%arg0: i32, %arg1: i32, %arg2: i32) -> (i32, i32, i32) {
    %c0_i32 = arith.constant 0 : i32
    %c0_i32_0 = arith.constant 0 : i32
    return %arg2, %c0_i32, %arg0 : i32, i32, i32
  }
  func.func @transform_4(%arg0: i32, %arg1: i32, %arg2: i32) -> (i32, i32) {
    %c0_i32 = arith.constant 0 : i32
    return %arg1, %arg0 : i32, i32
  }
}

module attributes {stable_mosaic.version = 11 : i64} {
  func.func @awq_linear_kernel(%arg0: i32, %arg1: i32, %arg2: i32, %arg3: memref<128x256xbf16, #tpu.memory_space<vmem>>, %arg4: memref<128x512xi8, #tpu.memory_space<vmem>>, %arg5: memref<1x2x512xbf16, #tpu.memory_space<vmem>>, %arg6: memref<1x2x512xbf16, #tpu.memory_space<vmem>>, %arg7: memref<128x512xbf16, #tpu.memory_space<vmem>>, %arg8: memref<256x512xbf16, #tpu.memory_space<vmem>>, %arg9: memref<128x512xf32, #tpu.memory_space<vmem>>) attributes {dimension_semantics = [#tpu.dimension_semantics<parallel>, #tpu.dimension_semantics<arbitrary>, #tpu.dimension_semantics<arbitrary>], iteration_bounds = array<i64: 1, 1, 1>, scalar_prefetch = 0 : i64, scratch_operands = 2 : i64, tpu.core_type = #tpu.core_type<tc>, window_params = [{transform_indices = @transform_0, window_bounds = array<i64: 128, 256>}, {transform_indices = @transform_1, window_bounds = array<i64: 128, 512>}, {transform_indices = @transform_2, window_bounds = array<i64: 1, 2, 512>}, {transform_indices = @transform_3, window_bounds = array<i64: 1, 2, 512>}, {transform_indices = @transform_4, window_bounds = array<i64: 128, 512>}]} {
    %c0_i32 = arith.constant 0 : i32
    %0 = arith.cmpi eq, %arg1, %c0_i32 : i32
    %1 = arith.extui %0 : i1 to i32
    %c0_i32_0 = arith.constant 0 : i32
    %2 = arith.cmpi ne, %1, %c0_i32_0 : i32
    scf.if %2 {
      %c0_12 = arith.constant 0 : index
      %c0_13 = arith.constant 0 : index
      %15 = vector.load %arg4[%c0_12, %c0_13] : memref<128x512xi8, #tpu.memory_space<vmem>>, vector<64x512xi8>
      %16 = arith.extsi %15 : vector<64x512xi8> to vector<64x512xi32>
      %c0_14 = arith.constant 0 : index
      %c0_15 = arith.constant 0 : index
      %c0_16 = arith.constant 0 : index
      %17 = vector.load %arg5[%c0_14, %c0_15, %c0_16] : memref<1x2x512xbf16, #tpu.memory_space<vmem>>, vector<1x1x512xbf16>
      %18 = vector.shape_cast %17 : vector<1x1x512xbf16> to vector<1x512xbf16>
      %c0_17 = arith.constant 0 : index
      %c0_18 = arith.constant 0 : index
      %c0_19 = arith.constant 0 : index
      %19 = vector.load %arg6[%c0_17, %c0_18, %c0_19] : memref<1x2x512xbf16, #tpu.memory_space<vmem>>, vector<1x1x512xbf16>
      %20 = vector.shape_cast %19 : vector<1x1x512xbf16> to vector<1x512xbf16>
      %c15_i32 = arith.constant 15 : i32
      %21 = vector.broadcast %c15_i32 : i32 to vector<64x512xi32>
      %22 = arith.andi %16, %21 : vector<64x512xi32>
      %23 = arith.sitofp %22 : vector<64x512xi32> to vector<64x512xf32>
      %24 = arith.truncf %23 : vector<64x512xf32> to vector<64x512xbf16>
      %c4_i32 = arith.constant 4 : i32
      %25 = vector.broadcast %c4_i32 : i32 to vector<64x512xi32>
      %26 = arith.shrsi %16, %25 : vector<64x512xi32>
      %c15_i32_20 = arith.constant 15 : i32
      %27 = vector.broadcast %c15_i32_20 : i32 to vector<64x512xi32>
      %28 = arith.andi %26, %27 : vector<64x512xi32>
      %29 = arith.sitofp %28 : vector<64x512xi32> to vector<64x512xf32>
      %30 = arith.truncf %29 : vector<64x512xf32> to vector<64x512xbf16>
      %31 = vector.broadcast %18 : vector<1x512xbf16> to vector<64x512xbf16>
      %32 = arith.mulf %24, %31 : vector<64x512xbf16>
      %33 = vector.broadcast %20 : vector<1x512xbf16> to vector<64x512xbf16>
      %34 = arith.subf %32, %33 : vector<64x512xbf16>
      %c0_21 = arith.constant 0 : index
      %c0_22 = arith.constant 0 : index
      %35 = vector.load %arg8[%c0_21, %c0_22] : memref<256x512xbf16, #tpu.memory_space<vmem>>, vector<64x512xbf16>
      tpu.vector_store %arg8[%c0_21, %c0_22], %34 {strides = array<i32>} : memref<256x512xbf16, #tpu.memory_space<vmem>>, vector<64x512xbf16>,
      %36 = vector.broadcast %18 : vector<1x512xbf16> to vector<64x512xbf16>
      %37 = arith.mulf %30, %36 : vector<64x512xbf16>
      %38 = vector.broadcast %20 : vector<1x512xbf16> to vector<64x512xbf16>
      %39 = arith.subf %37, %38 : vector<64x512xbf16>
      %c64 = arith.constant 64 : index
      %c0_23 = arith.constant 0 : index
      %40 = vector.load %arg8[%c64, %c0_23] : memref<256x512xbf16, #tpu.memory_space<vmem>>, vector<64x512xbf16>
      tpu.vector_store %arg8[%c64, %c0_23], %39 {strides = array<i32>} : memref<256x512xbf16, #tpu.memory_space<vmem>>, vector<64x512xbf16>,
      %c64_24 = arith.constant 64 : index
      %c0_25 = arith.constant 0 : index
      %41 = vector.load %arg4[%c64_24, %c0_25] : memref<128x512xi8, #tpu.memory_space<vmem>>, vector<64x512xi8>
      %42 = arith.extsi %41 : vector<64x512xi8> to vector<64x512xi32>
      %c0_26 = arith.constant 0 : index
      %c1 = arith.constant 1 : index
      %c0_27 = arith.constant 0 : index
      %43 = vector.load %arg5[%c0_26, %c1, %c0_27] : memref<1x2x512xbf16, #tpu.memory_space<vmem>>, vector<1x1x512xbf16>
      %44 = vector.shape_cast %43 : vector<1x1x512xbf16> to vector<1x512xbf16>
      %c0_28 = arith.constant 0 : index
      %c1_29 = arith.constant 1 : index
      %c0_30 = arith.constant 0 : index
      %45 = vector.load %arg6[%c0_28, %c1_29, %c0_30] : memref<1x2x512xbf16, #tpu.memory_space<vmem>>, vector<1x1x512xbf16>
      %46 = vector.shape_cast %45 : vector<1x1x512xbf16> to vector<1x512xbf16>
      %c15_i32_31 = arith.constant 15 : i32
      %47 = vector.broadcast %c15_i32_31 : i32 to vector<64x512xi32>
      %48 = arith.andi %42, %47 : vector<64x512xi32>
      %49 = arith.sitofp %48 : vector<64x512xi32> to vector<64x512xf32>
      %50 = arith.truncf %49 : vector<64x512xf32> to vector<64x512xbf16>
      %c4_i32_32 = arith.constant 4 : i32
      %51 = vector.broadcast %c4_i32_32 : i32 to vector<64x512xi32>
      %52 = arith.shrsi %42, %51 : vector<64x512xi32>
      %c15_i32_33 = arith.constant 15 : i32
      %53 = vector.broadcast %c15_i32_33 : i32 to vector<64x512xi32>
      %54 = arith.andi %52, %53 : vector<64x512xi32>
      %55 = arith.sitofp %54 : vector<64x512xi32> to vector<64x512xf32>
      %56 = arith.truncf %55 : vector<64x512xf32> to vector<64x512xbf16>
      %57 = vector.broadcast %44 : vector<1x512xbf16> to vector<64x512xbf16>
      %58 = arith.mulf %50, %57 : vector<64x512xbf16>
      %59 = vector.broadcast %46 : vector<1x512xbf16> to vector<64x512xbf16>
      %60 = arith.subf %58, %59 : vector<64x512xbf16>
      %c128 = arith.constant 128 : index
      %c0_34 = arith.constant 0 : index
      %61 = vector.load %arg8[%c128, %c0_34] : memref<256x512xbf16, #tpu.memory_space<vmem>>, vector<64x512xbf16>
      tpu.vector_store %arg8[%c128, %c0_34], %60 {strides = array<i32>} : memref<256x512xbf16, #tpu.memory_space<vmem>>, vector<64x512xbf16>,
      %62 = vector.broadcast %44 : vector<1x512xbf16> to vector<64x512xbf16>
      %63 = arith.mulf %56, %62 : vector<64x512xbf16>
      %64 = vector.broadcast %46 : vector<1x512xbf16> to vector<64x512xbf16>
      %65 = arith.subf %63, %64 : vector<64x512xbf16>
      %c192 = arith.constant 192 : index
      %c0_35 = arith.constant 0 : index
      %66 = vector.load %arg8[%c192, %c0_35] : memref<256x512xbf16, #tpu.memory_space<vmem>>, vector<64x512xbf16>
      tpu.vector_store %arg8[%c192, %c0_35], %65 {strides = array<i32>} : memref<256x512xbf16, #tpu.memory_space<vmem>>, vector<64x512xbf16>,
    } else {
    }
    %c0_i32_1 = arith.constant 0 : i32
    %3 = arith.cmpi eq, %arg2, %c0_i32_1 : i32
    %4 = arith.extui %3 : i1 to i32
    %c0_i32_2 = arith.constant 0 : i32
    %5 = arith.cmpi ne, %4, %c0_i32_2 : i32
    scf.if %5 {
      %cst_12 = arith.constant 0.000000e+00 : f32
      %15 = vector.broadcast %cst_12 : f32 to vector<128x512xf32>
      %c0_13 = arith.constant 0 : index
      %c0_14 = arith.constant 0 : index
      %16 = vector.load %arg9[%c0_13, %c0_14] : memref<128x512xf32, #tpu.memory_space<vmem>>, vector<128x512xf32>
      tpu.vector_store %arg9[%c0_13, %c0_14], %15 {strides = array<i32>} : memref<128x512xf32, #tpu.memory_space<vmem>>, vector<128x512xf32>,
    } else {
    }
    %c0 = arith.constant 0 : index
    %c0_3 = arith.constant 0 : index
    %6 = vector.load %arg9[%c0, %c0_3] : memref<128x512xf32, #tpu.memory_space<vmem>>, vector<128x512xf32>
    %c0_4 = arith.constant 0 : index
    %c0_5 = arith.constant 0 : index
    %7 = vector.load %arg3[%c0_4, %c0_5] : memref<128x256xbf16, #tpu.memory_space<vmem>>, vector<128x256xbf16>
    %c0_6 = arith.constant 0 : index
    %c0_7 = arith.constant 0 : index
    %8 = vector.load %arg8[%c0_6, %c0_7] : memref<256x512xbf16, #tpu.memory_space<vmem>>, vector<256x512xbf16>
    %cst = arith.constant dense<0.000000e+00> : vector<128x512xf32>
    %9 = tpu.matmul %7, %8, %cst {dimension_numbers = #tpu.dot_dimension_numbers<[1], [0], [0], [1], [0, 0, 1, 1], [], []>} : vector<128x256xbf16>, vector<256x512xbf16>, vector<128x512xf32> -> vector<128x512xf32>
    %10 = arith.addf %6, %9 : vector<128x512xf32>
    %c0_8 = arith.constant 0 : index
    %c0_9 = arith.constant 0 : index
    %11 = vector.load %arg9[%c0_8, %c0_9] : memref<128x512xf32, #tpu.memory_space<vmem>>, vector<128x512xf32>
    tpu.vector_store %arg9[%c0_8, %c0_9], %10 {strides = array<i32>} : memref<128x512xf32, #tpu.memory_space<vmem>>, vector<128x512xf32>,
    %c0_i32_10 = arith.constant 0 : i32
    %12 = arith.cmpi eq, %arg2, %c0_i32_10 : i32
    %13 = arith.extui %12 : i1 to i32
    %c0_i32_11 = arith.constant 0 : i32
    %14 = arith.cmpi ne, %13, %c0_i32_11 : i32
    scf.if %14 {
      %c0_12 = arith.constant 0 : index
      %c0_13 = arith.constant 0 : index
      %15 = vector.load %arg9[%c0_12, %c0_13] : memref<128x512xf32, #tpu.memory_space<vmem>>, vector<128x512xf32>
      %16 = arith.truncf %15 : vector<128x512xf32> to vector<128x512xbf16>
      %c0_14 = arith.constant 0 : index
      %c0_15 = arith.constant 0 : index
      %17 = vector.load %arg7[%c0_14, %c0_15] : memref<128x512xbf16, #tpu.memory_space<vmem>>, vector<128x512xbf16>
      tpu.vector_store %arg7[%c0_14, %c0_15], %16 {strides = array<i32>} : memref<128x512xbf16, #tpu.memory_space<vmem>>, vector<128x512xbf16>,
    } else {
    }
    return
  }
  func.func @transform_0(%arg0: i32, %arg1: i32, %arg2: i32) -> (i32, i32) {
    %c0_i32 = arith.constant 0 : i32
    return %arg1, %arg2 : i32, i32
  }
  func.func @transform_1(%arg0: i32, %arg1: i32, %arg2: i32) -> (i32, i32) {
    %c0_i32 = arith.constant 0 : i32
    return %arg2, %arg0 : i32, i32
  }
  func.func @transform_2(%arg0: i32, %arg1: i32, %arg2: i32) -> (i32, i32, i32) {
    %c0_i32 = arith.constant 0 : i32
    %c0_i32_0 = arith.constant 0 : i32
    return %arg2, %c0_i32, %arg0 : i32, i32, i32
  }
  func.func @transform_3(%arg0: i32, %arg1: i32, %arg2: i32) -> (i32, i32, i32) {
    %c0_i32 = arith.constant 0 : i32
    %c0_i32_0 = arith.constant 0 : i32
    return %arg2, %c0_i32, %arg0 : i32, i32, i32
  }
  func.func @transform_4(%arg0: i32, %arg1: i32, %arg2: i32) -> (i32, i32) {
    %c0_i32 = arith.constant 0 : i32
    return %arg1, %arg0 : i32, i32
  }
}

</mosaic_0001>

<llo_original>
// kernel: forward.4
$region0: #{forward.4}
  #allocation0 [shape = 'u32[]', space=smem, size = 0x4, offset = 0x4, fixed_abs, tag = 'smem constant byte address 0x4 - core index']
  #allocation1 [shape = 'u32[144,128]{1,0:T(1,128)}', space=vmem, size = 0x12000, scoped, tag = 'internal scratch']
  #allocation2 [shape = 'bf16[256,256]{1,0:T(16,128)(2,1)}', space=vmem, size = 0x20000, scoped, tag = 'scratch operand']
  #allocation3 [shape = 'f32[128,256]{1,0:T(8,128)}', space=vmem, size = 0x20000, scoped, tag = 'scratch operand']
  %s0 = inlined_call_operand.vmem [shape: bf16[128,512], index: 0, kind: input, shape index: {}]
  %s1 = inlined_call_operand.vmem [shape: s8[256,256], index: 1, kind: input, shape index: {}]
  %s2 = inlined_call_operand.vmem [shape: bf16[2,2,256], index: 2, kind: input, shape index: {}]
  %s3 = inlined_call_operand.vmem [shape: bf16[2,2,256], index: 3, kind: input, shape index: {}]
  %s4 = inlined_call_operand.vmem [shape: bf16[128,256], index: 4, kind: output, shape index: {}]
  %s5 = sld [smem:[#allocation0]]
  $region95: #{forward.4} parent=0
    _
  %s7 = ssub.s32 1, %s5
  %s8 = scalar_select 0, %s7, %s5
  $region1: #{forward.4} parent=0
    #allocation4 [shape = 'u8[131072]{0}', space=vmem, size = 0x20000, scoped, tag = 'input window, operand 0']
    loop: start=0, step=1, limit=4
    $region2: #{forward.4} parent=1 // loop_pre_header
      _
    $region3: #{forward.4} parent=1 // loop_header
      %s10 = sphi 0, %s14
      %p11 = scmp.ge.s32.totalorder %s10, 4
      %s17 = sphi 0, %s36
      %s18 = sphi 0, %s32
      %s19 = sphi 0, %s28
      %s20 = sphi 0, %s17
      %s21 = sphi 0, %s18
      %s22 = sphi 0, %s19
      %s23 = sphi 0, %s20
      %s24 = sphi 0, %s21
      %s25 = sphi 0, %s22
      %s41 = sphi 0, %s43
      %s44 = sphi 0, %s41
      %s45 = sphi 0, %s44
      %s61 = sphi 0, %s45
      %s69 = sphi 0, %s71
      %s72 = sphi 0, %s69
      %s73 = sphi 0, %s72
      %s89 = sphi 0, %s73
      %s97 = sphi 0, %s99
      %s100 = sphi 0, %s97
      %s101 = sphi 0, %s100
      %s117 = sphi 0, %s101
      %s125 = sphi 0, %s127
      %s128 = sphi 0, %s125
      %s129 = sphi 0, %s128
      %s145 = sphi 0, %s129
      %s153 = sphi 0, %s155
      %s156 = sphi 0, %s153
      %s157 = sphi 0, %s156
      %s173 = sphi 0, %s157
    $region4: #{forward.4} parent=1 // loop_header_branch
      %13 = sbr.rel (%p11) target = $region8
    $region5: #{forward.4} parent=1 // loop_body
      %s15 = ssub.s32 %s10, 1
      %s16 = ssub.s32 %s10, 2
      %s26 = sadd.s32 1, %s19
      %p27 = scmp.ge.s32.totalorder %s26, 2
      %s28 = scalar_select %p27, 0, %s26
      %s29 = sadd.s32 1, %s18
      %s30 = scalar_select %p27, %s29, %s18
      %p31 = scmp.ge.s32.totalorder %s30, 1
      %s32 = scalar_select %p31, 0, %s30
      %s33 = sadd.s32 1, %s17
      %s34 = scalar_select %p31, %s33, %s17
      %p35 = scmp.ge.s32.totalorder %s34, 1
      %s36 = scalar_select %p35, 0, %s34
      %s37 = ssub.s32 %s18, %s32
      %s38 = ssub.s32 %s19, %s28
      %s39 = sor.u32 %s37, %s38
      %p40 = scmp.eq.s32.totalorder %s39, 0
      %s42 = sadd.s32 %s41, 1
      %s43 = scalar_select %p40, %s41, %s42
      %p46 = pneg %p40
      %p47 = scmp.eq.s32.totalorder %s10, 1
      %p48 = por %p46, %p47
      %p49 = scmp.ne.s32.totalorder %s41, %s44
      %p50 = scmp.eq.s32.totalorder %s10, 0
      %p51 = por %p49, %p50
      %p52 = scmp.ne.s32.totalorder %s41, %s44
      %p53 = scmp.eq.s32.totalorder %s15, 1
      %p54 = por %p52, %p53
      %p55 = scmp.ne.s32.totalorder %s44, %s45
      %p56 = scmp.eq.s32.totalorder %s15, 0
      %p57 = por %p55, %p56
      %p58 = scmp.ne.s32.totalorder %s44, %s45
      %p59 = scmp.eq.s32.totalorder %s16, 1
      %p60 = por %p58, %p59
      %p62 = scmp.ne.s32.totalorder %s45, %s61
      %p63 = scmp.eq.s32.totalorder %s16, 0
      %p64 = por %p62, %p63
      %s65 = ssub.s32 %s19, %s28
      %s66 = ssub.s32 %s17, %s36
      %s67 = sor.u32 %s65, %s66
      %p68 = scmp.eq.s32.totalorder %s67, 0
      %s70 = sadd.s32 %s69, 1
      %s71 = scalar_select %p68, %s69, %s70
      %p74 = pneg %p68
      %p75 = scmp.eq.s32.totalorder %s10, 1
      %p76 = por %p74, %p75
      %p77 = scmp.ne.s32.totalorder %s69, %s72
      %p78 = scmp.eq.s32.totalorder %s10, 0
      %p79 = por %p77, %p78
      %p80 = scmp.ne.s32.totalorder %s69, %s72
      %p81 = scmp.eq.s32.totalorder %s15, 1
      %p82 = por %p80, %p81
      %p83 = scmp.ne.s32.totalorder %s72, %s73
      %p84 = scmp.eq.s32.totalorder %s15, 0
      %p85 = por %p83, %p84
      %p86 = scmp.ne.s32.totalorder %s72, %s73
      %p87 = scmp.eq.s32.totalorder %s16, 1
      %p88 = por %p86, %p87
      %p90 = scmp.ne.s32.totalorder %s73, %s89
      %p91 = scmp.eq.s32.totalorder %s16, 0
      %p92 = por %p90, %p91
      %s93 = ssub.s32 %s19, %s28
      %s94 = ssub.s32 %s17, %s36
      %s95 = sor.u32 %s93, %s94
      %p96 = scmp.eq.s32.totalorder %s95, 0
      %s98 = sadd.s32 %s97, 1
      %s99 = scalar_select %p96, %s97, %s98
      %p102 = pneg %p96
      %p103 = scmp.eq.s32.totalorder %s10, 1
      %p104 = por %p102, %p103
      %p105 = scmp.ne.s32.totalorder %s97, %s100
      %p106 = scmp.eq.s32.totalorder %s10, 0
      %p107 = por %p105, %p106
      %p108 = scmp.ne.s32.totalorder %s97, %s100
      %p109 = scmp.eq.s32.totalorder %s15, 1
      %p110 = por %p108, %p109
      %p111 = scmp.ne.s32.totalorder %s100, %s101
      %p112 = scmp.eq.s32.totalorder %s15, 0
      %p113 = por %p111, %p112
      %p114 = scmp.ne.s32.totalorder %s100, %s101
      %p115 = scmp.eq.s32.totalorder %s16, 1
      %p116 = por %p114, %p115
      %p118 = scmp.ne.s32.totalorder %s101, %s117
      %p119 = scmp.eq.s32.totalorder %s16, 0
      %p120 = por %p118, %p119
      %s121 = ssub.s32 %s19, %s28
      %s122 = ssub.s32 %s17, %s36
      %s123 = sor.u32 %s121, %s122
      %p124 = scmp.eq.s32.totalorder %s123, 0
      %s126 = sadd.s32 %s125, 1
      %s127 = scalar_select %p124, %s125, %s126
      %p130 = pneg %p124
      %p131 = scmp.eq.s32.totalorder %s10, 1
      %p132 = por %p130, %p131
      %p133 = scmp.ne.s32.totalorder %s125, %s128
      %p134 = scmp.eq.s32.totalorder %s10, 0
      %p135 = por %p133, %p134
      %p136 = scmp.ne.s32.totalorder %s125, %s128
      %p137 = scmp.eq.s32.totalorder %s15, 1
      %p138 = por %p136, %p137
      %p139 = scmp.ne.s32.totalorder %s128, %s129
      %p140 = scmp.eq.s32.totalorder %s15, 0
      %p141 = por %p139, %p140
      %p142 = scmp.ne.s32.totalorder %s128, %s129
      %p143 = scmp.eq.s32.totalorder %s16, 1
      %p144 = por %p142, %p143
      %p146 = scmp.ne.s32.totalorder %s129, %s145
      %p147 = scmp.eq.s32.totalorder %s16, 0
      %p148 = por %p146, %p147
      %s149 = ssub.s32 %s18, %s32
      %s150 = ssub.s32 %s17, %s36
      %s151 = sor.u32 %s149, %s150
      %p152 = scmp.eq.s32.totalorder %s151, 0
      %s154 = sadd.s32 %s153, 1
      %s155 = scalar_select %p152, %s153, %s154
      %p158 = pneg %p152
      %p159 = scmp.eq.s32.totalorder %s10, 1
      %p160 = por %p158, %p159
      %p161 = scmp.ne.s32.totalorder %s153, %s156
      %p162 = scmp.eq.s32.totalorder %s10, 0
      %p163 = por %p161, %p162
      %p164 = scmp.ne.s32.totalorder %s153, %s156
      %p165 = scmp.eq.s32.totalorder %s15, 1
      %p166 = por %p164, %p165
      %p167 = scmp.ne.s32.totalorder %s156, %s157
      %p168 = scmp.eq.s32.totalorder %s15, 0
      %p169 = por %p167, %p168
      %p170 = scmp.ne.s32.totalorder %s156, %s157
      %p171 = scmp.eq.s32.totalorder %s16, 1
      %p172 = por %p170, %p171
      %p174 = scmp.ne.s32.totalorder %s157, %s173
      %p175 = scmp.eq.s32.totalorder %s16, 0
      %p176 = por %p174, %p175
      %p177 = scmp.le.s32.totalorder 1, %s10
      %p178 = scmp.lt.s32.totalorder %s10, 3
      %p179 = pnand %p177, %p178
      %p180 = pneg %p179
      // Predicated region
      $region9: #{forward.4} parent=5 // pred_check
        _
      $region10: #{forward.4} parent=5 // pred_check_branch
        %182 = sbr.rel (%p179) target = $region12
      $region11: #{forward.4} parent=5 // pred_region
        %s183 = ssub.s32 %s10, 1
      $region12: #{forward.4} parent=5 // pred_fallthru
        _
      %p184 = scmp.lt.s32.totalorder %s10, 2
      // Predicated region
      $region13: #{forward.4} parent=5 // pred_check
        %p185 = pneg %p184
      $region14: #{forward.4} parent=5 // pred_check_branch
        %187 = sbr.rel (%p185) target = $region16
      $region15: #{forward.4} parent=5 // pred_region
        // Predicated region
        $region17: #{forward.4} parent=15 // pred_check
          %p188 = pneg %p51
        $region18: #{forward.4} parent=15 // pred_check_branch
          %190 = sbr.rel (%p188) target = $region20
        $region19: #{forward.4} parent=15 // pred_region
          %s191 = sand.u32 %s41, 1
          %s192 = sand.u32 %s41, 1
          %s193 = smul.addr %s192, 128
          %s194 = scalar_lea.vmem [#allocation4], %s193
          %s195 = smul.u32 16, %s18
          %s196 = smul.u32 2, %s19
          %s197 = smul.addr %s195, 4
          %s198 = sadd.s32 %s196, %s197
          %s199 = smul.addr %s198, 4
          %s200 = scalar_lea.vmem %s0, %s199
          // Predicated region
          $region21: #{forward.4} parent=19 // pred_check
            _
          $region22: #{forward.4} parent=19 // pred_check_branch
            %202 = sbr.rel (0) target = $region24
          $region23: #{forward.4} parent=19 // pred_region
            // Predicated region
            $region25: #{forward.4} parent=23 // pred_check
              _
            $region26: #{forward.4} parent=23 // pred_check_branch
              %204 = sbr.rel (0) target = $region28
            $region27: #{forward.4} parent=23 // pred_region
              // Predicated region
              $region40: #{forward.4} parent=27 // pred_check
                _
              $region41: #{forward.4} parent=27 // pred_check_branch
                %249 = sbr.rel (0) target = $region43
              $region42: #{forward.4} parent=27 // pred_region
                loop: start=0, step=1, limit=1
                $region44: #{forward.4} parent=42 // loop_pre_header
                  _
                $region45: #{forward.4} parent=42 // loop_header
                  %s251 = sphi 0, %s255
                  %p252 = scmp.ge.s32.totalorder %s251, 1
                  %s256 = sphi %s200, %s200
                  %s257 = sphi %s194, %s194
                $region46: #{forward.4} parent=42 // loop_header_branch
                  %254 = sbr.rel (%p252) target = $region50
                $region47: #{forward.4} parent=42 // loop_body
                  %v258 = vld [vmem:[%s256] sm:$0xff]
                  %259 = vst [vmem:[%s257] sm:$0xff] %v258
                  %v260 = vld [vmem:[%s256 + $0x10] sm:$0xff]
                  %261 = vst [vmem:[%s257 + $0x8] sm:$0xff] %v260
                  %v262 = vld [vmem:[%s256 + $0x20] sm:$0xff]
                  %263 = vst [vmem:[%s257 + $0x10] sm:$0xff] %v262
                  %v264 = vld [vmem:[%s256 + $0x30] sm:$0xff]
                  %265 = vst [vmem:[%s257 + $0x18] sm:$0xff] %v264
                  %v266 = vld [vmem:[%s256 + $0x40] sm:$0xff]
                  %267 = vst [vmem:[%s257 + $0x20] sm:$0xff] %v266
                  %v268 = vld [vmem:[%s256 + $0x50] sm:$0xff]
                  %269 = vst [vmem:[%s257 + $0x28] sm:$0xff] %v268
                  %v270 = vld [vmem:[%s256 + $0x60] sm:$0xff]
                  %271 = vst [vmem:[%s257 + $0x30] sm:$0xff] %v270
                  %v272 = vld [vmem:[%s256 + $0x70] sm:$0xff]
                  %273 = vst [vmem:[%s257 + $0x38] sm:$0xff] %v272
                  %v274 = vld [vmem:[%s256 + $0x80] sm:$0xff]
                  %275 = vst [vmem:[%s257 + $0x40] sm:$0xff] %v274
                  %v276 = vld [vmem:[%s256 + $0x90] sm:$0xff]
                  %277 = vst [vmem:[%s257 + $0x48] sm:$0xff] %v276
                  %v278 = vld [vmem:[%s256 + $0xa0] sm:$0xff]
                  %279 = vst [vmem:[%s257 + $0x50] sm:$0xff] %v278
                  %v280 = vld [vmem:[%s256 + $0xb0] sm:$0xff]
                  %281 = vst [vmem:[%s257 + $0x58] sm:$0xff] %v280
                  %v282 = vld [vmem:[%s256 + $0xc0] sm:$0xff]
                  %283 = vst [vmem:[%s257 + $0x60] sm:$0xff] %v282
                  %v284 = vld [vmem:[%s256 + $0xd0] sm:$0xff]
                  %285 = vst [vmem:[%s257 + $0x68] sm:$0xff] %v284
                  %v286 = vld [vmem:[%s256 + $0xe0] sm:$0xff]
                  %287 = vst [vmem:[%s257 + $0x70] sm:$0xff] %v286
                  %v288 = vld [vmem:[%s256 + $0xf0] sm:$0xff]
                  %289 = vst [vmem:[%s257 + $0x78] sm:$0xff] %v288
                $region48: #{forward.4} parent=42 // loop_footer
                  %s255 = sadd.s32 1, %s251
                $region49: #{forward.4} parent=42 // loop_footer_branch
                  %250 = sbr.rel target = $region45
                $region50: #{forward.4} parent=42 // loop_exit
                  _
              $region43: #{forward.4} parent=27 // pred_fallthru
                _
              // Predicated region
              $region51: #{forward.4} parent=27 // pred_check
                _
              $region52: #{forward.4} parent=27 // pred_check_branch
                %291 = sbr.rel target = $region54
              $region53: #{forward.4} parent=27 // pred_region
                _
              $region54: #{forward.4} parent=27 // pred_fallthru
                _
            $region28: #{forward.4} parent=23 // pred_fallthru
              _
            // Predicated region
            $region29: #{forward.4} parent=23 // pred_check
              _
            $region30: #{forward.4} parent=23 // pred_check_branch
              %206 = sbr.rel target = $region32
            $region31: #{forward.4} parent=23 // pred_region
              loop: start=0, step=1, limit=1
              $region33: #{forward.4} parent=31 // loop_pre_header
                _
              $region34: #{forward.4} parent=31 // loop_header
                %s209 = sphi 0, %s213
                %p210 = scmp.ge.s32.totalorder %s209, 1
                %s214 = sphi %s200, %s200
                %s215 = sphi %s194, %s194
              $region35: #{forward.4} parent=31 // loop_header_branch
                %212 = sbr.rel (%p210) target = $region39
              $region36: #{forward.4} parent=31 // loop_body
                %v216 = vld [vmem:[%s214] sm:$0xff]
                %217 = vst [vmem:[%s215] sm:$0xff] %v216
                %v218 = vld [vmem:[%s214 + $0x10] sm:$0xff]
                %219 = vst [vmem:[%s215 + $0x8] sm:$0xff] %v218
                %v220 = vld [vmem:[%s214 + $0x20] sm:$0xff]
                %221 = vst [vmem:[%s215 + $0x10] sm:$0xff] %v220
                %v222 = vld [vmem:[%s214 + $0x30] sm:$0xff]
                %223 = vst [vmem:[%s215 + $0x18] sm:$0xff] %v222
                %v224 = vld [vmem:[%s214 + $0x40] sm:$0xff]
                %225 = vst [vmem:[%s215 + $0x20] sm:$0xff] %v224
                %v226 = vld [vmem:[%s214 + $0x50] sm:$0xff]
                %227 = vst [vmem:[%s215 + $0x28] sm:$0xff] %v226
                %v228 = vld [vmem:[%s214 + $0x60] sm:$0xff]
                %229 = vst [vmem:[%s215 + $0x30] sm:$0xff] %v228
                %v230 = vld [vmem:[%s214 + $0x70] sm:$0xff]
                %231 = vst [vmem:[%s215 + $0x38] sm:$0xff] %v230
                %v232 = vld [vmem:[%s214 + $0x80] sm:$0xff]
                %233 = vst [vmem:[%s215 + $0x40] sm:$0xff] %v232
                %v234 = vld [vmem:[%s214 + $0x90] sm:$0xff]
                %235 = vst [vmem:[%s215 + $0x48] sm:$0xff] %v234
                %v236 = vld [vmem:[%s214 + $0xa0] sm:$0xff]
                %237 = vst [vmem:[%s215 + $0x50] sm:$0xff] %v236
                %v238 = vld [vmem:[%s214 + $0xb0] sm:$0xff]
                %239 = vst [vmem:[%s215 + $0x58] sm:$0xff] %v238
                %v240 = vld [vmem:[%s214 + $0xc0] sm:$0xff]
                %241 = vst [vmem:[%s215 + $0x60] sm:$0xff] %v240
                %v242 = vld [vmem:[%s214 + $0xd0] sm:$0xff]
                %243 = vst [vmem:[%s215 + $0x68] sm:$0xff] %v242
                %v244 = vld [vmem:[%s214 + $0xe0] sm:$0xff]
                %245 = vst [vmem:[%s215 + $0x70] sm:$0xff] %v244
                %v246 = vld [vmem:[%s214 + $0xf0] sm:$0xff]
                %247 = vst [vmem:[%s215 + $0x78] sm:$0xff] %v246
              $region37: #{forward.4} parent=31 // loop_footer
                %s213 = sadd.s32 1, %s209
              $region38: #{forward.4} parent=31 // loop_footer_branch
                %208 = sbr.rel target = $region34
              $region39: #{forward.4} parent=31 // loop_exit
                _
            $region32: #{forward.4} parent=23 // pred_fallthru
              _
          $region24: #{forward.4} parent=19 // pred_fallthru
            _
          %292 = vnop
        $region20: #{forward.4} parent=15 // pred_fallthru
          _
        // Predicated region
        $region55: #{forward.4} parent=15 // pred_check
          %p293 = pneg %p79
        $region56: #{forward.4} parent=15 // pred_check_branch
          %295 = sbr.rel (%p293) target = $region58
        $region57: #{forward.4} parent=15 // pred_region
          %s296 = smul.u32 4, %s19
          %s297 = smul.u32 2, %s17
          %p298 = scmp.lt.s32.totalorder %s296, 7
          %s299 = scalar_select %p298, %s296, 7
          %p300 = scmp.lt.s32.totalorder %s297, 1
          %s301 = scalar_select %p300, %s297, 1
          %s302 = smul.addr %s299, 2
          %s303 = sadd.s32 %s301, %s302
          %s304 = smul.addr %s303, 8
          %s305 = scalar_lea.vmem %s1, %s304
          %s306 = smul.u32 4, %s19
          %s307 = smul.u32 2, %s17
        $region58: #{forward.4} parent=15 // pred_fallthru
          _
        // Predicated region
        $region59: #{forward.4} parent=15 // pred_check
          %p308 = pneg %p107
        $region60: #{forward.4} parent=15 // pred_check_branch
          %310 = sbr.rel (%p308) target = $region62
        $region61: #{forward.4} parent=15 // pred_region
          %s311 = smul.u32 2, %s17
          %p312 = scmp.lt.s32.totalorder %s19, 1
          %s313 = scalar_select %p312, %s19, 1
          %p314 = scmp.lt.s32.totalorder %s311, 1
          %s315 = scalar_select %p314, %s311, 1
          %s316 = smul.addr %s313, 2
          %s317 = sadd.s32 %s315, %s316
          %s318 = scalar_lea.vmem %s2, %s317
          %s319 = smul.u32 2, %s17
        $region62: #{forward.4} parent=15 // pred_fallthru
          _
        // Predicated region
        $region63: #{forward.4} parent=15 // pred_check
          %p320 = pneg %p135
        $region64: #{forward.4} parent=15 // pred_check_branch
          %322 = sbr.rel (%p320) target = $region66
        $region65: #{forward.4} parent=15 // pred_region
          %s323 = smul.u32 2, %s17
          %p324 = scmp.lt.s32.totalorder %s19, 1
          %s325 = scalar_select %p324, %s19, 1
          %p326 = scmp.lt.s32.totalorder %s323, 1
          %s327 = scalar_select %p326, %s323, 1
          %s328 = smul.addr %s325, 2
          %s329 = sadd.s32 %s327, %s328
          %s330 = scalar_lea.vmem %s3, %s329
          %s331 = smul.u32 2, %s17
        $region66: #{forward.4} parent=15 // pred_fallthru
          _
      $region16: #{forward.4} parent=5 // pred_fallthru
        _
      %p332 = scmp.le.s32.totalorder 1, %s10
      %p333 = scmp.lt.s32.totalorder %s10, 3
      %p334 = pnand %p332, %p333
      %p335 = pneg %p334
      // Predicated region
      $region67: #{forward.4} parent=5 // pred_check
        _
      $region68: #{forward.4} parent=5 // pred_check_branch
        %337 = sbr.rel (%p334) target = $region70
      $region69: #{forward.4} parent=5 // pred_region
        %s338 = ssub.s32 %s10, 1
        %s339 = sand.u32 %s44, 1
        %s340 = sand.u32 %s44, 1
        %s341 = smul.addr %s340, 128
        %s342 = scalar_lea.vmem [#allocation4], %s341
        // Predicated region
        $region71: #{forward.4} parent=69 // pred_check
          %p343 = pneg %p57
        $region72: #{forward.4} parent=69 // pred_check_branch
          %345 = sbr.rel (%p343) target = $region74
        $region73: #{forward.4} parent=69 // pred_region
          _
        $region74: #{forward.4} parent=69 // pred_fallthru
          _
        %s346 = sand.u32 %s44, 1
        %s347 = sand.u32 %s44, 1
        %s348 = smul.addr %s347, 128
        %s349 = scalar_lea.vmem [#allocation4], %s348
        %p350 = pneg %p57
        %p351 = pneg %p54
        %s352 = smul.u32 4, %s22
        %s353 = smul.u32 2, %s20
        %p354 = scmp.lt.s32.totalorder %s352, 7
        %s355 = scalar_select %p354, %s352, 7
        %p356 = scmp.lt.s32.totalorder %s353, 1
        %s357 = scalar_select %p356, %s353, 1
        %s358 = smul.addr %s355, 2
        %s359 = sadd.s32 %s357, %s358
        %s360 = smul.addr %s359, 8
        %s361 = scalar_lea.vmem %s1, %s360
        %p362 = pneg %p85
        %p363 = pneg %p82
        %s364 = smul.u32 2, %s20
        %p365 = scmp.lt.s32.totalorder %s22, 1
        %s366 = scalar_select %p365, %s22, 1
        %p367 = scmp.lt.s32.totalorder %s364, 1
        %s368 = scalar_select %p367, %s364, 1
        %s369 = smul.addr %s366, 2
        %s370 = sadd.s32 %s368, %s369
        %s371 = scalar_lea.vmem %s2, %s370
        %p372 = pneg %p113
        %p373 = pneg %p110
        %s374 = smul.u32 2, %s20
        %p375 = scmp.lt.s32.totalorder %s22, 1
        %s376 = scalar_select %p375, %s22, 1
        %p377 = scmp.lt.s32.totalorder %s374, 1
        %s378 = scalar_select %p377, %s374, 1
        %s379 = smul.addr %s376, 2
        %s380 = sadd.s32 %s378, %s379
        %s381 = scalar_lea.vmem %s3, %s380
        %p382 = pneg %p141
        %p383 = pneg %p138
        %p384 = pneg %p169
        %p385 = pneg %p166
        %s386 = smul.u32 16, %s21
        %s387 = smul.u32 2, %s20
        %p388 = scmp.lt.s32.totalorder %s386, 15
        %s389 = scalar_select %p388, %s386, 15
        %p390 = scmp.lt.s32.totalorder %s387, 1
        %s391 = scalar_select %p390, %s387, 1
        %s392 = smul.addr %s389, 2
        %s393 = sadd.s32 %s391, %s392
        %s394 = smul.addr %s393, 4
        %s395 = scalar_lea.vmem %s4, %s394
        %s396 = smul.u32 16, %s21
        %s397 = smul.u32 2, %s22
        %s398 = smul.u32 4, %s22
        %s399 = smul.u32 2, %s20
        %p400 = scmp.lt.s32.totalorder %s398, 7
        %s401 = scalar_select %p400, %s398, 7
        %p402 = scmp.lt.s32.totalorder %s399, 1
        %s403 = scalar_select %p402, %s399, 1
        %s404 = smul.addr %s401, 2
        %s405 = sadd.s32 %s403, %s404
        %s406 = smul.addr %s405, 8
        %s407 = scalar_lea.vmem %s1, %s406
        %s408 = smul.u32 4, %s22
        %s409 = smul.u32 2, %s20
        %s410 = smul.u32 2, %s20
        %p411 = scmp.lt.s32.totalorder %s22, 1
        %s412 = scalar_select %p411, %s22, 1
        %p413 = scmp.lt.s32.totalorder %s410, 1
        %s414 = scalar_select %p413, %s410, 1
        %s415 = smul.addr %s412, 2
        %s416 = sadd.s32 %s414, %s415
        %s417 = scalar_lea.vmem %s2, %s416
        %s418 = smul.u32 2, %s20
        %s419 = smul.u32 2, %s20
        %p420 = scmp.lt.s32.totalorder %s22, 1
        %s421 = scalar_select %p420, %s22, 1
        %p422 = scmp.lt.s32.totalorder %s419, 1
        %s423 = scalar_select %p422, %s419, 1
        %s424 = smul.addr %s421, 2
        %s425 = sadd.s32 %s423, %s424
        %s426 = scalar_lea.vmem %s3, %s425
        %s427 = smul.u32 2, %s20
        %s428 = smul.u32 16, %s21
        %s429 = smul.u32 2, %s20
        %p430 = scmp.lt.s32.totalorder %s428, 15
        %s431 = scalar_select %p430, %s428, 15
        %p432 = scmp.lt.s32.totalorder %s429, 1
        %s433 = scalar_select %p432, %s429, 1
        %s434 = smul.addr %s431, 2
        %s435 = sadd.s32 %s433, %s434
        %s436 = smul.addr %s435, 4
        %s437 = scalar_lea.vmem %s4, %s436
        %s438 = smul.u32 16, %s21
        %s439 = smul.u32 2, %s20
        %v440 = vld [vmem:[%s407] sm:$0xff]
        %v441 = vld [vmem:[%s407 + $0x8] sm:$0xff]
        %v442 = vld [vmem:[%s407 + $0x10] sm:$0xff]
        %v443 = vld [vmem:[%s407 + $0x18] sm:$0xff]
        %v444 = vunpack.c.0.s8 %v440
        %v445 = vunpack.c.0.s8 %v441
        %v446 = vunpack.c.1.s8 %v440
        %v447 = vunpack.c.1.s8 %v441
        %v448 = vunpack.c.2.s8 %v440
        %v449 = vunpack.c.2.s8 %v441
        %v450 = vunpack.c.3.s8 %v440
        %v451 = vunpack.c.3.s8 %v441
        %v452 = vunpack.c.0.s8 %v442
        %v453 = vunpack.c.0.s8 %v443
        %v454 = vunpack.c.1.s8 %v442
        %v455 = vunpack.c.1.s8 %v443
        %v456 = vunpack.c.2.s8 %v442
        %v457 = vunpack.c.2.s8 %v443
        %v458 = vunpack.c.3.s8 %v442
        %v459 = vunpack.c.3.s8 %v443
        %v460 = vld [vmem:[%s417] sm:$0x3]
        %v461 = vld [vmem:[%s426] sm:$0x3]
        %v462 = vand.u32 %v444, 15
        %v463 = vand.u32 %v445, 15
        %v464 = vand.u32 %v446, 15
        %v465 = vand.u32 %v447, 15
        %v466 = vand.u32 %v448, 15
        %v467 = vand.u32 %v449, 15
        %v468 = vand.u32 %v450, 15
        %v469 = vand.u32 %v451, 15
        %v470 = vand.u32 %v452, 15
        %v471 = vand.u32 %v453, 15
        %v472 = vand.u32 %v454, 15
        %v473 = vand.u32 %v455, 15
        %v474 = vand.u32 %v456, 15
        %v475 = vand.u32 %v457, 15
        %v476 = vand.u32 %v458, 15
        %v477 = vand.u32 %v459, 15
        %v478 = vcvt.s32.f32 %v462
        %v479 = vcvt.s32.f32 %v463
        %v480 = vcvt.s32.f32 %v464
        %v481 = vcvt.s32.f32 %v465
        %v482 = vcvt.s32.f32 %v466
        %v483 = vcvt.s32.f32 %v467
        %v484 = vcvt.s32.f32 %v468
        %v485 = vcvt.s32.f32 %v469
        %v486 = vcvt.s32.f32 %v470
        %v487 = vcvt.s32.f32 %v471
        %v488 = vcvt.s32.f32 %v472
        %v489 = vcvt.s32.f32 %v473
        %v490 = vcvt.s32.f32 %v474
        %v491 = vcvt.s32.f32 %v475
        %v492 = vcvt.s32.f32 %v476
        %v493 = vcvt.s32.f32 %v477
        %v494 = vpack.c.bf16 %v480, %v478
        %v495 = vpack.c.bf16 %v481, %v479
        %v496 = vpack.c.bf16 %v484, %v482
        %v497 = vpack.c.bf16 %v485, %v483
        %v498 = vpack.c.bf16 %v488, %v486
        %v499 = vpack.c.bf16 %v489, %v487
        %v500 = vpack.c.bf16 %v492, %v490
        %v501 = vpack.c.bf16 %v493, %v491
        %v502 = vshra.s32 %v444, 4
        %v503 = vshra.s32 %v445, 4
        %v504 = vshra.s32 %v446, 4
        %v505 = vshra.s32 %v447, 4
        %v506 = vshra.s32 %v448, 4
        %v507 = vshra.s32 %v449, 4
        %v508 = vshra.s32 %v450, 4
        %v509 = vshra.s32 %v451, 4
        %v510 = vshra.s32 %v452, 4
        %v511 = vshra.s32 %v453, 4
        %v512 = vshra.s32 %v454, 4
        %v513 = vshra.s32 %v455, 4
        %v514 = vshra.s32 %v456, 4
        %v515 = vshra.s32 %v457, 4
        %v516 = vshra.s32 %v458, 4
        %v517 = vshra.s32 %v459, 4
        %v518 = vand.u32 %v502, 15
        %v519 = vand.u32 %v503, 15
        %v520 = vand.u32 %v504, 15
        %v521 = vand.u32 %v505, 15
        %v522 = vand.u32 %v506, 15
        %v523 = vand.u32 %v507, 15
        %v524 = vand.u32 %v508, 15
        %v525 = vand.u32 %v509, 15
        %v526 = vand.u32 %v510, 15
        %v527 = vand.u32 %v511, 15
        %v528 = vand.u32 %v512, 15
        %v529 = vand.u32 %v513, 15
        %v530 = vand.u32 %v514, 15
        %v531 = vand.u32 %v515, 15
        %v532 = vand.u32 %v516, 15
        %v533 = vand.u32 %v517, 15
        %v534 = vcvt.s32.f32 %v518
        %v535 = vcvt.s32.f32 %v519
        %v536 = vcvt.s32.f32 %v520
        %v537 = vcvt.s32.f32 %v521
        %v538 = vcvt.s32.f32 %v522
        %v539 = vcvt.s32.f32 %v523
        %v540 = vcvt.s32.f32 %v524
        %v541 = vcvt.s32.f32 %v525
        %v542 = vcvt.s32.f32 %v526
        %v543 = vcvt.s32.f32 %v527
        %v544 = vcvt.s32.f32 %v528
        %v545 = vcvt.s32.f32 %v529
        %v546 = vcvt.s32.f32 %v530
        %v547 = vcvt.s32.f32 %v531
        %v548 = vcvt.s32.f32 %v532
        %v549 = vcvt.s32.f32 %v533
        %v550 = vpack.c.bf16 %v536, %v534
        %v551 = vpack.c.bf16 %v537, %v535
        %v552 = vpack.c.bf16 %v540, %v538
        %v553 = vpack.c.bf16 %v541, %v539
        %v554 = vpack.c.bf16 %v544, %v542
        %v555 = vpack.c.bf16 %v545, %v543
        %v556 = vpack.c.bf16 %v548, %v546
        %v557 = vpack.c.bf16 %v549, %v547
        %v560 = vunpack.c.l.s4 1966171168
        %v561 = vunpack.c.0.s8 %v560
        %v562 = vlaneseq
        %v563 = vshrl.u32 %v562, 7
        %v564 = vsub.s32 %v561, %v563
        %v565 = vrot.slane %v460, %v564
        %v566 = vcombine.high %v565, %v565
        %v568 = vunpack.c.l.s4 1966171168
        %v569 = vunpack.c.0.s8 %v568
        %v570 = vlaneseq
        %v571 = vshrl.u32 %v570, 7
        %v572 = vsub.s32 %v569, %v571
        %v573 = vrot.slane %v565, %v572
        %v575 = vunpack.c.l.s4 1966171168
        %v576 = vunpack.c.0.s8 %v575
        %v577 = vlaneseq
        %v578 = vshrl.u32 %v577, 7
        %v579 = vsub.s32 %v576, %v578
        %v580 = vrot.slane %v566, %v579
        %v582 = vpack.i.b16 %v573, %v573
        %v584 = vlaneseq
        %v585 = vshrl.u32 %v584, 7
        %v586 = vsub.s32 0, %v585
        %v587 = vrot.slane %v582, %v586
        %v589 = vpack.i.b16 %v580, %v580
        %v591 = vlaneseq
        %v592 = vshrl.u32 %v591, 7
        %v593 = vsub.s32 0, %v592
        %v594 = vrot.slane %v589, %v593
        %v595 = vmul.bf16 %v494, %v587
        %v596 = vmul.bf16 %v495, %v594
        %v597 = vmul.bf16 %v496, %v587
        %v598 = vmul.bf16 %v497, %v594
        %v599 = vmul.bf16 %v498, %v587
        %v600 = vmul.bf16 %v499, %v594
        %v601 = vmul.bf16 %v500, %v587
        %v602 = vmul.bf16 %v501, %v594
        %v605 = vunpack.c.l.s4 1966171168
        %v606 = vunpack.c.0.s8 %v605
        %v607 = vlaneseq
        %v608 = vshrl.u32 %v607, 7
        %v609 = vsub.s32 %v606, %v608
        %v610 = vrot.slane %v461, %v609
        %v611 = vcombine.high %v610, %v610
        %v613 = vunpack.c.l.s4 1966171168
        %v614 = vunpack.c.0.s8 %v613
        %v615 = vlaneseq
        %v616 = vshrl.u32 %v615, 7
        %v617 = vsub.s32 %v614, %v616
        %v618 = vrot.slane %v610, %v617
        %v620 = vunpack.c.l.s4 1966171168
        %v621 = vunpack.c.0.s8 %v620
        %v622 = vlaneseq
        %v623 = vshrl.u32 %v622, 7
        %v624 = vsub.s32 %v621, %v623
        %v625 = vrot.slane %v611, %v624
        %v627 = vpack.i.b16 %v618, %v618
        %v629 = vlaneseq
        %v630 = vshrl.u32 %v629, 7
        %v631 = vsub.s32 0, %v630
        %v632 = vrot.slane %v627, %v631
        %v634 = vpack.i.b16 %v625, %v625
        %v636 = vlaneseq
        %v637 = vshrl.u32 %v636, 7
        %v638 = vsub.s32 0, %v637
        %v639 = vrot.slane %v634, %v638
        %v640 = vsub.bf16 %v595, %v632
        %v641 = vsub.bf16 %v596, %v639
        %v642 = vsub.bf16 %v597, %v632
        %v643 = vsub.bf16 %v598, %v639
        %v644 = vsub.bf16 %v599, %v632
        %v645 = vsub.bf16 %v600, %v639
        %v646 = vsub.bf16 %v601, %v632
        %v647 = vsub.bf16 %v602, %v639
        %648 = vst [vmem:[#allocation2] sm:$0xff] %v640
        %649 = vst [vmem:[#allocation2 + $0x8] sm:$0xff] %v641
        %650 = vst [vmem:[#allocation2 + $0x10] sm:$0xff] %v642
        %651 = vst [vmem:[#allocation2 + $0x18] sm:$0xff] %v643
        %652 = vst [vmem:[#allocation2 + $0x20] sm:$0xff] %v644
        %653 = vst [vmem:[#allocation2 + $0x28] sm:$0xff] %v645
        %654 = vst [vmem:[#allocation2 + $0x30] sm:$0xff] %v646
        %655 = vst [vmem:[#allocation2 + $0x38] sm:$0xff] %v647
        %v656 = vmul.bf16 %v550, %v587
        %v657 = vmul.bf16 %v551, %v594
        %v658 = vmul.bf16 %v552, %v587
        %v659 = vmul.bf16 %v553, %v594
        %v660 = vmul.bf16 %v554, %v587
        %v661 = vmul.bf16 %v555, %v594
        %v662 = vmul.bf16 %v556, %v587
        %v663 = vmul.bf16 %v557, %v594
        %v664 = vsub.bf16 %v656, %v632
        %v665 = vsub.bf16 %v657, %v639
        %v666 = vsub.bf16 %v658, %v632
        %v667 = vsub.bf16 %v659, %v639
        %v668 = vsub.bf16 %v660, %v632
        %v669 = vsub.bf16 %v661, %v639
        %v670 = vsub.bf16 %v662, %v632
        %v671 = vsub.bf16 %v663, %v639
        %672 = vst [vmem:[#allocation2 + $0x40] sm:$0xff] %v664
        %673 = vst [vmem:[#allocation2 + $0x48] sm:$0xff] %v665
        %674 = vst [vmem:[#allocation2 + $0x50] sm:$0xff] %v666
        %675 = vst [vmem:[#allocation2 + $0x58] sm:$0xff] %v667
        %676 = vst [vmem:[#allocation2 + $0x60] sm:$0xff] %v668
        %677 = vst [vmem:[#allocation2 + $0x68] sm:$0xff] %v669
        %678 = vst [vmem:[#allocation2 + $0x70] sm:$0xff] %v670
        %679 = vst [vmem:[#allocation2 + $0x78] sm:$0xff] %v671
        %v680 = vld [vmem:[%s407 + $0x20] sm:$0xff]
        %v681 = vld [vmem:[%s407 + $0x28] sm:$0xff]
        %v682 = vld [vmem:[%s407 + $0x30] sm:$0xff]
        %v683 = vld [vmem:[%s407 + $0x38] sm:$0xff]
        %v684 = vunpack.c.0.s8 %v680
        %v685 = vunpack.c.0.s8 %v681
        %v686 = vunpack.c.1.s8 %v680
        %v687 = vunpack.c.1.s8 %v681
        %v688 = vunpack.c.2.s8 %v680
        %v689 = vunpack.c.2.s8 %v681
        %v690 = vunpack.c.3.s8 %v680
        %v691 = vunpack.c.3.s8 %v681
        %v692 = vunpack.c.0.s8 %v682
        %v693 = vunpack.c.0.s8 %v683
        %v694 = vunpack.c.1.s8 %v682
        %v695 = vunpack.c.1.s8 %v683
        %v696 = vunpack.c.2.s8 %v682
        %v697 = vunpack.c.2.s8 %v683
        %v698 = vunpack.c.3.s8 %v682
        %v699 = vunpack.c.3.s8 %v683
        %v700 = vld [vmem:[%s417] sm:$0x3]
        %v701 = vld [vmem:[%s426] sm:$0x3]
        %v702 = vand.u32 %v684, 15
        %v703 = vand.u32 %v685, 15
        %v704 = vand.u32 %v686, 15
        %v705 = vand.u32 %v687, 15
        %v706 = vand.u32 %v688, 15
        %v707 = vand.u32 %v689, 15
        %v708 = vand.u32 %v690, 15
        %v709 = vand.u32 %v691, 15
        %v710 = vand.u32 %v692, 15
        %v711 = vand.u32 %v693, 15
        %v712 = vand.u32 %v694, 15
        %v713 = vand.u32 %v695, 15
        %v714 = vand.u32 %v696, 15
        %v715 = vand.u32 %v697, 15
        %v716 = vand.u32 %v698, 15
        %v717 = vand.u32 %v699, 15
        %v718 = vcvt.s32.f32 %v702
        %v719 = vcvt.s32.f32 %v703
        %v720 = vcvt.s32.f32 %v704
        %v721 = vcvt.s32.f32 %v705
        %v722 = vcvt.s32.f32 %v706
        %v723 = vcvt.s32.f32 %v707
        %v724 = vcvt.s32.f32 %v708
        %v725 = vcvt.s32.f32 %v709
        %v726 = vcvt.s32.f32 %v710
        %v727 = vcvt.s32.f32 %v711
        %v728 = vcvt.s32.f32 %v712
        %v729 = vcvt.s32.f32 %v713
        %v730 = vcvt.s32.f32 %v714
        %v731 = vcvt.s32.f32 %v715
        %v732 = vcvt.s32.f32 %v716
        %v733 = vcvt.s32.f32 %v717
        %v734 = vpack.c.bf16 %v720, %v718
        %v735 = vpack.c.bf16 %v721, %v719
        %v736 = vpack.c.bf16 %v724, %v722
        %v737 = vpack.c.bf16 %v725, %v723
        %v738 = vpack.c.bf16 %v728, %v726
        %v739 = vpack.c.bf16 %v729, %v727
        %v740 = vpack.c.bf16 %v732, %v730
        %v741 = vpack.c.bf16 %v733, %v731
        %v742 = vshra.s32 %v684, 4
        %v743 = vshra.s32 %v685, 4
        %v744 = vshra.s32 %v686, 4
        %v745 = vshra.s32 %v687, 4
        %v746 = vshra.s32 %v688, 4
        %v747 = vshra.s32 %v689, 4
        %v748 = vshra.s32 %v690, 4
        %v749 = vshra.s32 %v691, 4
        %v750 = vshra.s32 %v692, 4
        %v751 = vshra.s32 %v693, 4
        %v752 = vshra.s32 %v694, 4
        %v753 = vshra.s32 %v695, 4
        %v754 = vshra.s32 %v696, 4
        %v755 = vshra.s32 %v697, 4
        %v756 = vshra.s32 %v698, 4
        %v757 = vshra.s32 %v699, 4
        %v758 = vand.u32 %v742, 15
        %v759 = vand.u32 %v743, 15
        %v760 = vand.u32 %v744, 15
        %v761 = vand.u32 %v745, 15
        %v762 = vand.u32 %v746, 15
        %v763 = vand.u32 %v747, 15
        %v764 = vand.u32 %v748, 15
        %v765 = vand.u32 %v749, 15
        %v766 = vand.u32 %v750, 15
        %v767 = vand.u32 %v751, 15
        %v768 = vand.u32 %v752, 15
        %v769 = vand.u32 %v753, 15
        %v770 = vand.u32 %v754, 15
        %v771 = vand.u32 %v755, 15
        %v772 = vand.u32 %v756, 15
        %v773 = vand.u32 %v757, 15
        %v774 = vcvt.s32.f32 %v758
        %v775 = vcvt.s32.f32 %v759
        %v776 = vcvt.s32.f32 %v760
        %v777 = vcvt.s32.f32 %v761
        %v778 = vcvt.s32.f32 %v762
        %v779 = vcvt.s32.f32 %v763
        %v780 = vcvt.s32.f32 %v764
        %v781 = vcvt.s32.f32 %v765
        %v782 = vcvt.s32.f32 %v766
        %v783 = vcvt.s32.f32 %v767
        %v784 = vcvt.s32.f32 %v768
        %v785 = vcvt.s32.f32 %v769
        %v786 = vcvt.s32.f32 %v770
        %v787 = vcvt.s32.f32 %v771
        %v788 = vcvt.s32.f32 %v772
        %v789 = vcvt.s32.f32 %v773
        %v790 = vpack.c.bf16 %v776, %v774
        %v791 = vpack.c.bf16 %v777, %v775
        %v792 = vpack.c.bf16 %v780, %v778
        %v793 = vpack.c.bf16 %v781, %v779
        %v794 = vpack.c.bf16 %v784, %v782
        %v795 = vpack.c.bf16 %v785, %v783
        %v796 = vpack.c.bf16 %v788, %v786
        %v797 = vpack.c.bf16 %v789, %v787
        %v800 = vunpack.c.l.s4 1966171168
        %v801 = vunpack.c.0.s8 %v800
        %v802 = vlaneseq
        %v803 = vshrl.u32 %v802, 7
        %v804 = vsub.s32 %v801, %v803
        %v805 = vrot.slane %v700, %v804
        %v806 = vcombine.high %v805, %v805
        %v808 = vunpack.c.l.s4 1966171168
        %v809 = vunpack.c.0.s8 %v808
        %v810 = vlaneseq
        %v811 = vshrl.u32 %v810, 7
        %v812 = vsub.s32 %v809, %v811
        %v813 = vrot.slane %v805, %v812
        %v815 = vunpack.c.l.s4 1966171168
        %v816 = vunpack.c.0.s8 %v815
        %v817 = vlaneseq
        %v818 = vshrl.u32 %v817, 7
        %v819 = vsub.s32 %v816, %v818
        %v820 = vrot.slane %v806, %v819
        %v822 = vshrl.u32 %v813, 16
        %v823 = vpack.i.b16 %v822, %v822
        %v825 = vlaneseq
        %v826 = vshrl.u32 %v825, 7
        %v827 = vsub.s32 0, %v826
        %v828 = vrot.slane %v823, %v827
        %v830 = vshrl.u32 %v820, 16
        %v831 = vpack.i.b16 %v830, %v830
        %v833 = vlaneseq
        %v834 = vshrl.u32 %v833, 7
        %v835 = vsub.s32 0, %v834
        %v836 = vrot.slane %v831, %v835
        %v837 = vmul.bf16 %v734, %v828
        %v838 = vmul.bf16 %v735, %v836
        %v839 = vmul.bf16 %v736, %v828
        %v840 = vmul.bf16 %v737, %v836
        %v841 = vmul.bf16 %v738, %v828
        %v842 = vmul.bf16 %v739, %v836
        %v843 = vmul.bf16 %v740, %v828
        %v844 = vmul.bf16 %v741, %v836
        %v847 = vunpack.c.l.s4 1966171168
        %v848 = vunpack.c.0.s8 %v847
        %v849 = vlaneseq
        %v850 = vshrl.u32 %v849, 7
        %v851 = vsub.s32 %v848, %v850
        %v852 = vrot.slane %v701, %v851
        %v853 = vcombine.high %v852, %v852
        %v855 = vunpack.c.l.s4 1966171168
        %v856 = vunpack.c.0.s8 %v855
        %v857 = vlaneseq
        %v858 = vshrl.u32 %v857, 7
        %v859 = vsub.s32 %v856, %v858
        %v860 = vrot.slane %v852, %v859
        %v862 = vunpack.c.l.s4 1966171168
        %v863 = vunpack.c.0.s8 %v862
        %v864 = vlaneseq
        %v865 = vshrl.u32 %v864, 7
        %v866 = vsub.s32 %v863, %v865
        %v867 = vrot.slane %v853, %v866
        %v869 = vshrl.u32 %v860, 16
        %v870 = vpack.i.b16 %v869, %v869
        %v872 = vlaneseq
        %v873 = vshrl.u32 %v872, 7
        %v874 = vsub.s32 0, %v873
        %v875 = vrot.slane %v870, %v874
        %v877 = vshrl.u32 %v867, 16
        %v878 = vpack.i.b16 %v877, %v877
        %v880 = vlaneseq
        %v881 = vshrl.u32 %v880, 7
        %v882 = vsub.s32 0, %v881
        %v883 = vrot.slane %v878, %v882
        %v884 = vsub.bf16 %v837, %v875
        %v885 = vsub.bf16 %v838, %v883
        %v886 = vsub.bf16 %v839, %v875
        %v887 = vsub.bf16 %v840, %v883
        %v888 = vsub.bf16 %v841, %v875
        %v889 = vsub.bf16 %v842, %v883
        %v890 = vsub.bf16 %v843, %v875
        %v891 = vsub.bf16 %v844, %v883
        %892 = vst [vmem:[#allocation2 + $0x80] sm:$0xff] %v884
        %893 = vst [vmem:[#allocation2 + $0x88] sm:$0xff] %v885
        %894 = vst [vmem:[#allocation2 + $0x90] sm:$0xff] %v886
        %895 = vst [vmem:[#allocation2 + $0x98] sm:$0xff] %v887
        %896 = vst [vmem:[#allocation2 + $0xa0] sm:$0xff] %v888
        %897 = vst [vmem:[#allocation2 + $0xa8] sm:$0xff] %v889
        %898 = vst [vmem:[#allocation2 + $0xb0] sm:$0xff] %v890
        %899 = vst [vmem:[#allocation2 + $0xb8] sm:$0xff] %v891
        %v900 = vmul.bf16 %v790, %v828
        %v901 = vmul.bf16 %v791, %v836
        %v902 = vmul.bf16 %v792, %v828
        %v903 = vmul.bf16 %v793, %v836
        %v904 = vmul.bf16 %v794, %v828
        %v905 = vmul.bf16 %v795, %v836
        %v906 = vmul.bf16 %v796, %v828
        %v907 = vmul.bf16 %v797, %v836
        %v908 = vsub.bf16 %v900, %v875
        %v909 = vsub.bf16 %v901, %v883
        %v910 = vsub.bf16 %v902, %v875
        %v911 = vsub.bf16 %v903, %v883
        %v912 = vsub.bf16 %v904, %v875
        %v913 = vsub.bf16 %v905, %v883
        %v914 = vsub.bf16 %v906, %v875
        %v915 = vsub.bf16 %v907, %v883
        %916 = vst [vmem:[#allocation2 + $0xc0] sm:$0xff] %v908
        %917 = vst [vmem:[#allocation2 + $0xc8] sm:$0xff] %v909
        %918 = vst [vmem:[#allocation2 + $0xd0] sm:$0xff] %v910
        %919 = vst [vmem:[#allocation2 + $0xd8] sm:$0xff] %v911
        %920 = vst [vmem:[#allocation2 + $0xe0] sm:$0xff] %v912
        %921 = vst [vmem:[#allocation2 + $0xe8] sm:$0xff] %v913
        %922 = vst [vmem:[#allocation2 + $0xf0] sm:$0xff] %v914
        %923 = vst [vmem:[#allocation2 + $0xf8] sm:$0xff] %v915
        %p924 = scmp.eq.s32.totalorder %s22, 0
        // Predicated region
        $region75: #{forward.4} parent=69 // pred_check
          %p925 = pneg %p924
        $region76: #{forward.4} parent=69 // pred_check_branch
          %927 = sbr.rel (%p925) target = $region78
        $region77: #{forward.4} parent=69 // pred_region
          %928 = vst [vmem:[#allocation3] sm:$0xff] 0.0
          %929 = vst [vmem:[#allocation3 + $0x8] sm:$0xff] 0.0
          %930 = vst [vmem:[#allocation3 + $0x10] sm:$0xff] 0.0
          %931 = vst [vmem:[#allocation3 + $0x18] sm:$0xff] 0.0
          %932 = vst [vmem:[#allocation3 + $0x20] sm:$0xff] 0.0
          %933 = vst [vmem:[#allocation3 + $0x28] sm:$0xff] 0.0
          %934 = vst [vmem:[#allocation3 + $0x30] sm:$0xff] 0.0
          %935 = vst [vmem:[#allocation3 + $0x38] sm:$0xff] 0.0
          %936 = vst [vmem:[#allocation3 + $0x40] sm:$0xff] 0.0
          %937 = vst [vmem:[#allocation3 + $0x48] sm:$0xff] 0.0
          %938 = vst [vmem:[#allocation3 + $0x50] sm:$0xff] 0.0
          %939 = vst [vmem:[#allocation3 + $0x58] sm:$0xff] 0.0
          %940 = vst [vmem:[#allocation3 + $0x60] sm:$0xff] 0.0
          %941 = vst [vmem:[#allocation3 + $0x68] sm:$0xff] 0.0
          %942 = vst [vmem:[#allocation3 + $0x70] sm:$0xff] 0.0
          %943 = vst [vmem:[#allocation3 + $0x78] sm:$0xff] 0.0
          %944 = vst [vmem:[#allocation3 + $0x80] sm:$0xff] 0.0
          %945 = vst [vmem:[#allocation3 + $0x88] sm:$0xff] 0.0
          %946 = vst [vmem:[#allocation3 + $0x90] sm:$0xff] 0.0
          %947 = vst [vmem:[#allocation3 + $0x98] sm:$0xff] 0.0
          %948 = vst [vmem:[#allocation3 + $0xa0] sm:$0xff] 0.0
          %949 = vst [vmem:[#allocation3 + $0xa8] sm:$0xff] 0.0
          %950 = vst [vmem:[#allocation3 + $0xb0] sm:$0xff] 0.0
          %951 = vst [vmem:[#allocation3 + $0xb8] sm:$0xff] 0.0
          %952 = vst [vmem:[#allocation3 + $0xc0] sm:$0xff] 0.0
          %953 = vst [vmem:[#allocation3 + $0xc8] sm:$0xff] 0.0
          %954 = vst [vmem:[#allocation3 + $0xd0] sm:$0xff] 0.0
          %955 = vst [vmem:[#allocation3 + $0xd8] sm:$0xff] 0.0
          %956 = vst [vmem:[#allocation3 + $0xe0] sm:$0xff] 0.0
          %957 = vst [vmem:[#allocation3 + $0xe8] sm:$0xff] 0.0
          %958 = vst [vmem:[#allocation3 + $0xf0] sm:$0xff] 0.0
          %959 = vst [vmem:[#allocation3 + $0xf8] sm:$0xff] 0.0
        $region78: #{forward.4} parent=69 // pred_fallthru
          _
        %v960 = vld [vmem:[#allocation3] sm:$0xff]
        %v961 = vld [vmem:[#allocation3 + $0x8] sm:$0xff]
        %v962 = vld [vmem:[#allocation3 + $0x10] sm:$0xff]
        %v963 = vld [vmem:[#allocation3 + $0x18] sm:$0xff]
        %v964 = vld [vmem:[#allocation3 + $0x20] sm:$0xff]
        %v965 = vld [vmem:[#allocation3 + $0x28] sm:$0xff]
        %v966 = vld [vmem:[#allocation3 + $0x30] sm:$0xff]
        %v967 = vld [vmem:[#allocation3 + $0x38] sm:$0xff]
        %v968 = vld [vmem:[#allocation3 + $0x40] sm:$0xff]
        %v969 = vld [vmem:[#allocation3 + $0x48] sm:$0xff]
        %v970 = vld [vmem:[#allocation3 + $0x50] sm:$0xff]
        %v971 = vld [vmem:[#allocation3 + $0x58] sm:$0xff]
        %v972 = vld [vmem:[#allocation3 + $0x60] sm:$0xff]
        %v973 = vld [vmem:[#allocation3 + $0x68] sm:$0xff]
        %v974 = vld [vmem:[#allocation3 + $0x70] sm:$0xff]
        %v975 = vld [vmem:[#allocation3 + $0x78] sm:$0xff]
        %v976 = vld [vmem:[#allocation3 + $0x80] sm:$0xff]
        %v977 = vld [vmem:[#allocation3 + $0x88] sm:$0xff]
        %v978 = vld [vmem:[#allocation3 + $0x90] sm:$0xff]
        %v979 = vld [vmem:[#allocation3 + $0x98] sm:$0xff]
        %v980 = vld [vmem:[#allocation3 + $0xa0] sm:$0xff]
        %v981 = vld [vmem:[#allocation3 + $0xa8] sm:$0xff]
        %v982 = vld [vmem:[#allocation3 + $0xb0] sm:$0xff]
        %v983 = vld [vmem:[#allocation3 + $0xb8] sm:$0xff]
        %v984 = vld [vmem:[#allocation3 + $0xc0] sm:$0xff]
        %v985 = vld [vmem:[#allocation3 + $0xc8] sm:$0xff]
        %v986 = vld [vmem:[#allocation3 + $0xd0] sm:$0xff]
        %v987 = vld [vmem:[#allocation3 + $0xd8] sm:$0xff]
        %v988 = vld [vmem:[#allocation3 + $0xe0] sm:$0xff]
        %v989 = vld [vmem:[#allocation3 + $0xe8] sm:$0xff]
        %v990 = vld [vmem:[#allocation3 + $0xf0] sm:$0xff]
        %v991 = vld [vmem:[#allocation3 + $0xf8] sm:$0xff]
        %v992 = vld [vmem:[%s342] sm:$0xff]
        %v993 = vld [vmem:[%s342 + $0x8] sm:$0xff]
        %v994 = vld [vmem:[%s342 + $0x10] sm:$0xff]
        %v995 = vld [vmem:[%s342 + $0x18] sm:$0xff]
        %v996 = vld [vmem:[%s342 + $0x20] sm:$0xff]
        %v997 = vld [vmem:[%s342 + $0x28] sm:$0xff]
        %v998 = vld [vmem:[%s342 + $0x30] sm:$0xff]
        %v999 = vld [vmem:[%s342 + $0x38] sm:$0xff]
        %v1000 = vld [vmem:[%s342 + $0x40] sm:$0xff]
        %v1001 = vld [vmem:[%s342 + $0x48] sm:$0xff]
        %v1002 = vld [vmem:[%s342 + $0x50] sm:$0xff]
        %v1003 = vld [vmem:[%s342 + $0x58] sm:$0xff]
        %v1004 = vld [vmem:[%s342 + $0x60] sm:$0xff]
        %v1005 = vld [vmem:[%s342 + $0x68] sm:$0xff]
        %v1006 = vld [vmem:[%s342 + $0x70] sm:$0xff]
        %v1007 = vld [vmem:[%s342 + $0x78] sm:$0xff]
        %v1008 = vld [vmem:[#allocation2] sm:$0xff]
        %v1009 = vld [vmem:[#allocation2 + $0x8] sm:$0xff]
        %v1010 = vld [vmem:[#allocation2 + $0x10] sm:$0xff]
        %v1011 = vld [vmem:[#allocation2 + $0x18] sm:$0xff]
        %v1012 = vld [vmem:[#allocation2 + $0x20] sm:$0xff]
        %v1013 = vld [vmem:[#allocation2 + $0x28] sm:$0xff]
        %v1014 = vld [vmem:[#allocation2 + $0x30] sm:$0xff]
        %v1015 = vld [vmem:[#allocation2 + $0x38] sm:$0xff]
        %v1016 = vld [vmem:[#allocation2 + $0x40] sm:$0xff]
        %v1017 = vld [vmem:[#allocation2 + $0x48] sm:$0xff]
        %v1018 = vld [vmem:[#allocation2 + $0x50] sm:$0xff]
        %v1019 = vld [vmem:[#allocation2 + $0x58] sm:$0xff]
        %v1020 = vld [vmem:[#allocation2 + $0x60] sm:$0xff]
        %v1021 = vld [vmem:[#allocation2 + $0x68] sm:$0xff]
        %v1022 = vld [vmem:[#allocation2 + $0x70] sm:$0xff]
        %v1023 = vld [vmem:[#allocation2 + $0x78] sm:$0xff]
        %v1024 = vld [vmem:[#allocation2 + $0x80] sm:$0xff]
        %v1025 = vld [vmem:[#allocation2 + $0x88] sm:$0xff]
        %v1026 = vld [vmem:[#allocation2 + $0x90] sm:$0xff]
        %v1027 = vld [vmem:[#allocation2 + $0x98] sm:$0xff]
        %v1028 = vld [vmem:[#allocation2 + $0xa0] sm:$0xff]
        %v1029 = vld [vmem:[#allocation2 + $0xa8] sm:$0xff]
        %v1030 = vld [vmem:[#allocation2 + $0xb0] sm:$0xff]
        %v1031 = vld [vmem:[#allocation2 + $0xb8] sm:$0xff]
        %v1032 = vld [vmem:[#allocation2 + $0xc0] sm:$0xff]
        %v1033 = vld [vmem:[#allocation2 + $0xc8] sm:$0xff]
        %v1034 = vld [vmem:[#allocation2 + $0xd0] sm:$0xff]
        %v1035 = vld [vmem:[#allocation2 + $0xd8] sm:$0xff]
        %v1036 = vld [vmem:[#allocation2 + $0xe0] sm:$0xff]
        %v1037 = vld [vmem:[#allocation2 + $0xe8] sm:$0xff]
        %v1038 = vld [vmem:[#allocation2 + $0xf0] sm:$0xff]
        %v1039 = vld [vmem:[#allocation2 + $0xf8] sm:$0xff]
        %v1056 = vunpack.c.l.b16 %v992
        %v1057 = vunpack.c.h.b16 %v992
        %v1058 = vunpack.c.l.b16 %v993
        %v1059 = vunpack.c.h.b16 %v993
        %v1060 = vunpack.c.l.b16 %v994
        %v1061 = vunpack.c.h.b16 %v994
        %v1062 = vunpack.c.l.b16 %v995
        %v1063 = vunpack.c.h.b16 %v995
        %v1064 = vunpack.c.l.b16 %v996
        %v1065 = vunpack.c.h.b16 %v996
        %v1066 = vunpack.c.l.b16 %v997
        %v1067 = vunpack.c.h.b16 %v997
        %v1068 = vunpack.c.l.b16 %v998
        %v1069 = vunpack.c.h.b16 %v998
        %v1070 = vunpack.c.l.b16 %v999
        %v1071 = vunpack.c.h.b16 %v999
        %v1072 = vunpack.c.l.b16 %v1000
        %v1073 = vunpack.c.h.b16 %v1000
        %v1074 = vunpack.c.l.b16 %v1001
        %v1075 = vunpack.c.h.b16 %v1001
        %v1076 = vunpack.c.l.b16 %v1002
        %v1077 = vunpack.c.h.b16 %v1002
        %v1078 = vunpack.c.l.b16 %v1003
        %v1079 = vunpack.c.h.b16 %v1003
        %v1080 = vunpack.c.l.b16 %v1004
        %v1081 = vunpack.c.h.b16 %v1004
        %v1082 = vunpack.c.l.b16 %v1005
        %v1083 = vunpack.c.h.b16 %v1005
        %v1084 = vunpack.c.l.b16 %v1006
        %v1085 = vunpack.c.h.b16 %v1006
        %v1086 = vunpack.c.l.b16 %v1007
        %v1087 = vunpack.c.h.b16 %v1007
        %v1088 = vpack.c.b16 %v1058, %v1056
        %v1089 = vpack.c.b16 %v1059, %v1057
        %v1090 = vpack.c.b16 %v1062, %v1060
        %v1091 = vpack.c.b16 %v1063, %v1061
        %v1092 = vpack.c.b16 %v1066, %v1064
        %v1093 = vpack.c.b16 %v1067, %v1065
        %v1094 = vpack.c.b16 %v1070, %v1068
        %v1095 = vpack.c.b16 %v1071, %v1069
        %v1096 = vpack.c.b16 %v1074, %v1072
        %v1097 = vpack.c.b16 %v1075, %v1073
        %v1098 = vpack.c.b16 %v1078, %v1076
        %v1099 = vpack.c.b16 %v1079, %v1077
        %v1100 = vpack.c.b16 %v1082, %v1080
        %v1101 = vpack.c.b16 %v1083, %v1081
        %v1102 = vpack.c.b16 %v1086, %v1084
        %v1103 = vpack.c.b16 %v1087, %v1085
        %1120 = vmatprep.subr.bf16.mxu0 %v1009
        %1121 = vmatpush1.bf16.msra.mxu0 %v1008
        %1122 = vmatprep.subr.bf16.mxu0 %v1011
        %1123 = vmatpush1.bf16.msra.mxu0 %v1010
        %1124 = vmatprep.subr.bf16.mxu0 %v1013
        %1125 = vmatpush1.bf16.msra.mxu0 %v1012
        %1126 = vmatprep.subr.bf16.mxu0 %v1015
        %1127 = vmatpush1.bf16.msra.mxu0 %v1014
        %1128 = vmatprep.subr.bf16.mxu0 %v1017
        %1129 = vmatpush1.bf16.msra.mxu0 %v1016
        %1130 = vmatprep.subr.bf16.mxu0 %v1019
        %1131 = vmatpush1.bf16.msra.mxu0 %v1018
        %1132 = vmatprep.subr.bf16.mxu0 %v1021
        %1133 = vmatpush1.bf16.msra.mxu0 %v1020
        %1134 = vmatprep.subr.bf16.mxu0 %v1023
        %1135 = vmatpush1.bf16.msra.mxu0 %v1022
        %1136 = vmatprep.subr.bf16.mxu0 %v1025
        %1137 = vmatpush1.bf16.msra.mxu0 %v1024
        %1138 = vmatprep.subr.bf16.mxu0 %v1027
        %1139 = vmatpush1.bf16.msra.mxu0 %v1026
        %1140 = vmatprep.subr.bf16.mxu0 %v1029
        %1141 = vmatpush1.bf16.msra.mxu0 %v1028
        %1142 = vmatprep.subr.bf16.mxu0 %v1031
        %1143 = vmatpush1.bf16.msra.mxu0 %v1030
        %1144 = vmatprep.subr.bf16.mxu0 %v1033
        %1145 = vmatpush1.bf16.msra.mxu0 %v1032
        %1146 = vmatprep.subr.bf16.mxu0 %v1035
        %1147 = vmatpush1.bf16.msra.mxu0 %v1034
        %1148 = vmatprep.subr.bf16.mxu0 %v1037
        %1149 = vmatpush1.bf16.msra.mxu0 %v1036
        %1150 = vmatprep.subr.bf16.mxu0 %v1039
        %1151 = vmatpush1.bf16.msra.mxu0 %v1038
        %1152 = vmatprep.mubr.bf16.mxu0 %v1089
        %1153 = vmatmul.mubr.bf16.gmra.mrb[0].mxu0 %v1088
        %v1154 = vpop.f32.mrb[0].mxu0
        %v1155 = vadd.f32 0.0, %v1154
        %v1156 = vpop.f32.mrb[0].mxu0
        %v1157 = vadd.f32 0.0, %v1156
        %v1158 = vpop.f32.mrb[0].mxu0
        %v1159 = vadd.f32 0.0, %v1158
        %v1160 = vpop.f32.mrb[0].mxu0
        %v1161 = vadd.f32 0.0, %v1160
        %1162 = vmatprep.mubr.bf16.mxu0 %v1091
        %1163 = vmatmul.mubr.bf16.gmra.mrb[0].mxu0 %v1090
        %v1164 = vpop.f32.mrb[0].mxu0
        %v1165 = vadd.f32 0.0, %v1164
        %v1166 = vpop.f32.mrb[0].mxu0
        %v1167 = vadd.f32 0.0, %v1166
        %v1168 = vpop.f32.mrb[0].mxu0
        %v1169 = vadd.f32 0.0, %v1168
        %v1170 = vpop.f32.mrb[0].mxu0
        %v1171 = vadd.f32 0.0, %v1170
        %1172 = vmatprep.mubr.bf16.mxu0 %v1093
        %1173 = vmatmul.mubr.bf16.gmra.mrb[0].mxu0 %v1092
        %v1174 = vpop.f32.mrb[0].mxu0
        %v1175 = vadd.f32 0.0, %v1174
        %v1176 = vpop.f32.mrb[0].mxu0
        %v1177 = vadd.f32 0.0, %v1176
        %v1178 = vpop.f32.mrb[0].mxu0
        %v1179 = vadd.f32 0.0, %v1178
        %v1180 = vpop.f32.mrb[0].mxu0
        %v1181 = vadd.f32 0.0, %v1180
        %1182 = vmatprep.mubr.bf16.mxu0 %v1095
        %1183 = vmatmul.mubr.bf16.gmra.mrb[0].mxu0 %v1094
        %v1184 = vpop.f32.mrb[0].mxu0
        %v1185 = vadd.f32 0.0, %v1184
        %v1186 = vpop.f32.mrb[0].mxu0
        %v1187 = vadd.f32 0.0, %v1186
        %v1188 = vpop.f32.mrb[0].mxu0
        %v1189 = vadd.f32 0.0, %v1188
        %v1190 = vpop.f32.mrb[0].mxu0
        %v1191 = vadd.f32 0.0, %v1190
        %1192 = vmatprep.mubr.bf16.mxu0 %v1097
        %1193 = vmatmul.mubr.bf16.gmra.mrb[0].mxu0 %v1096
        %v1194 = vpop.f32.mrb[0].mxu0
        %v1195 = vadd.f32 0.0, %v1194
        %v1196 = vpop.f32.mrb[0].mxu0
        %v1197 = vadd.f32 0.0, %v1196
        %v1198 = vpop.f32.mrb[0].mxu0
        %v1199 = vadd.f32 0.0, %v1198
        %v1200 = vpop.f32.mrb[0].mxu0
        %v1201 = vadd.f32 0.0, %v1200
        %1202 = vmatprep.mubr.bf16.mxu0 %v1099
        %1203 = vmatmul.mubr.bf16.gmra.mrb[0].mxu0 %v1098
        %v1204 = vpop.f32.mrb[0].mxu0
        %v1205 = vadd.f32 0.0, %v1204
        %v1206 = vpop.f32.mrb[0].mxu0
        %v1207 = vadd.f32 0.0, %v1206
        %v1208 = vpop.f32.mrb[0].mxu0
        %v1209 = vadd.f32 0.0, %v1208
        %v1210 = vpop.f32.mrb[0].mxu0
        %v1211 = vadd.f32 0.0, %v1210
        %1212 = vmatprep.mubr.bf16.mxu0 %v1101
        %1213 = vmatmul.mubr.bf16.gmra.mrb[0].mxu0 %v1100
        %v1214 = vpop.f32.mrb[0].mxu0
        %v1215 = vadd.f32 0.0, %v1214
        %v1216 = vpop.f32.mrb[0].mxu0
        %v1217 = vadd.f32 0.0, %v1216
        %v1218 = vpop.f32.mrb[0].mxu0
        %v1219 = vadd.f32 0.0, %v1218
        %v1220 = vpop.f32.mrb[0].mxu0
        %v1221 = vadd.f32 0.0, %v1220
        %1222 = vmatprep.mubr.bf16.mxu0 %v1103
        %1223 = vmatmul.mubr.bf16.gmra.mrb[0].mxu0 %v1102
        %v1224 = vpop.f32.mrb[0].mxu0
        %v1225 = vadd.f32 0.0, %v1224
        %v1226 = vpop.f32.mrb[0].mxu0
        %v1227 = vadd.f32 0.0, %v1226
        %v1228 = vpop.f32.mrb[0].mxu0
        %v1229 = vadd.f32 0.0, %v1228
        %v1230 = vpop.f32.mrb[0].mxu0
        %v1231 = vadd.f32 0.0, %v1230
        %1232 = vdwg.mxu0
        %v1233 = vadd.f32 %v960, %v1155
        %v1234 = vadd.f32 %v961, %v1157
        %v1235 = vadd.f32 %v962, %v1159
        %v1236 = vadd.f32 %v963, %v1161
        %v1237 = vadd.f32 %v964, %v1165
        %v1238 = vadd.f32 %v965, %v1167
        %v1239 = vadd.f32 %v966, %v1169
        %v1240 = vadd.f32 %v967, %v1171
        %v1241 = vadd.f32 %v968, %v1175
        %v1242 = vadd.f32 %v969, %v1177
        %v1243 = vadd.f32 %v970, %v1179
        %v1244 = vadd.f32 %v971, %v1181
        %v1245 = vadd.f32 %v972, %v1185
        %v1246 = vadd.f32 %v973, %v1187
        %v1247 = vadd.f32 %v974, %v1189
        %v1248 = vadd.f32 %v975, %v1191
        %v1249 = vadd.f32 %v976, %v1195
        %v1250 = vadd.f32 %v977, %v1197
        %v1251 = vadd.f32 %v978, %v1199
        %v1252 = vadd.f32 %v979, %v1201
        %v1253 = vadd.f32 %v980, %v1205
        %v1254 = vadd.f32 %v981, %v1207
        %v1255 = vadd.f32 %v982, %v1209
        %v1256 = vadd.f32 %v983, %v1211
        %v1257 = vadd.f32 %v984, %v1215
        %v1258 = vadd.f32 %v985, %v1217
        %v1259 = vadd.f32 %v986, %v1219
        %v1260 = vadd.f32 %v987, %v1221
        %v1261 = vadd.f32 %v988, %v1225
        %v1262 = vadd.f32 %v989, %v1227
        %v1263 = vadd.f32 %v990, %v1229
        %v1264 = vadd.f32 %v991, %v1231
        %1265 = vst [vmem:[#allocation3] sm:$0xff] %v1233
        %1266 = vst [vmem:[#allocation3 + $0x8] sm:$0xff] %v1234
        %1267 = vst [vmem:[#allocation3 + $0x10] sm:$0xff] %v1235
        %1268 = vst [vmem:[#allocation3 + $0x18] sm:$0xff] %v1236
        %1269 = vst [vmem:[#allocation3 + $0x20] sm:$0xff] %v1237
        %1270 = vst [vmem:[#allocation3 + $0x28] sm:$0xff] %v1238
        %1271 = vst [vmem:[#allocation3 + $0x30] sm:$0xff] %v1239
        %1272 = vst [vmem:[#allocation3 + $0x38] sm:$0xff] %v1240
        %1273 = vst [vmem:[#allocation3 + $0x40] sm:$0xff] %v1241
        %1274 = vst [vmem:[#allocation3 + $0x48] sm:$0xff] %v1242
        %1275 = vst [vmem:[#allocation3 + $0x50] sm:$0xff] %v1243
        %1276 = vst [vmem:[#allocation3 + $0x58] sm:$0xff] %v1244
        %1277 = vst [vmem:[#allocation3 + $0x60] sm:$0xff] %v1245
        %1278 = vst [vmem:[#allocation3 + $0x68] sm:$0xff] %v1246
        %1279 = vst [vmem:[#allocation3 + $0x70] sm:$0xff] %v1247
        %1280 = vst [vmem:[#allocation3 + $0x78] sm:$0xff] %v1248
        %1281 = vst [vmem:[#allocation3 + $0x80] sm:$0xff] %v1249
        %1282 = vst [vmem:[#allocation3 + $0x88] sm:$0xff] %v1250
        %1283 = vst [vmem:[#allocation3 + $0x90] sm:$0xff] %v1251
        %1284 = vst [vmem:[#allocation3 + $0x98] sm:$0xff] %v1252
        %1285 = vst [vmem:[#allocation3 + $0xa0] sm:$0xff] %v1253
        %1286 = vst [vmem:[#allocation3 + $0xa8] sm:$0xff] %v1254
        %1287 = vst [vmem:[#allocation3 + $0xb0] sm:$0xff] %v1255
        %1288 = vst [vmem:[#allocation3 + $0xb8] sm:$0xff] %v1256
        %1289 = vst [vmem:[#allocation3 + $0xc0] sm:$0xff] %v1257
        %1290 = vst [vmem:[#allocation3 + $0xc8] sm:$0xff] %v1258
        %1291 = vst [vmem:[#allocation3 + $0xd0] sm:$0xff] %v1259
        %1292 = vst [vmem:[#allocation3 + $0xd8] sm:$0xff] %v1260
        %1293 = vst [vmem:[#allocation3 + $0xe0] sm:$0xff] %v1261
        %1294 = vst [vmem:[#allocation3 + $0xe8] sm:$0xff] %v1262
        %1295 = vst [vmem:[#allocation3 + $0xf0] sm:$0xff] %v1263
        %1296 = vst [vmem:[#allocation3 + $0xf8] sm:$0xff] %v1264
        %p1297 = scmp.eq.s32.totalorder %s22, 1
        // Predicated region
        $region79: #{forward.4} parent=69 // pred_check
          %p1298 = pneg %p1297
        $region80: #{forward.4} parent=69 // pred_check_branch
          %1300 = sbr.rel (%p1298) target = $region82
        $region81: #{forward.4} parent=69 // pred_region
          %v1301 = vld [vmem:[#allocation3] sm:$0xff]
          %v1302 = vld [vmem:[#allocation3 + $0x8] sm:$0xff]
          %v1303 = vld [vmem:[#allocation3 + $0x10] sm:$0xff]
          %v1304 = vld [vmem:[#allocation3 + $0x18] sm:$0xff]
          %v1305 = vld [vmem:[#allocation3 + $0x20] sm:$0xff]
          %v1306 = vld [vmem:[#allocation3 + $0x28] sm:$0xff]
          %v1307 = vld [vmem:[#allocation3 + $0x30] sm:$0xff]
          %v1308 = vld [vmem:[#allocation3 + $0x38] sm:$0xff]
          %v1309 = vld [vmem:[#allocation3 + $0x40] sm:$0xff]
          %v1310 = vld [vmem:[#allocation3 + $0x48] sm:$0xff]
          %v1311 = vld [vmem:[#allocation3 + $0x50] sm:$0xff]
          %v1312 = vld [vmem:[#allocation3 + $0x58] sm:$0xff]
          %v1313 = vld [vmem:[#allocation3 + $0x60] sm:$0xff]
          %v1314 = vld [vmem:[#allocation3 + $0x68] sm:$0xff]
          %v1315 = vld [vmem:[#allocation3 + $0x70] sm:$0xff]
          %v1316 = vld [vmem:[#allocation3 + $0x78] sm:$0xff]
          %v1317 = vld [vmem:[#allocation3 + $0x80] sm:$0xff]
          %v1318 = vld [vmem:[#allocation3 + $0x88] sm:$0xff]
          %v1319 = vld [vmem:[#allocation3 + $0x90] sm:$0xff]
          %v1320 = vld [vmem:[#allocation3 + $0x98] sm:$0xff]
          %v1321 = vld [vmem:[#allocation3 + $0xa0] sm:$0xff]
          %v1322 = vld [vmem:[#allocation3 + $0xa8] sm:$0xff]
          %v1323 = vld [vmem:[#allocation3 + $0xb0] sm:$0xff]
          %v1324 = vld [vmem:[#allocation3 + $0xb8] sm:$0xff]
          %v1325 = vld [vmem:[#allocation3 + $0xc0] sm:$0xff]
          %v1326 = vld [vmem:[#allocation3 + $0xc8] sm:$0xff]
          %v1327 = vld [vmem:[#allocation3 + $0xd0] sm:$0xff]
          %v1328 = vld [vmem:[#allocation3 + $0xd8] sm:$0xff]
          %v1329 = vld [vmem:[#allocation3 + $0xe0] sm:$0xff]
          %v1330 = vld [vmem:[#allocation3 + $0xe8] sm:$0xff]
          %v1331 = vld [vmem:[#allocation3 + $0xf0] sm:$0xff]
          %v1332 = vld [vmem:[#allocation3 + $0xf8] sm:$0xff]
          %v1333 = vpack.c.bf16 %v1303, %v1301
          %v1334 = vpack.c.bf16 %v1304, %v1302
          %v1335 = vpack.c.bf16 %v1307, %v1305
          %v1336 = vpack.c.bf16 %v1308, %v1306
          %v1337 = vpack.c.bf16 %v1311, %v1309
          %v1338 = vpack.c.bf16 %v1312, %v1310
          %v1339 = vpack.c.bf16 %v1315, %v1313
          %v1340 = vpack.c.bf16 %v1316, %v1314
          %v1341 = vpack.c.bf16 %v1319, %v1317
          %v1342 = vpack.c.bf16 %v1320, %v1318
          %v1343 = vpack.c.bf16 %v1323, %v1321
          %v1344 = vpack.c.bf16 %v1324, %v1322
          %v1345 = vpack.c.bf16 %v1327, %v1325
          %v1346 = vpack.c.bf16 %v1328, %v1326
          %v1347 = vpack.c.bf16 %v1331, %v1329
          %v1348 = vpack.c.bf16 %v1332, %v1330
          %v1365 = vunpack.c.l.b16 %v1333
          %v1366 = vunpack.c.l.b16 %v1334
          %v1367 = vunpack.c.h.b16 %v1333
          %v1368 = vunpack.c.h.b16 %v1334
          %v1369 = vunpack.c.l.b16 %v1335
          %v1370 = vunpack.c.l.b16 %v1336
          %v1371 = vunpack.c.h.b16 %v1335
          %v1372 = vunpack.c.h.b16 %v1336
          %v1373 = vunpack.c.l.b16 %v1337
          %v1374 = vunpack.c.l.b16 %v1338
          %v1375 = vunpack.c.h.b16 %v1337
          %v1376 = vunpack.c.h.b16 %v1338
          %v1377 = vunpack.c.l.b16 %v1339
          %v1378 = vunpack.c.l.b16 %v1340
          %v1379 = vunpack.c.h.b16 %v1339
          %v1380 = vunpack.c.h.b16 %v1340
          %v1381 = vunpack.c.l.b16 %v1341
          %v1382 = vunpack.c.l.b16 %v1342
          %v1383 = vunpack.c.h.b16 %v1341
          %v1384 = vunpack.c.h.b16 %v1342
          %v1385 = vunpack.c.l.b16 %v1343
          %v1386 = vunpack.c.l.b16 %v1344
          %v1387 = vunpack.c.h.b16 %v1343
          %v1388 = vunpack.c.h.b16 %v1344
          %v1389 = vunpack.c.l.b16 %v1345
          %v1390 = vunpack.c.l.b16 %v1346
          %v1391 = vunpack.c.h.b16 %v1345
          %v1392 = vunpack.c.h.b16 %v1346
          %v1393 = vunpack.c.l.b16 %v1347
          %v1394 = vunpack.c.l.b16 %v1348
          %v1395 = vunpack.c.h.b16 %v1347
          %v1396 = vunpack.c.h.b16 %v1348
          %v1397 = vpack.c.b16 %v1366, %v1365
          %v1398 = vpack.c.b16 %v1368, %v1367
          %v1399 = vpack.c.b16 %v1370, %v1369
          %v1400 = vpack.c.b16 %v1372, %v1371
          %v1401 = vpack.c.b16 %v1374, %v1373
          %v1402 = vpack.c.b16 %v1376, %v1375
          %v1403 = vpack.c.b16 %v1378, %v1377
          %v1404 = vpack.c.b16 %v1380, %v1379
          %v1405 = vpack.c.b16 %v1382, %v1381
          %v1406 = vpack.c.b16 %v1384, %v1383
          %v1407 = vpack.c.b16 %v1386, %v1385
          %v1408 = vpack.c.b16 %v1388, %v1387
          %v1409 = vpack.c.b16 %v1390, %v1389
          %v1410 = vpack.c.b16 %v1392, %v1391
          %v1411 = vpack.c.b16 %v1394, %v1393
          %v1412 = vpack.c.b16 %v1396, %v1395
          %1429 = vst [vmem:[%s437] sm:$0xff] %v1397
          %1430 = vst [vmem:[%s437 + $0x8] sm:$0xff] %v1398
          %1431 = vst [vmem:[%s437 + $0x10] sm:$0xff] %v1399
          %1432 = vst [vmem:[%s437 + $0x18] sm:$0xff] %v1400
          %1433 = vst [vmem:[%s437 + $0x20] sm:$0xff] %v1401
          %1434 = vst [vmem:[%s437 + $0x28] sm:$0xff] %v1402
          %1435 = vst [vmem:[%s437 + $0x30] sm:$0xff] %v1403
          %1436 = vst [vmem:[%s437 + $0x38] sm:$0xff] %v1404
          %1437 = vst [vmem:[%s437 + $0x40] sm:$0xff] %v1405
          %1438 = vst [vmem:[%s437 + $0x48] sm:$0xff] %v1406
          %1439 = vst [vmem:[%s437 + $0x50] sm:$0xff] %v1407
          %1440 = vst [vmem:[%s437 + $0x58] sm:$0xff] %v1408
          %1441 = vst [vmem:[%s437 + $0x60] sm:$0xff] %v1409
          %1442 = vst [vmem:[%s437 + $0x68] sm:$0xff] %v1410
          %1443 = vst [vmem:[%s437 + $0x70] sm:$0xff] %v1411
          %1444 = vst [vmem:[%s437 + $0x78] sm:$0xff] %v1412
        $region82: #{forward.4} parent=69 // pred_fallthru
          _
        %s1445 = smul.u32 16, %s21
        %s1446 = smul.u32 2, %s20
        %p1447 = scmp.lt.s32.totalorder %s1445, 15
        %s1448 = scalar_select %p1447, %s1445, 15
        %p1449 = scmp.lt.s32.totalorder %s1446, 1
        %s1450 = scalar_select %p1449, %s1446, 1
        %s1451 = smul.addr %s1448, 2
        %s1452 = sadd.s32 %s1450, %s1451
        %s1453 = smul.addr %s1452, 4
        %s1454 = scalar_lea.vmem %s4, %s1453
        // Predicated region
        $region83: #{forward.4} parent=69 // pred_check
          %p1455 = pneg %p166
        $region84: #{forward.4} parent=69 // pred_check_branch
          %1457 = sbr.rel (%p1455) target = $region86
        $region85: #{forward.4} parent=69 // pred_region
          %s1458 = smul.u32 16, %s21
          %s1459 = smul.u32 2, %s20
        $region86: #{forward.4} parent=69 // pred_fallthru
          _
        // Predicated region
        $region87: #{forward.4} parent=69 // pred_check
          %p1460 = pneg %p166
        $region88: #{forward.4} parent=69 // pred_check_branch
          %1462 = sbr.rel (%p1460) target = $region90
        $region89: #{forward.4} parent=69 // pred_region
          %s1463 = smul.u32 16, %s21
          %s1464 = smul.u32 2, %s20
          %p1465 = scmp.lt.s32.totalorder %s1463, 15
          %s1466 = scalar_select %p1465, %s1463, 15
          %p1467 = scmp.lt.s32.totalorder %s1464, 1
          %s1468 = scalar_select %p1467, %s1464, 1
          %s1469 = smul.addr %s1466, 2
          %s1470 = sadd.s32 %s1468, %s1469
          %s1471 = smul.addr %s1470, 4
          %s1472 = scalar_lea.vmem %s4, %s1471
        $region90: #{forward.4} parent=69 // pred_fallthru
          _
      $region70: #{forward.4} parent=5 // pred_fallthru
        _
      %p1473 = scmp.le.s32.totalorder 2, %s10
      // Predicated region
      $region91: #{forward.4} parent=5 // pred_check
        %p1474 = pneg %p1473
      $region92: #{forward.4} parent=5 // pred_check_branch
        %1476 = sbr.rel (%p1474) target = $region94
      $region93: #{forward.4} parent=5 // pred_region
        %s1477 = ssub.s32 %s10, 2
      $region94: #{forward.4} parent=5 // pred_fallthru
        _
    $region6: #{forward.4} parent=1 // loop_footer
      %s14 = sadd.s32 1, %s10
    $region7: #{forward.4} parent=1 // loop_footer_branch
      %9 = sbr.rel target = $region3
    $region8: #{forward.4} parent=1 // loop_exit
      _

// kernel: forward.5
$region0: #{forward.5}
  #allocation0 [shape = 'u32[]', space=smem, size = 0x4, offset = 0x4, fixed_abs, tag = 'smem constant byte address 0x4 - core index']
  #allocation1 [shape = 'u32[144,128]{1,0:T(1,128)}', space=vmem, size = 0x12000, scoped, tag = 'internal scratch']
  #allocation2 [shape = 'bf16[256,512]{1,0:T(16,128)(2,1)}', space=vmem, size = 0x40000, scoped, tag = 'scratch operand']
  #allocation3 [shape = 'f32[128,512]{1,0:T(8,128)}', space=vmem, size = 0x40000, scoped, tag = 'scratch operand']
  %s0 = inlined_call_operand.vmem [shape: bf16[128,256], index: 0, kind: input, shape index: {}]
  %s1 = inlined_call_operand.vmem [shape: s8[128,512], index: 1, kind: input, shape index: {}]
  %s2 = inlined_call_operand.vmem [shape: bf16[1,2,512], index: 2, kind: input, shape index: {}]
  %s3 = inlined_call_operand.vmem [shape: bf16[1,2,512], index: 3, kind: input, shape index: {}]
  %s4 = inlined_call_operand.vmem [shape: bf16[128,512], index: 4, kind: output, shape index: {}]
  %s5 = sld [smem:[#allocation0]]
  $region38: #{forward.5} parent=0
    _
  %s7 = ssub.s32 1, %s5
  %s8 = scalar_select 0, %s7, %s5
  // Predicated region
  $region2: #{forward.5} parent=0 // pred_check
    _
  $region3: #{forward.5} parent=0 // pred_check_branch
    %10 = sbr.rel (0) target = $region5
  $region4: #{forward.5} parent=0 // pred_region
    _
  $region5: #{forward.5} parent=0 // pred_fallthru
    _
  // Predicated region
  $region6: #{forward.5} parent=0 // pred_check
    _
  $region7: #{forward.5} parent=0 // pred_check_branch
    %12 = sbr.rel (0) target = $region9
  $region8: #{forward.5} parent=0 // pred_region
    _
  $region9: #{forward.5} parent=0 // pred_fallthru
    _
  // Predicated region
  $region10: #{forward.5} parent=0 // pred_check
    _
  $region11: #{forward.5} parent=0 // pred_check_branch
    %14 = sbr.rel (0) target = $region13
  $region12: #{forward.5} parent=0 // pred_region
    _
  $region13: #{forward.5} parent=0 // pred_fallthru
    _
  // Predicated region
  $region14: #{forward.5} parent=0 // pred_check
    _
  $region15: #{forward.5} parent=0 // pred_check_branch
    %16 = sbr.rel (0) target = $region17
  $region16: #{forward.5} parent=0 // pred_region
    _
  $region17: #{forward.5} parent=0 // pred_fallthru
    _
  %p17 = scmp.eq.s32.totalorder 0, 0
  // Predicated region
  $region18: #{forward.5} parent=0 // pred_check
    %p18 = pneg %p17
  $region19: #{forward.5} parent=0 // pred_check_branch
    %20 = sbr.rel (%p18) target = $region21
  $region20: #{forward.5} parent=0 // pred_region
    %v21 = vld [vmem:[%s1] sm:$0xff]
    %v22 = vld [vmem:[%s1 + $0x8] sm:$0xff]
    %v23 = vld [vmem:[%s1 + $0x10] sm:$0xff]
    %v24 = vld [vmem:[%s1 + $0x18] sm:$0xff]
    %v25 = vld [vmem:[%s1 + $0x20] sm:$0xff]
    %v26 = vld [vmem:[%s1 + $0x28] sm:$0xff]
    %v27 = vld [vmem:[%s1 + $0x30] sm:$0xff]
    %v28 = vld [vmem:[%s1 + $0x38] sm:$0xff]
    %v29 = vunpack.c.0.s8 %v21
    %v30 = vunpack.c.0.s8 %v22
    %v31 = vunpack.c.0.s8 %v23
    %v32 = vunpack.c.0.s8 %v24
    %v33 = vunpack.c.1.s8 %v21
    %v34 = vunpack.c.1.s8 %v22
    %v35 = vunpack.c.1.s8 %v23
    %v36 = vunpack.c.1.s8 %v24
    %v37 = vunpack.c.2.s8 %v21
    %v38 = vunpack.c.2.s8 %v22
    %v39 = vunpack.c.2.s8 %v23
    %v40 = vunpack.c.2.s8 %v24
    %v41 = vunpack.c.3.s8 %v21
    %v42 = vunpack.c.3.s8 %v22
    %v43 = vunpack.c.3.s8 %v23
    %v44 = vunpack.c.3.s8 %v24
    %v45 = vunpack.c.0.s8 %v25
    %v46 = vunpack.c.0.s8 %v26
    %v47 = vunpack.c.0.s8 %v27
    %v48 = vunpack.c.0.s8 %v28
    %v49 = vunpack.c.1.s8 %v25
    %v50 = vunpack.c.1.s8 %v26
    %v51 = vunpack.c.1.s8 %v27
    %v52 = vunpack.c.1.s8 %v28
    %v53 = vunpack.c.2.s8 %v25
    %v54 = vunpack.c.2.s8 %v26
    %v55 = vunpack.c.2.s8 %v27
    %v56 = vunpack.c.2.s8 %v28
    %v57 = vunpack.c.3.s8 %v25
    %v58 = vunpack.c.3.s8 %v26
    %v59 = vunpack.c.3.s8 %v27
    %v60 = vunpack.c.3.s8 %v28
    %v61 = vld [vmem:[%s2] sm:$0xf]
    %v62 = vld [vmem:[%s3] sm:$0xf]
    %v63 = vand.u32 %v29, 15
    %v64 = vand.u32 %v30, 15
    %v65 = vand.u32 %v31, 15
    %v66 = vand.u32 %v32, 15
    %v67 = vand.u32 %v33, 15
    %v68 = vand.u32 %v34, 15
    %v69 = vand.u32 %v35, 15
    %v70 = vand.u32 %v36, 15
    %v71 = vand.u32 %v37, 15
    %v72 = vand.u32 %v38, 15
    %v73 = vand.u32 %v39, 15
    %v74 = vand.u32 %v40, 15
    %v75 = vand.u32 %v41, 15
    %v76 = vand.u32 %v42, 15
    %v77 = vand.u32 %v43, 15
    %v78 = vand.u32 %v44, 15
    %v79 = vand.u32 %v45, 15
    %v80 = vand.u32 %v46, 15
    %v81 = vand.u32 %v47, 15
    %v82 = vand.u32 %v48, 15
    %v83 = vand.u32 %v49, 15
    %v84 = vand.u32 %v50, 15
    %v85 = vand.u32 %v51, 15
    %v86 = vand.u32 %v52, 15
    %v87 = vand.u32 %v53, 15
    %v88 = vand.u32 %v54, 15
    %v89 = vand.u32 %v55, 15
    %v90 = vand.u32 %v56, 15
    %v91 = vand.u32 %v57, 15
    %v92 = vand.u32 %v58, 15
    %v93 = vand.u32 %v59, 15
    %v94 = vand.u32 %v60, 15
    %v95 = vcvt.s32.f32 %v63
    %v96 = vcvt.s32.f32 %v64
    %v97 = vcvt.s32.f32 %v65
    %v98 = vcvt.s32.f32 %v66
    %v99 = vcvt.s32.f32 %v67
    %v100 = vcvt.s32.f32 %v68
    %v101 = vcvt.s32.f32 %v69
    %v102 = vcvt.s32.f32 %v70
    %v103 = vcvt.s32.f32 %v71
    %v104 = vcvt.s32.f32 %v72
    %v105 = vcvt.s32.f32 %v73
    %v106 = vcvt.s32.f32 %v74
    %v107 = vcvt.s32.f32 %v75
    %v108 = vcvt.s32.f32 %v76
    %v109 = vcvt.s32.f32 %v77
    %v110 = vcvt.s32.f32 %v78
    %v111 = vcvt.s32.f32 %v79
    %v112 = vcvt.s32.f32 %v80
    %v113 = vcvt.s32.f32 %v81
    %v114 = vcvt.s32.f32 %v82
    %v115 = vcvt.s32.f32 %v83
    %v116 = vcvt.s32.f32 %v84
    %v117 = vcvt.s32.f32 %v85
    %v118 = vcvt.s32.f32 %v86
    %v119 = vcvt.s32.f32 %v87
    %v120 = vcvt.s32.f32 %v88
    %v121 = vcvt.s32.f32 %v89
    %v122 = vcvt.s32.f32 %v90
    %v123 = vcvt.s32.f32 %v91
    %v124 = vcvt.s32.f32 %v92
    %v125 = vcvt.s32.f32 %v93
    %v126 = vcvt.s32.f32 %v94
    %v127 = vpack.c.bf16 %v99, %v95
    %v128 = vpack.c.bf16 %v100, %v96
    %v129 = vpack.c.bf16 %v101, %v97
    %v130 = vpack.c.bf16 %v102, %v98
    %v131 = vpack.c.bf16 %v107, %v103
    %v132 = vpack.c.bf16 %v108, %v104
    %v133 = vpack.c.bf16 %v109, %v105
    %v134 = vpack.c.bf16 %v110, %v106
    %v135 = vpack.c.bf16 %v115, %v111
    %v136 = vpack.c.bf16 %v116, %v112
    %v137 = vpack.c.bf16 %v117, %v113
    %v138 = vpack.c.bf16 %v118, %v114
    %v139 = vpack.c.bf16 %v123, %v119
    %v140 = vpack.c.bf16 %v124, %v120
    %v141 = vpack.c.bf16 %v125, %v121
    %v142 = vpack.c.bf16 %v126, %v122
    %v143 = vshra.s32 %v29, 4
    %v144 = vshra.s32 %v30, 4
    %v145 = vshra.s32 %v31, 4
    %v146 = vshra.s32 %v32, 4
    %v147 = vshra.s32 %v33, 4
    %v148 = vshra.s32 %v34, 4
    %v149 = vshra.s32 %v35, 4
    %v150 = vshra.s32 %v36, 4
    %v151 = vshra.s32 %v37, 4
    %v152 = vshra.s32 %v38, 4
    %v153 = vshra.s32 %v39, 4
    %v154 = vshra.s32 %v40, 4
    %v155 = vshra.s32 %v41, 4
    %v156 = vshra.s32 %v42, 4
    %v157 = vshra.s32 %v43, 4
    %v158 = vshra.s32 %v44, 4
    %v159 = vshra.s32 %v45, 4
    %v160 = vshra.s32 %v46, 4
    %v161 = vshra.s32 %v47, 4
    %v162 = vshra.s32 %v48, 4
    %v163 = vshra.s32 %v49, 4
    %v164 = vshra.s32 %v50, 4
    %v165 = vshra.s32 %v51, 4
    %v166 = vshra.s32 %v52, 4
    %v167 = vshra.s32 %v53, 4
    %v168 = vshra.s32 %v54, 4
    %v169 = vshra.s32 %v55, 4
    %v170 = vshra.s32 %v56, 4
    %v171 = vshra.s32 %v57, 4
    %v172 = vshra.s32 %v58, 4
    %v173 = vshra.s32 %v59, 4
    %v174 = vshra.s32 %v60, 4
    %v175 = vand.u32 %v143, 15
    %v176 = vand.u32 %v144, 15
    %v177 = vand.u32 %v145, 15
    %v178 = vand.u32 %v146, 15
    %v179 = vand.u32 %v147, 15
    %v180 = vand.u32 %v148, 15
    %v181 = vand.u32 %v149, 15
    %v182 = vand.u32 %v150, 15
    %v183 = vand.u32 %v151, 15
    %v184 = vand.u32 %v152, 15
    %v185 = vand.u32 %v153, 15
    %v186 = vand.u32 %v154, 15
    %v187 = vand.u32 %v155, 15
    %v188 = vand.u32 %v156, 15
    %v189 = vand.u32 %v157, 15
    %v190 = vand.u32 %v158, 15
    %v191 = vand.u32 %v159, 15
    %v192 = vand.u32 %v160, 15
    %v193 = vand.u32 %v161, 15
    %v194 = vand.u32 %v162, 15
    %v195 = vand.u32 %v163, 15
    %v196 = vand.u32 %v164, 15
    %v197 = vand.u32 %v165, 15
    %v198 = vand.u32 %v166, 15
    %v199 = vand.u32 %v167, 15
    %v200 = vand.u32 %v168, 15
    %v201 = vand.u32 %v169, 15
    %v202 = vand.u32 %v170, 15
    %v203 = vand.u32 %v171, 15
    %v204 = vand.u32 %v172, 15
    %v205 = vand.u32 %v173, 15
    %v206 = vand.u32 %v174, 15
    %v207 = vcvt.s32.f32 %v175
    %v208 = vcvt.s32.f32 %v176
    %v209 = vcvt.s32.f32 %v177
    %v210 = vcvt.s32.f32 %v178
    %v211 = vcvt.s32.f32 %v179
    %v212 = vcvt.s32.f32 %v180
    %v213 = vcvt.s32.f32 %v181
    %v214 = vcvt.s32.f32 %v182
    %v215 = vcvt.s32.f32 %v183
    %v216 = vcvt.s32.f32 %v184
    %v217 = vcvt.s32.f32 %v185
    %v218 = vcvt.s32.f32 %v186
    %v219 = vcvt.s32.f32 %v187
    %v220 = vcvt.s32.f32 %v188
    %v221 = vcvt.s32.f32 %v189
    %v222 = vcvt.s32.f32 %v190
    %v223 = vcvt.s32.f32 %v191
    %v224 = vcvt.s32.f32 %v192
    %v225 = vcvt.s32.f32 %v193
    %v226 = vcvt.s32.f32 %v194
    %v227 = vcvt.s32.f32 %v195
    %v228 = vcvt.s32.f32 %v196
    %v229 = vcvt.s32.f32 %v197
    %v230 = vcvt.s32.f32 %v198
    %v231 = vcvt.s32.f32 %v199
    %v232 = vcvt.s32.f32 %v200
    %v233 = vcvt.s32.f32 %v201
    %v234 = vcvt.s32.f32 %v202
    %v235 = vcvt.s32.f32 %v203
    %v236 = vcvt.s32.f32 %v204
    %v237 = vcvt.s32.f32 %v205
    %v238 = vcvt.s32.f32 %v206
    %v239 = vpack.c.bf16 %v211, %v207
    %v240 = vpack.c.bf16 %v212, %v208
    %v241 = vpack.c.bf16 %v213, %v209
    %v242 = vpack.c.bf16 %v214, %v210
    %v243 = vpack.c.bf16 %v219, %v215
    %v244 = vpack.c.bf16 %v220, %v216
    %v245 = vpack.c.bf16 %v221, %v217
    %v246 = vpack.c.bf16 %v222, %v218
    %v247 = vpack.c.bf16 %v227, %v223
    %v248 = vpack.c.bf16 %v228, %v224
    %v249 = vpack.c.bf16 %v229, %v225
    %v250 = vpack.c.bf16 %v230, %v226
    %v251 = vpack.c.bf16 %v235, %v231
    %v252 = vpack.c.bf16 %v236, %v232
    %v253 = vpack.c.bf16 %v237, %v233
    %v254 = vpack.c.bf16 %v238, %v234
    %v257 = vunpack.c.l.s4 1966171168
    %v258 = vunpack.c.0.s8 %v257
    %v259 = vlaneseq
    %v260 = vshrl.u32 %v259, 7
    %v261 = vsub.s32 %v258, %v260
    %v262 = vrot.slane %v61, %v261
    %v263 = vcombine.high %v262, %v262
    %v265 = vunpack.c.l.s4 1966171168
    %v266 = vunpack.c.0.s8 %v265
    %v267 = vlaneseq
    %v268 = vshrl.u32 %v267, 7
    %v269 = vsub.s32 %v266, %v268
    %v270 = vrot.slane %v262, %v269
    %v272 = vunpack.c.l.s4 1966171168
    %v273 = vunpack.c.0.s8 %v272
    %v274 = vlaneseq
    %v275 = vshrl.u32 %v274, 7
    %v276 = vsub.s32 %v273, %v275
    %v277 = vrot.slane %v263, %v276
    %v278 = vcombine.high %v270, %v270
    %v279 = vcombine.high %v277, %v277
    %v281 = vpack.i.b16 %v270, %v270
    %v283 = vlaneseq
    %v284 = vshrl.u32 %v283, 7
    %v285 = vsub.s32 0, %v284
    %v286 = vrot.slane %v281, %v285
    %v288 = vpack.i.b16 %v277, %v277
    %v290 = vlaneseq
    %v291 = vshrl.u32 %v290, 7
    %v292 = vsub.s32 0, %v291
    %v293 = vrot.slane %v288, %v292
    %v295 = vpack.i.b16 %v278, %v278
    %v297 = vlaneseq
    %v298 = vshrl.u32 %v297, 7
    %v299 = vsub.s32 0, %v298
    %v300 = vrot.slane %v295, %v299
    %v302 = vpack.i.b16 %v279, %v279
    %v304 = vlaneseq
    %v305 = vshrl.u32 %v304, 7
    %v306 = vsub.s32 0, %v305
    %v307 = vrot.slane %v302, %v306
    %v308 = vmul.bf16 %v127, %v286
    %v309 = vmul.bf16 %v128, %v293
    %v310 = vmul.bf16 %v129, %v300
    %v311 = vmul.bf16 %v130, %v307
    %v312 = vmul.bf16 %v131, %v286
    %v313 = vmul.bf16 %v132, %v293
    %v314 = vmul.bf16 %v133, %v300
    %v315 = vmul.bf16 %v134, %v307
    %v316 = vmul.bf16 %v135, %v286
    %v317 = vmul.bf16 %v136, %v293
    %v318 = vmul.bf16 %v137, %v300
    %v319 = vmul.bf16 %v138, %v307
    %v320 = vmul.bf16 %v139, %v286
    %v321 = vmul.bf16 %v140, %v293
    %v322 = vmul.bf16 %v141, %v300
    %v323 = vmul.bf16 %v142, %v307
    %v326 = vunpack.c.l.s4 1966171168
    %v327 = vunpack.c.0.s8 %v326
    %v328 = vlaneseq
    %v329 = vshrl.u32 %v328, 7
    %v330 = vsub.s32 %v327, %v329
    %v331 = vrot.slane %v62, %v330
    %v332 = vcombine.high %v331, %v331
    %v334 = vunpack.c.l.s4 1966171168
    %v335 = vunpack.c.0.s8 %v334
    %v336 = vlaneseq
    %v337 = vshrl.u32 %v336, 7
    %v338 = vsub.s32 %v335, %v337
    %v339 = vrot.slane %v331, %v338
    %v341 = vunpack.c.l.s4 1966171168
    %v342 = vunpack.c.0.s8 %v341
    %v343 = vlaneseq
    %v344 = vshrl.u32 %v343, 7
    %v345 = vsub.s32 %v342, %v344
    %v346 = vrot.slane %v332, %v345
    %v347 = vcombine.high %v339, %v339
    %v348 = vcombine.high %v346, %v346
    %v350 = vpack.i.b16 %v339, %v339
    %v352 = vlaneseq
    %v353 = vshrl.u32 %v352, 7
    %v354 = vsub.s32 0, %v353
    %v355 = vrot.slane %v350, %v354
    %v357 = vpack.i.b16 %v346, %v346
    %v359 = vlaneseq
    %v360 = vshrl.u32 %v359, 7
    %v361 = vsub.s32 0, %v360
    %v362 = vrot.slane %v357, %v361
    %v364 = vpack.i.b16 %v347, %v347
    %v366 = vlaneseq
    %v367 = vshrl.u32 %v366, 7
    %v368 = vsub.s32 0, %v367
    %v369 = vrot.slane %v364, %v368
    %v371 = vpack.i.b16 %v348, %v348
    %v373 = vlaneseq
    %v374 = vshrl.u32 %v373, 7
    %v375 = vsub.s32 0, %v374
    %v376 = vrot.slane %v371, %v375
    %v377 = vsub.bf16 %v308, %v355
    %v378 = vsub.bf16 %v309, %v362
    %v379 = vsub.bf16 %v310, %v369
    %v380 = vsub.bf16 %v311, %v376
    %v381 = vsub.bf16 %v312, %v355
    %v382 = vsub.bf16 %v313, %v362
    %v383 = vsub.bf16 %v314, %v369
    %v384 = vsub.bf16 %v315, %v376
    %v385 = vsub.bf16 %v316, %v355
    %v386 = vsub.bf16 %v317, %v362
    %v387 = vsub.bf16 %v318, %v369
    %v388 = vsub.bf16 %v319, %v376
    %v389 = vsub.bf16 %v320, %v355
    %v390 = vsub.bf16 %v321, %v362
    %v391 = vsub.bf16 %v322, %v369
    %v392 = vsub.bf16 %v323, %v376
    %393 = vst [vmem:[#allocation2] sm:$0xff] %v377
    %394 = vst [vmem:[#allocation2 + $0x8] sm:$0xff] %v378
    %395 = vst [vmem:[#allocation2 + $0x10] sm:$0xff] %v379
    %396 = vst [vmem:[#allocation2 + $0x18] sm:$0xff] %v380
    %397 = vst [vmem:[#allocation2 + $0x20] sm:$0xff] %v381
    %398 = vst [vmem:[#allocation2 + $0x28] sm:$0xff] %v382
    %399 = vst [vmem:[#allocation2 + $0x30] sm:$0xff] %v383
    %400 = vst [vmem:[#allocation2 + $0x38] sm:$0xff] %v384
    %401 = vst [vmem:[#allocation2 + $0x40] sm:$0xff] %v385
    %402 = vst [vmem:[#allocation2 + $0x48] sm:$0xff] %v386
    %403 = vst [vmem:[#allocation2 + $0x50] sm:$0xff] %v387
    %404 = vst [vmem:[#allocation2 + $0x58] sm:$0xff] %v388
    %405 = vst [vmem:[#allocation2 + $0x60] sm:$0xff] %v389
    %406 = vst [vmem:[#allocation2 + $0x68] sm:$0xff] %v390
    %407 = vst [vmem:[#allocation2 + $0x70] sm:$0xff] %v391
    %408 = vst [vmem:[#allocation2 + $0x78] sm:$0xff] %v392
    %v409 = vmul.bf16 %v239, %v286
    %v410 = vmul.bf16 %v240, %v293
    %v411 = vmul.bf16 %v241, %v300
    %v412 = vmul.bf16 %v242, %v307
    %v413 = vmul.bf16 %v243, %v286
    %v414 = vmul.bf16 %v244, %v293
    %v415 = vmul.bf16 %v245, %v300
    %v416 = vmul.bf16 %v246, %v307
    %v417 = vmul.bf16 %v247, %v286
    %v418 = vmul.bf16 %v248, %v293
    %v419 = vmul.bf16 %v249, %v300
    %v420 = vmul.bf16 %v250, %v307
    %v421 = vmul.bf16 %v251, %v286
    %v422 = vmul.bf16 %v252, %v293
    %v423 = vmul.bf16 %v253, %v300
    %v424 = vmul.bf16 %v254, %v307
    %v425 = vsub.bf16 %v409, %v355
    %v426 = vsub.bf16 %v410, %v362
    %v427 = vsub.bf16 %v411, %v369
    %v428 = vsub.bf16 %v412, %v376
    %v429 = vsub.bf16 %v413, %v355
    %v430 = vsub.bf16 %v414, %v362
    %v431 = vsub.bf16 %v415, %v369
    %v432 = vsub.bf16 %v416, %v376
    %v433 = vsub.bf16 %v417, %v355
    %v434 = vsub.bf16 %v418, %v362
    %v435 = vsub.bf16 %v419, %v369
    %v436 = vsub.bf16 %v420, %v376
    %v437 = vsub.bf16 %v421, %v355
    %v438 = vsub.bf16 %v422, %v362
    %v439 = vsub.bf16 %v423, %v369
    %v440 = vsub.bf16 %v424, %v376
    %441 = vst [vmem:[#allocation2 + $0x80] sm:$0xff] %v425
    %442 = vst [vmem:[#allocation2 + $0x88] sm:$0xff] %v426
    %443 = vst [vmem:[#allocation2 + $0x90] sm:$0xff] %v427
    %444 = vst [vmem:[#allocation2 + $0x98] sm:$0xff] %v428
    %445 = vst [vmem:[#allocation2 + $0xa0] sm:$0xff] %v429
    %446 = vst [vmem:[#allocation2 + $0xa8] sm:$0xff] %v430
    %447 = vst [vmem:[#allocation2 + $0xb0] sm:$0xff] %v431
    %448 = vst [vmem:[#allocation2 + $0xb8] sm:$0xff] %v432
    %449 = vst [vmem:[#allocation2 + $0xc0] sm:$0xff] %v433
    %450 = vst [vmem:[#allocation2 + $0xc8] sm:$0xff] %v434
    %451 = vst [vmem:[#allocation2 + $0xd0] sm:$0xff] %v435
    %452 = vst [vmem:[#allocation2 + $0xd8] sm:$0xff] %v436
    %453 = vst [vmem:[#allocation2 + $0xe0] sm:$0xff] %v437
    %454 = vst [vmem:[#allocation2 + $0xe8] sm:$0xff] %v438
    %455 = vst [vmem:[#allocation2 + $0xf0] sm:$0xff] %v439
    %456 = vst [vmem:[#allocation2 + $0xf8] sm:$0xff] %v440
    %v457 = vld [vmem:[%s1 + $0x40] sm:$0xff]
    %v458 = vld [vmem:[%s1 + $0x48] sm:$0xff]
    %v459 = vld [vmem:[%s1 + $0x50] sm:$0xff]
    %v460 = vld [vmem:[%s1 + $0x58] sm:$0xff]
    %v461 = vld [vmem:[%s1 + $0x60] sm:$0xff]
    %v462 = vld [vmem:[%s1 + $0x68] sm:$0xff]
    %v463 = vld [vmem:[%s1 + $0x70] sm:$0xff]
    %v464 = vld [vmem:[%s1 + $0x78] sm:$0xff]
    %v465 = vunpack.c.0.s8 %v457
    %v466 = vunpack.c.0.s8 %v458
    %v467 = vunpack.c.0.s8 %v459
    %v468 = vunpack.c.0.s8 %v460
    %v469 = vunpack.c.1.s8 %v457
    %v470 = vunpack.c.1.s8 %v458
    %v471 = vunpack.c.1.s8 %v459
    %v472 = vunpack.c.1.s8 %v460
    %v473 = vunpack.c.2.s8 %v457
    %v474 = vunpack.c.2.s8 %v458
    %v475 = vunpack.c.2.s8 %v459
    %v476 = vunpack.c.2.s8 %v460
    %v477 = vunpack.c.3.s8 %v457
    %v478 = vunpack.c.3.s8 %v458
    %v479 = vunpack.c.3.s8 %v459
    %v480 = vunpack.c.3.s8 %v460
    %v481 = vunpack.c.0.s8 %v461
    %v482 = vunpack.c.0.s8 %v462
    %v483 = vunpack.c.0.s8 %v463
    %v484 = vunpack.c.0.s8 %v464
    %v485 = vunpack.c.1.s8 %v461
    %v486 = vunpack.c.1.s8 %v462
    %v487 = vunpack.c.1.s8 %v463
    %v488 = vunpack.c.1.s8 %v464
    %v489 = vunpack.c.2.s8 %v461
    %v490 = vunpack.c.2.s8 %v462
    %v491 = vunpack.c.2.s8 %v463
    %v492 = vunpack.c.2.s8 %v464
    %v493 = vunpack.c.3.s8 %v461
    %v494 = vunpack.c.3.s8 %v462
    %v495 = vunpack.c.3.s8 %v463
    %v496 = vunpack.c.3.s8 %v464
    %v497 = vld [vmem:[%s2] sm:$0xf]
    %v498 = vld [vmem:[%s3] sm:$0xf]
    %v499 = vand.u32 %v465, 15
    %v500 = vand.u32 %v466, 15
    %v501 = vand.u32 %v467, 15
    %v502 = vand.u32 %v468, 15
    %v503 = vand.u32 %v469, 15
    %v504 = vand.u32 %v470, 15
    %v505 = vand.u32 %v471, 15
    %v506 = vand.u32 %v472, 15
    %v507 = vand.u32 %v473, 15
    %v508 = vand.u32 %v474, 15
    %v509 = vand.u32 %v475, 15
    %v510 = vand.u32 %v476, 15
    %v511 = vand.u32 %v477, 15
    %v512 = vand.u32 %v478, 15
    %v513 = vand.u32 %v479, 15
    %v514 = vand.u32 %v480, 15
    %v515 = vand.u32 %v481, 15
    %v516 = vand.u32 %v482, 15
    %v517 = vand.u32 %v483, 15
    %v518 = vand.u32 %v484, 15
    %v519 = vand.u32 %v485, 15
    %v520 = vand.u32 %v486, 15
    %v521 = vand.u32 %v487, 15
    %v522 = vand.u32 %v488, 15
    %v523 = vand.u32 %v489, 15
    %v524 = vand.u32 %v490, 15
    %v525 = vand.u32 %v491, 15
    %v526 = vand.u32 %v492, 15
    %v527 = vand.u32 %v493, 15
    %v528 = vand.u32 %v494, 15
    %v529 = vand.u32 %v495, 15
    %v530 = vand.u32 %v496, 15
    %v531 = vcvt.s32.f32 %v499
    %v532 = vcvt.s32.f32 %v500
    %v533 = vcvt.s32.f32 %v501
    %v534 = vcvt.s32.f32 %v502
    %v535 = vcvt.s32.f32 %v503
    %v536 = vcvt.s32.f32 %v504
    %v537 = vcvt.s32.f32 %v505
    %v538 = vcvt.s32.f32 %v506
    %v539 = vcvt.s32.f32 %v507
    %v540 = vcvt.s32.f32 %v508
    %v541 = vcvt.s32.f32 %v509
    %v542 = vcvt.s32.f32 %v510
    %v543 = vcvt.s32.f32 %v511
    %v544 = vcvt.s32.f32 %v512
    %v545 = vcvt.s32.f32 %v513
    %v546 = vcvt.s32.f32 %v514
    %v547 = vcvt.s32.f32 %v515
    %v548 = vcvt.s32.f32 %v516
    %v549 = vcvt.s32.f32 %v517
    %v550 = vcvt.s32.f32 %v518
    %v551 = vcvt.s32.f32 %v519
    %v552 = vcvt.s32.f32 %v520
    %v553 = vcvt.s32.f32 %v521
    %v554 = vcvt.s32.f32 %v522
    %v555 = vcvt.s32.f32 %v523
    %v556 = vcvt.s32.f32 %v524
    %v557 = vcvt.s32.f32 %v525
    %v558 = vcvt.s32.f32 %v526
    %v559 = vcvt.s32.f32 %v527
    %v560 = vcvt.s32.f32 %v528
    %v561 = vcvt.s32.f32 %v529
    %v562 = vcvt.s32.f32 %v530
    %v563 = vpack.c.bf16 %v535, %v531
    %v564 = vpack.c.bf16 %v536, %v532
    %v565 = vpack.c.bf16 %v537, %v533
    %v566 = vpack.c.bf16 %v538, %v534
    %v567 = vpack.c.bf16 %v543, %v539
    %v568 = vpack.c.bf16 %v544, %v540
    %v569 = vpack.c.bf16 %v545, %v541
    %v570 = vpack.c.bf16 %v546, %v542
    %v571 = vpack.c.bf16 %v551, %v547
    %v572 = vpack.c.bf16 %v552, %v548
    %v573 = vpack.c.bf16 %v553, %v549
    %v574 = vpack.c.bf16 %v554, %v550
    %v575 = vpack.c.bf16 %v559, %v555
    %v576 = vpack.c.bf16 %v560, %v556
    %v577 = vpack.c.bf16 %v561, %v557
    %v578 = vpack.c.bf16 %v562, %v558
    %v579 = vshra.s32 %v465, 4
    %v580 = vshra.s32 %v466, 4
    %v581 = vshra.s32 %v467, 4
    %v582 = vshra.s32 %v468, 4
    %v583 = vshra.s32 %v469, 4
    %v584 = vshra.s32 %v470, 4
    %v585 = vshra.s32 %v471, 4
    %v586 = vshra.s32 %v472, 4
    %v587 = vshra.s32 %v473, 4
    %v588 = vshra.s32 %v474, 4
    %v589 = vshra.s32 %v475, 4
    %v590 = vshra.s32 %v476, 4
    %v591 = vshra.s32 %v477, 4
    %v592 = vshra.s32 %v478, 4
    %v593 = vshra.s32 %v479, 4
    %v594 = vshra.s32 %v480, 4
    %v595 = vshra.s32 %v481, 4
    %v596 = vshra.s32 %v482, 4
    %v597 = vshra.s32 %v483, 4
    %v598 = vshra.s32 %v484, 4
    %v599 = vshra.s32 %v485, 4
    %v600 = vshra.s32 %v486, 4
    %v601 = vshra.s32 %v487, 4
    %v602 = vshra.s32 %v488, 4
    %v603 = vshra.s32 %v489, 4
    %v604 = vshra.s32 %v490, 4
    %v605 = vshra.s32 %v491, 4
    %v606 = vshra.s32 %v492, 4
    %v607 = vshra.s32 %v493, 4
    %v608 = vshra.s32 %v494, 4
    %v609 = vshra.s32 %v495, 4
    %v610 = vshra.s32 %v496, 4
    %v611 = vand.u32 %v579, 15
    %v612 = vand.u32 %v580, 15
    %v613 = vand.u32 %v581, 15
    %v614 = vand.u32 %v582, 15
    %v615 = vand.u32 %v583, 15
    %v616 = vand.u32 %v584, 15
    %v617 = vand.u32 %v585, 15
    %v618 = vand.u32 %v586, 15
    %v619 = vand.u32 %v587, 15
    %v620 = vand.u32 %v588, 15
    %v621 = vand.u32 %v589, 15
    %v622 = vand.u32 %v590, 15
    %v623 = vand.u32 %v591, 15
    %v624 = vand.u32 %v592, 15
    %v625 = vand.u32 %v593, 15
    %v626 = vand.u32 %v594, 15
    %v627 = vand.u32 %v595, 15
    %v628 = vand.u32 %v596, 15
    %v629 = vand.u32 %v597, 15
    %v630 = vand.u32 %v598, 15
    %v631 = vand.u32 %v599, 15
    %v632 = vand.u32 %v600, 15
    %v633 = vand.u32 %v601, 15
    %v634 = vand.u32 %v602, 15
    %v635 = vand.u32 %v603, 15
    %v636 = vand.u32 %v604, 15
    %v637 = vand.u32 %v605, 15
    %v638 = vand.u32 %v606, 15
    %v639 = vand.u32 %v607, 15
    %v640 = vand.u32 %v608, 15
    %v641 = vand.u32 %v609, 15
    %v642 = vand.u32 %v610, 15
    %v643 = vcvt.s32.f32 %v611
    %v644 = vcvt.s32.f32 %v612
    %v645 = vcvt.s32.f32 %v613
    %v646 = vcvt.s32.f32 %v614
    %v647 = vcvt.s32.f32 %v615
    %v648 = vcvt.s32.f32 %v616
    %v649 = vcvt.s32.f32 %v617
    %v650 = vcvt.s32.f32 %v618
    %v651 = vcvt.s32.f32 %v619
    %v652 = vcvt.s32.f32 %v620
    %v653 = vcvt.s32.f32 %v621
    %v654 = vcvt.s32.f32 %v622
    %v655 = vcvt.s32.f32 %v623
    %v656 = vcvt.s32.f32 %v624
    %v657 = vcvt.s32.f32 %v625
    %v658 = vcvt.s32.f32 %v626
    %v659 = vcvt.s32.f32 %v627
    %v660 = vcvt.s32.f32 %v628
    %v661 = vcvt.s32.f32 %v629
    %v662 = vcvt.s32.f32 %v630
    %v663 = vcvt.s32.f32 %v631
    %v664 = vcvt.s32.f32 %v632
    %v665 = vcvt.s32.f32 %v633
    %v666 = vcvt.s32.f32 %v634
    %v667 = vcvt.s32.f32 %v635
    %v668 = vcvt.s32.f32 %v636
    %v669 = vcvt.s32.f32 %v637
    %v670 = vcvt.s32.f32 %v638
    %v671 = vcvt.s32.f32 %v639
    %v672 = vcvt.s32.f32 %v640
    %v673 = vcvt.s32.f32 %v641
    %v674 = vcvt.s32.f32 %v642
    %v675 = vpack.c.bf16 %v647, %v643
    %v676 = vpack.c.bf16 %v648, %v644
    %v677 = vpack.c.bf16 %v649, %v645
    %v678 = vpack.c.bf16 %v650, %v646
    %v679 = vpack.c.bf16 %v655, %v651
    %v680 = vpack.c.bf16 %v656, %v652
    %v681 = vpack.c.bf16 %v657, %v653
    %v682 = vpack.c.bf16 %v658, %v654
    %v683 = vpack.c.bf16 %v663, %v659
    %v684 = vpack.c.bf16 %v664, %v660
    %v685 = vpack.c.bf16 %v665, %v661
    %v686 = vpack.c.bf16 %v666, %v662
    %v687 = vpack.c.bf16 %v671, %v667
    %v688 = vpack.c.bf16 %v672, %v668
    %v689 = vpack.c.bf16 %v673, %v669
    %v690 = vpack.c.bf16 %v674, %v670
    %v693 = vunpack.c.l.s4 1966171168
    %v694 = vunpack.c.0.s8 %v693
    %v695 = vlaneseq
    %v696 = vshrl.u32 %v695, 7
    %v697 = vsub.s32 %v694, %v696
    %v698 = vrot.slane %v497, %v697
    %v699 = vcombine.high %v698, %v698
    %v701 = vunpack.c.l.s4 1966171168
    %v702 = vunpack.c.0.s8 %v701
    %v703 = vlaneseq
    %v704 = vshrl.u32 %v703, 7
    %v705 = vsub.s32 %v702, %v704
    %v706 = vrot.slane %v698, %v705
    %v708 = vunpack.c.l.s4 1966171168
    %v709 = vunpack.c.0.s8 %v708
    %v710 = vlaneseq
    %v711 = vshrl.u32 %v710, 7
    %v712 = vsub.s32 %v709, %v711
    %v713 = vrot.slane %v699, %v712
    %v714 = vcombine.high %v706, %v706
    %v715 = vcombine.high %v713, %v713
    %v717 = vshrl.u32 %v706, 16
    %v718 = vpack.i.b16 %v717, %v717
    %v720 = vlaneseq
    %v721 = vshrl.u32 %v720, 7
    %v722 = vsub.s32 0, %v721
    %v723 = vrot.slane %v718, %v722
    %v725 = vshrl.u32 %v713, 16
    %v726 = vpack.i.b16 %v725, %v725
    %v728 = vlaneseq
    %v729 = vshrl.u32 %v728, 7
    %v730 = vsub.s32 0, %v729
    %v731 = vrot.slane %v726, %v730
    %v733 = vshrl.u32 %v714, 16
    %v734 = vpack.i.b16 %v733, %v733
    %v736 = vlaneseq
    %v737 = vshrl.u32 %v736, 7
    %v738 = vsub.s32 0, %v737
    %v739 = vrot.slane %v734, %v738
    %v741 = vshrl.u32 %v715, 16
    %v742 = vpack.i.b16 %v741, %v741
    %v744 = vlaneseq
    %v745 = vshrl.u32 %v744, 7
    %v746 = vsub.s32 0, %v745
    %v747 = vrot.slane %v742, %v746
    %v748 = vmul.bf16 %v563, %v723
    %v749 = vmul.bf16 %v564, %v731
    %v750 = vmul.bf16 %v565, %v739
    %v751 = vmul.bf16 %v566, %v747
    %v752 = vmul.bf16 %v567, %v723
    %v753 = vmul.bf16 %v568, %v731
    %v754 = vmul.bf16 %v569, %v739
    %v755 = vmul.bf16 %v570, %v747
    %v756 = vmul.bf16 %v571, %v723
    %v757 = vmul.bf16 %v572, %v731
    %v758 = vmul.bf16 %v573, %v739
    %v759 = vmul.bf16 %v574, %v747
    %v760 = vmul.bf16 %v575, %v723
    %v761 = vmul.bf16 %v576, %v731
    %v762 = vmul.bf16 %v577, %v739
    %v763 = vmul.bf16 %v578, %v747
    %v766 = vunpack.c.l.s4 1966171168
    %v767 = vunpack.c.0.s8 %v766
    %v768 = vlaneseq
    %v769 = vshrl.u32 %v768, 7
    %v770 = vsub.s32 %v767, %v769
    %v771 = vrot.slane %v498, %v770
    %v772 = vcombine.high %v771, %v771
    %v774 = vunpack.c.l.s4 1966171168
    %v775 = vunpack.c.0.s8 %v774
    %v776 = vlaneseq
    %v777 = vshrl.u32 %v776, 7
    %v778 = vsub.s32 %v775, %v777
    %v779 = vrot.slane %v771, %v778
    %v781 = vunpack.c.l.s4 1966171168
    %v782 = vunpack.c.0.s8 %v781
    %v783 = vlaneseq
    %v784 = vshrl.u32 %v783, 7
    %v785 = vsub.s32 %v782, %v784
    %v786 = vrot.slane %v772, %v785
    %v787 = vcombine.high %v779, %v779
    %v788 = vcombine.high %v786, %v786
    %v790 = vshrl.u32 %v779, 16
    %v791 = vpack.i.b16 %v790, %v790
    %v793 = vlaneseq
    %v794 = vshrl.u32 %v793, 7
    %v795 = vsub.s32 0, %v794
    %v796 = vrot.slane %v791, %v795
    %v798 = vshrl.u32 %v786, 16
    %v799 = vpack.i.b16 %v798, %v798
    %v801 = vlaneseq
    %v802 = vshrl.u32 %v801, 7
    %v803 = vsub.s32 0, %v802
    %v804 = vrot.slane %v799, %v803
    %v806 = vshrl.u32 %v787, 16
    %v807 = vpack.i.b16 %v806, %v806
    %v809 = vlaneseq
    %v810 = vshrl.u32 %v809, 7
    %v811 = vsub.s32 0, %v810
    %v812 = vrot.slane %v807, %v811
    %v814 = vshrl.u32 %v788, 16
    %v815 = vpack.i.b16 %v814, %v814
    %v817 = vlaneseq
    %v818 = vshrl.u32 %v817, 7
    %v819 = vsub.s32 0, %v818
    %v820 = vrot.slane %v815, %v819
    %v821 = vsub.bf16 %v748, %v796
    %v822 = vsub.bf16 %v749, %v804
    %v823 = vsub.bf16 %v750, %v812
    %v824 = vsub.bf16 %v751, %v820
    %v825 = vsub.bf16 %v752, %v796
    %v826 = vsub.bf16 %v753, %v804
    %v827 = vsub.bf16 %v754, %v812
    %v828 = vsub.bf16 %v755, %v820
    %v829 = vsub.bf16 %v756, %v796
    %v830 = vsub.bf16 %v757, %v804
    %v831 = vsub.bf16 %v758, %v812
    %v832 = vsub.bf16 %v759, %v820
    %v833 = vsub.bf16 %v760, %v796
    %v834 = vsub.bf16 %v761, %v804
    %v835 = vsub.bf16 %v762, %v812
    %v836 = vsub.bf16 %v763, %v820
    %837 = vst [vmem:[#allocation2 + $0x100] sm:$0xff] %v821
    %838 = vst [vmem:[#allocation2 + $0x108] sm:$0xff] %v822
    %839 = vst [vmem:[#allocation2 + $0x110] sm:$0xff] %v823
    %840 = vst [vmem:[#allocation2 + $0x118] sm:$0xff] %v824
    %841 = vst [vmem:[#allocation2 + $0x120] sm:$0xff] %v825
    %842 = vst [vmem:[#allocation2 + $0x128] sm:$0xff] %v826
    %843 = vst [vmem:[#allocation2 + $0x130] sm:$0xff] %v827
    %844 = vst [vmem:[#allocation2 + $0x138] sm:$0xff] %v828
    %845 = vst [vmem:[#allocation2 + $0x140] sm:$0xff] %v829
    %846 = vst [vmem:[#allocation2 + $0x148] sm:$0xff] %v830
    %847 = vst [vmem:[#allocation2 + $0x150] sm:$0xff] %v831
    %848 = vst [vmem:[#allocation2 + $0x158] sm:$0xff] %v832
    %849 = vst [vmem:[#allocation2 + $0x160] sm:$0xff] %v833
    %850 = vst [vmem:[#allocation2 + $0x168] sm:$0xff] %v834
    %851 = vst [vmem:[#allocation2 + $0x170] sm:$0xff] %v835
    %852 = vst [vmem:[#allocation2 + $0x178] sm:$0xff] %v836
    %v853 = vmul.bf16 %v675, %v723
    %v854 = vmul.bf16 %v676, %v731
    %v855 = vmul.bf16 %v677, %v739
    %v856 = vmul.bf16 %v678, %v747
    %v857 = vmul.bf16 %v679, %v723
    %v858 = vmul.bf16 %v680, %v731
    %v859 = vmul.bf16 %v681, %v739
    %v860 = vmul.bf16 %v682, %v747
    %v861 = vmul.bf16 %v683, %v723
    %v862 = vmul.bf16 %v684, %v731
    %v863 = vmul.bf16 %v685, %v739
    %v864 = vmul.bf16 %v686, %v747
    %v865 = vmul.bf16 %v687, %v723
    %v866 = vmul.bf16 %v688, %v731
    %v867 = vmul.bf16 %v689, %v739
    %v868 = vmul.bf16 %v690, %v747
    %v869 = vsub.bf16 %v853, %v796
    %v870 = vsub.bf16 %v854, %v804
    %v871 = vsub.bf16 %v855, %v812
    %v872 = vsub.bf16 %v856, %v820
    %v873 = vsub.bf16 %v857, %v796
    %v874 = vsub.bf16 %v858, %v804
    %v875 = vsub.bf16 %v859, %v812
    %v876 = vsub.bf16 %v860, %v820
    %v877 = vsub.bf16 %v861, %v796
    %v878 = vsub.bf16 %v862, %v804
    %v879 = vsub.bf16 %v863, %v812
    %v880 = vsub.bf16 %v864, %v820
    %v881 = vsub.bf16 %v865, %v796
    %v882 = vsub.bf16 %v866, %v804
    %v883 = vsub.bf16 %v867, %v812
    %v884 = vsub.bf16 %v868, %v820
    %885 = vst [vmem:[#allocation2 + $0x180] sm:$0xff] %v869
    %886 = vst [vmem:[#allocation2 + $0x188] sm:$0xff] %v870
    %887 = vst [vmem:[#allocation2 + $0x190] sm:$0xff] %v871
    %888 = vst [vmem:[#allocation2 + $0x198] sm:$0xff] %v872
    %889 = vst [vmem:[#allocation2 + $0x1a0] sm:$0xff] %v873
    %890 = vst [vmem:[#allocation2 + $0x1a8] sm:$0xff] %v874
    %891 = vst [vmem:[#allocation2 + $0x1b0] sm:$0xff] %v875
    %892 = vst [vmem:[#allocation2 + $0x1b8] sm:$0xff] %v876
    %893 = vst [vmem:[#allocation2 + $0x1c0] sm:$0xff] %v877
    %894 = vst [vmem:[#allocation2 + $0x1c8] sm:$0xff] %v878
    %895 = vst [vmem:[#allocation2 + $0x1d0] sm:$0xff] %v879
    %896 = vst [vmem:[#allocation2 + $0x1d8] sm:$0xff] %v880
    %897 = vst [vmem:[#allocation2 + $0x1e0] sm:$0xff] %v881
    %898 = vst [vmem:[#allocation2 + $0x1e8] sm:$0xff] %v882
    %899 = vst [vmem:[#allocation2 + $0x1f0] sm:$0xff] %v883
    %900 = vst [vmem:[#allocation2 + $0x1f8] sm:$0xff] %v884
  $region21: #{forward.5} parent=0 // pred_fallthru
    _
  %p901 = scmp.eq.s32.totalorder 0, 0
  // Predicated region
  $region22: #{forward.5} parent=0 // pred_check
    %p902 = pneg %p901
  $region23: #{forward.5} parent=0 // pred_check_branch
    %904 = sbr.rel (%p902) target = $region25
  $region24: #{forward.5} parent=0 // pred_region
    %905 = vst [vmem:[#allocation3] sm:$0xff] 0.0
    %906 = vst [vmem:[#allocation3 + $0x8] sm:$0xff] 0.0
    %907 = vst [vmem:[#allocation3 + $0x10] sm:$0xff] 0.0
    %908 = vst [vmem:[#allocation3 + $0x18] sm:$0xff] 0.0
    %909 = vst [vmem:[#allocation3 + $0x20] sm:$0xff] 0.0
    %910 = vst [vmem:[#allocation3 + $0x28] sm:$0xff] 0.0
    %911 = vst [vmem:[#allocation3 + $0x30] sm:$0xff] 0.0
    %912 = vst [vmem:[#allocation3 + $0x38] sm:$0xff] 0.0
    %913 = vst [vmem:[#allocation3 + $0x40] sm:$0xff] 0.0
    %914 = vst [vmem:[#allocation3 + $0x48] sm:$0xff] 0.0
    %915 = vst [vmem:[#allocation3 + $0x50] sm:$0xff] 0.0
    %916 = vst [vmem:[#allocation3 + $0x58] sm:$0xff] 0.0
    %917 = vst [vmem:[#allocation3 + $0x60] sm:$0xff] 0.0
    %918 = vst [vmem:[#allocation3 + $0x68] sm:$0xff] 0.0
    %919 = vst [vmem:[#allocation3 + $0x70] sm:$0xff] 0.0
    %920 = vst [vmem:[#allocation3 + $0x78] sm:$0xff] 0.0
    %921 = vst [vmem:[#allocation3 + $0x80] sm:$0xff] 0.0
    %922 = vst [vmem:[#allocation3 + $0x88] sm:$0xff] 0.0
    %923 = vst [vmem:[#allocation3 + $0x90] sm:$0xff] 0.0
    %924 = vst [vmem:[#allocation3 + $0x98] sm:$0xff] 0.0
    %925 = vst [vmem:[#allocation3 + $0xa0] sm:$0xff] 0.0
    %926 = vst [vmem:[#allocation3 + $0xa8] sm:$0xff] 0.0
    %927 = vst [vmem:[#allocation3 + $0xb0] sm:$0xff] 0.0
    %928 = vst [vmem:[#allocation3 + $0xb8] sm:$0xff] 0.0
    %929 = vst [vmem:[#allocation3 + $0xc0] sm:$0xff] 0.0
    %930 = vst [vmem:[#allocation3 + $0xc8] sm:$0xff] 0.0
    %931 = vst [vmem:[#allocation3 + $0xd0] sm:$0xff] 0.0
    %932 = vst [vmem:[#allocation3 + $0xd8] sm:$0xff] 0.0
    %933 = vst [vmem:[#allocation3 + $0xe0] sm:$0xff] 0.0
    %934 = vst [vmem:[#allocation3 + $0xe8] sm:$0xff] 0.0
    %935 = vst [vmem:[#allocation3 + $0xf0] sm:$0xff] 0.0
    %936 = vst [vmem:[#allocation3 + $0xf8] sm:$0xff] 0.0
    %937 = vst [vmem:[#allocation3 + $0x100] sm:$0xff] 0.0
    %938 = vst [vmem:[#allocation3 + $0x108] sm:$0xff] 0.0
    %939 = vst [vmem:[#allocation3 + $0x110] sm:$0xff] 0.0
    %940 = vst [vmem:[#allocation3 + $0x118] sm:$0xff] 0.0
    %941 = vst [vmem:[#allocation3 + $0x120] sm:$0xff] 0.0
    %942 = vst [vmem:[#allocation3 + $0x128] sm:$0xff] 0.0
    %943 = vst [vmem:[#allocation3 + $0x130] sm:$0xff] 0.0
    %944 = vst [vmem:[#allocation3 + $0x138] sm:$0xff] 0.0
    %945 = vst [vmem:[#allocation3 + $0x140] sm:$0xff] 0.0
    %946 = vst [vmem:[#allocation3 + $0x148] sm:$0xff] 0.0
    %947 = vst [vmem:[#allocation3 + $0x150] sm:$0xff] 0.0
    %948 = vst [vmem:[#allocation3 + $0x158] sm:$0xff] 0.0
    %949 = vst [vmem:[#allocation3 + $0x160] sm:$0xff] 0.0
    %950 = vst [vmem:[#allocation3 + $0x168] sm:$0xff] 0.0
    %951 = vst [vmem:[#allocation3 + $0x170] sm:$0xff] 0.0
    %952 = vst [vmem:[#allocation3 + $0x178] sm:$0xff] 0.0
    %953 = vst [vmem:[#allocation3 + $0x180] sm:$0xff] 0.0
    %954 = vst [vmem:[#allocation3 + $0x188] sm:$0xff] 0.0
    %955 = vst [vmem:[#allocation3 + $0x190] sm:$0xff] 0.0
    %956 = vst [vmem:[#allocation3 + $0x198] sm:$0xff] 0.0
    %957 = vst [vmem:[#allocation3 + $0x1a0] sm:$0xff] 0.0
    %958 = vst [vmem:[#allocation3 + $0x1a8] sm:$0xff] 0.0
    %959 = vst [vmem:[#allocation3 + $0x1b0] sm:$0xff] 0.0
    %960 = vst [vmem:[#allocation3 + $0x1b8] sm:$0xff] 0.0
    %961 = vst [vmem:[#allocation3 + $0x1c0] sm:$0xff] 0.0
    %962 = vst [vmem:[#allocation3 + $0x1c8] sm:$0xff] 0.0
    %963 = vst [vmem:[#allocation3 + $0x1d0] sm:$0xff] 0.0
    %964 = vst [vmem:[#allocation3 + $0x1d8] sm:$0xff] 0.0
    %965 = vst [vmem:[#allocation3 + $0x1e0] sm:$0xff] 0.0
    %966 = vst [vmem:[#allocation3 + $0x1e8] sm:$0xff] 0.0
    %967 = vst [vmem:[#allocation3 + $0x1f0] sm:$0xff] 0.0
    %968 = vst [vmem:[#allocation3 + $0x1f8] sm:$0xff] 0.0
  $region25: #{forward.5} parent=0 // pred_fallthru
    _
  %v969 = vld [vmem:[#allocation3] sm:$0xff]
  %v970 = vld [vmem:[#allocation3 + $0x8] sm:$0xff]
  %v971 = vld [vmem:[#allocation3 + $0x10] sm:$0xff]
  %v972 = vld [vmem:[#allocation3 + $0x18] sm:$0xff]
  %v973 = vld [vmem:[#allocation3 + $0x20] sm:$0xff]
  %v974 = vld [vmem:[#allocation3 + $0x28] sm:$0xff]
  %v975 = vld [vmem:[#allocation3 + $0x30] sm:$0xff]
  %v976 = vld [vmem:[#allocation3 + $0x38] sm:$0xff]
  %v977 = vld [vmem:[#allocation3 + $0x40] sm:$0xff]
  %v978 = vld [vmem:[#allocation3 + $0x48] sm:$0xff]
  %v979 = vld [vmem:[#allocation3 + $0x50] sm:$0xff]
  %v980 = vld [vmem:[#allocation3 + $0x58] sm:$0xff]
  %v981 = vld [vmem:[#allocation3 + $0x60] sm:$0xff]
  %v982 = vld [vmem:[#allocation3 + $0x68] sm:$0xff]
  %v983 = vld [vmem:[#allocation3 + $0x70] sm:$0xff]
  %v984 = vld [vmem:[#allocation3 + $0x78] sm:$0xff]
  %v985 = vld [vmem:[#allocation3 + $0x80] sm:$0xff]
  %v986 = vld [vmem:[#allocation3 + $0x88] sm:$0xff]
  %v987 = vld [vmem:[#allocation3 + $0x90] sm:$0xff]
  %v988 = vld [vmem:[#allocation3 + $0x98] sm:$0xff]
  %v989 = vld [vmem:[#allocation3 + $0xa0] sm:$0xff]
  %v990 = vld [vmem:[#allocation3 + $0xa8] sm:$0xff]
  %v991 = vld [vmem:[#allocation3 + $0xb0] sm:$0xff]
  %v992 = vld [vmem:[#allocation3 + $0xb8] sm:$0xff]
  %v993 = vld [vmem:[#allocation3 + $0xc0] sm:$0xff]
  %v994 = vld [vmem:[#allocation3 + $0xc8] sm:$0xff]
  %v995 = vld [vmem:[#allocation3 + $0xd0] sm:$0xff]
  %v996 = vld [vmem:[#allocation3 + $0xd8] sm:$0xff]
  %v997 = vld [vmem:[#allocation3 + $0xe0] sm:$0xff]
  %v998 = vld [vmem:[#allocation3 + $0xe8] sm:$0xff]
  %v999 = vld [vmem:[#allocation3 + $0xf0] sm:$0xff]
  %v1000 = vld [vmem:[#allocation3 + $0xf8] sm:$0xff]
  %v1001 = vld [vmem:[#allocation3 + $0x100] sm:$0xff]
  %v1002 = vld [vmem:[#allocation3 + $0x108] sm:$0xff]
  %v1003 = vld [vmem:[#allocation3 + $0x110] sm:$0xff]
  %v1004 = vld [vmem:[#allocation3 + $0x118] sm:$0xff]
  %v1005 = vld [vmem:[#allocation3 + $0x120] sm:$0xff]
  %v1006 = vld [vmem:[#allocation3 + $0x128] sm:$0xff]
  %v1007 = vld [vmem:[#allocation3 + $0x130] sm:$0xff]
  %v1008 = vld [vmem:[#allocation3 + $0x138] sm:$0xff]
  %v1009 = vld [vmem:[#allocation3 + $0x140] sm:$0xff]
  %v1010 = vld [vmem:[#allocation3 + $0x148] sm:$0xff]
  %v1011 = vld [vmem:[#allocation3 + $0x150] sm:$0xff]
  %v1012 = vld [vmem:[#allocation3 + $0x158] sm:$0xff]
  %v1013 = vld [vmem:[#allocation3 + $0x160] sm:$0xff]
  %v1014 = vld [vmem:[#allocation3 + $0x168] sm:$0xff]
  %v1015 = vld [vmem:[#allocation3 + $0x170] sm:$0xff]
  %v1016 = vld [vmem:[#allocation3 + $0x178] sm:$0xff]
  %v1017 = vld [vmem:[#allocation3 + $0x180] sm:$0xff]
  %v1018 = vld [vmem:[#allocation3 + $0x188] sm:$0xff]
  %v1019 = vld [vmem:[#allocation3 + $0x190] sm:$0xff]
  %v1020 = vld [vmem:[#allocation3 + $0x198] sm:$0xff]
  %v1021 = vld [vmem:[#allocation3 + $0x1a0] sm:$0xff]
  %v1022 = vld [vmem:[#allocation3 + $0x1a8] sm:$0xff]
  %v1023 = vld [vmem:[#allocation3 + $0x1b0] sm:$0xff]
  %v1024 = vld [vmem:[#allocation3 + $0x1b8] sm:$0xff]
  %v1025 = vld [vmem:[#allocation3 + $0x1c0] sm:$0xff]
  %v1026 = vld [vmem:[#allocation3 + $0x1c8] sm:$0xff]
  %v1027 = vld [vmem:[#allocation3 + $0x1d0] sm:$0xff]
  %v1028 = vld [vmem:[#allocation3 + $0x1d8] sm:$0xff]
  %v1029 = vld [vmem:[#allocation3 + $0x1e0] sm:$0xff]
  %v1030 = vld [vmem:[#allocation3 + $0x1e8] sm:$0xff]
  %v1031 = vld [vmem:[#allocation3 + $0x1f0] sm:$0xff]
  %v1032 = vld [vmem:[#allocation3 + $0x1f8] sm:$0xff]
  %v1033 = vld [vmem:[%s0] sm:$0xff]
  %v1034 = vld [vmem:[%s0 + $0x8] sm:$0xff]
  %v1035 = vld [vmem:[%s0 + $0x10] sm:$0xff]
  %v1036 = vld [vmem:[%s0 + $0x18] sm:$0xff]
  %v1037 = vld [vmem:[%s0 + $0x20] sm:$0xff]
  %v1038 = vld [vmem:[%s0 + $0x28] sm:$0xff]
  %v1039 = vld [vmem:[%s0 + $0x30] sm:$0xff]
  %v1040 = vld [vmem:[%s0 + $0x38] sm:$0xff]
  %v1041 = vld [vmem:[%s0 + $0x40] sm:$0xff]
  %v1042 = vld [vmem:[%s0 + $0x48] sm:$0xff]
  %v1043 = vld [vmem:[%s0 + $0x50] sm:$0xff]
  %v1044 = vld [vmem:[%s0 + $0x58] sm:$0xff]
  %v1045 = vld [vmem:[%s0 + $0x60] sm:$0xff]
  %v1046 = vld [vmem:[%s0 + $0x68] sm:$0xff]
  %v1047 = vld [vmem:[%s0 + $0x70] sm:$0xff]
  %v1048 = vld [vmem:[%s0 + $0x78] sm:$0xff]
  %v1049 = vld [vmem:[#allocation2] sm:$0xff]
  %v1050 = vld [vmem:[#allocation2 + $0x8] sm:$0xff]
  %v1051 = vld [vmem:[#allocation2 + $0x10] sm:$0xff]
  %v1052 = vld [vmem:[#allocation2 + $0x18] sm:$0xff]
  %v1053 = vld [vmem:[#allocation2 + $0x20] sm:$0xff]
  %v1054 = vld [vmem:[#allocation2 + $0x28] sm:$0xff]
  %v1055 = vld [vmem:[#allocation2 + $0x30] sm:$0xff]
  %v1056 = vld [vmem:[#allocation2 + $0x38] sm:$0xff]
  %v1057 = vld [vmem:[#allocation2 + $0x40] sm:$0xff]
  %v1058 = vld [vmem:[#allocation2 + $0x48] sm:$0xff]
  %v1059 = vld [vmem:[#allocation2 + $0x50] sm:$0xff]
  %v1060 = vld [vmem:[#allocation2 + $0x58] sm:$0xff]
  %v1061 = vld [vmem:[#allocation2 + $0x60] sm:$0xff]
  %v1062 = vld [vmem:[#allocation2 + $0x68] sm:$0xff]
  %v1063 = vld [vmem:[#allocation2 + $0x70] sm:$0xff]
  %v1064 = vld [vmem:[#allocation2 + $0x78] sm:$0xff]
  %v1065 = vld [vmem:[#allocation2 + $0x80] sm:$0xff]
  %v1066 = vld [vmem:[#allocation2 + $0x88] sm:$0xff]
  %v1067 = vld [vmem:[#allocation2 + $0x90] sm:$0xff]
  %v1068 = vld [vmem:[#allocation2 + $0x98] sm:$0xff]
  %v1069 = vld [vmem:[#allocation2 + $0xa0] sm:$0xff]
  %v1070 = vld [vmem:[#allocation2 + $0xa8] sm:$0xff]
  %v1071 = vld [vmem:[#allocation2 + $0xb0] sm:$0xff]
  %v1072 = vld [vmem:[#allocation2 + $0xb8] sm:$0xff]
  %v1073 = vld [vmem:[#allocation2 + $0xc0] sm:$0xff]
  %v1074 = vld [vmem:[#allocation2 + $0xc8] sm:$0xff]
  %v1075 = vld [vmem:[#allocation2 + $0xd0] sm:$0xff]
  %v1076 = vld [vmem:[#allocation2 + $0xd8] sm:$0xff]
  %v1077 = vld [vmem:[#allocation2 + $0xe0] sm:$0xff]
  %v1078 = vld [vmem:[#allocation2 + $0xe8] sm:$0xff]
  %v1079 = vld [vmem:[#allocation2 + $0xf0] sm:$0xff]
  %v1080 = vld [vmem:[#allocation2 + $0xf8] sm:$0xff]
  %v1081 = vld [vmem:[#allocation2 + $0x100] sm:$0xff]
  %v1082 = vld [vmem:[#allocation2 + $0x108] sm:$0xff]
  %v1083 = vld [vmem:[#allocation2 + $0x110] sm:$0xff]
  %v1084 = vld [vmem:[#allocation2 + $0x118] sm:$0xff]
  %v1085 = vld [vmem:[#allocation2 + $0x120] sm:$0xff]
  %v1086 = vld [vmem:[#allocation2 + $0x128] sm:$0xff]
  %v1087 = vld [vmem:[#allocation2 + $0x130] sm:$0xff]
  %v1088 = vld [vmem:[#allocation2 + $0x138] sm:$0xff]
  %v1089 = vld [vmem:[#allocation2 + $0x140] sm:$0xff]
  %v1090 = vld [vmem:[#allocation2 + $0x148] sm:$0xff]
  %v1091 = vld [vmem:[#allocation2 + $0x150] sm:$0xff]
  %v1092 = vld [vmem:[#allocation2 + $0x158] sm:$0xff]
  %v1093 = vld [vmem:[#allocation2 + $0x160] sm:$0xff]
  %v1094 = vld [vmem:[#allocation2 + $0x168] sm:$0xff]
  %v1095 = vld [vmem:[#allocation2 + $0x170] sm:$0xff]
  %v1096 = vld [vmem:[#allocation2 + $0x178] sm:$0xff]
  %v1097 = vld [vmem:[#allocation2 + $0x180] sm:$0xff]
  %v1098 = vld [vmem:[#allocation2 + $0x188] sm:$0xff]
  %v1099 = vld [vmem:[#allocation2 + $0x190] sm:$0xff]
  %v1100 = vld [vmem:[#allocation2 + $0x198] sm:$0xff]
  %v1101 = vld [vmem:[#allocation2 + $0x1a0] sm:$0xff]
  %v1102 = vld [vmem:[#allocation2 + $0x1a8] sm:$0xff]
  %v1103 = vld [vmem:[#allocation2 + $0x1b0] sm:$0xff]
  %v1104 = vld [vmem:[#allocation2 + $0x1b8] sm:$0xff]
  %v1105 = vld [vmem:[#allocation2 + $0x1c0] sm:$0xff]
  %v1106 = vld [vmem:[#allocation2 + $0x1c8] sm:$0xff]
  %v1107 = vld [vmem:[#allocation2 + $0x1d0] sm:$0xff]
  %v1108 = vld [vmem:[#allocation2 + $0x1d8] sm:$0xff]
  %v1109 = vld [vmem:[#allocation2 + $0x1e0] sm:$0xff]
  %v1110 = vld [vmem:[#allocation2 + $0x1e8] sm:$0xff]
  %v1111 = vld [vmem:[#allocation2 + $0x1f0] sm:$0xff]
  %v1112 = vld [vmem:[#allocation2 + $0x1f8] sm:$0xff]
  %v1129 = vunpack.c.l.b16 %v1033
  %v1130 = vunpack.c.h.b16 %v1033
  %v1131 = vunpack.c.l.b16 %v1034
  %v1132 = vunpack.c.h.b16 %v1034
  %v1133 = vunpack.c.l.b16 %v1035
  %v1134 = vunpack.c.h.b16 %v1035
  %v1135 = vunpack.c.l.b16 %v1036
  %v1136 = vunpack.c.h.b16 %v1036
  %v1137 = vunpack.c.l.b16 %v1037
  %v1138 = vunpack.c.h.b16 %v1037
  %v1139 = vunpack.c.l.b16 %v1038
  %v1140 = vunpack.c.h.b16 %v1038
  %v1141 = vunpack.c.l.b16 %v1039
  %v1142 = vunpack.c.h.b16 %v1039
  %v1143 = vunpack.c.l.b16 %v1040
  %v1144 = vunpack.c.h.b16 %v1040
  %v1145 = vunpack.c.l.b16 %v1041
  %v1146 = vunpack.c.h.b16 %v1041
  %v1147 = vunpack.c.l.b16 %v1042
  %v1148 = vunpack.c.h.b16 %v1042
  %v1149 = vunpack.c.l.b16 %v1043
  %v1150 = vunpack.c.h.b16 %v1043
  %v1151 = vunpack.c.l.b16 %v1044
  %v1152 = vunpack.c.h.b16 %v1044
  %v1153 = vunpack.c.l.b16 %v1045
  %v1154 = vunpack.c.h.b16 %v1045
  %v1155 = vunpack.c.l.b16 %v1046
  %v1156 = vunpack.c.h.b16 %v1046
  %v1157 = vunpack.c.l.b16 %v1047
  %v1158 = vunpack.c.h.b16 %v1047
  %v1159 = vunpack.c.l.b16 %v1048
  %v1160 = vunpack.c.h.b16 %v1048
  %v1161 = vpack.c.b16 %v1131, %v1129
  %v1162 = vpack.c.b16 %v1132, %v1130
  %v1163 = vpack.c.b16 %v1135, %v1133
  %v1164 = vpack.c.b16 %v1136, %v1134
  %v1165 = vpack.c.b16 %v1139, %v1137
  %v1166 = vpack.c.b16 %v1140, %v1138
  %v1167 = vpack.c.b16 %v1143, %v1141
  %v1168 = vpack.c.b16 %v1144, %v1142
  %v1169 = vpack.c.b16 %v1147, %v1145
  %v1170 = vpack.c.b16 %v1148, %v1146
  %v1171 = vpack.c.b16 %v1151, %v1149
  %v1172 = vpack.c.b16 %v1152, %v1150
  %v1173 = vpack.c.b16 %v1155, %v1153
  %v1174 = vpack.c.b16 %v1156, %v1154
  %v1175 = vpack.c.b16 %v1159, %v1157
  %v1176 = vpack.c.b16 %v1160, %v1158
  %1193 = vmatprep.subr.bf16.mxu0 %v1050
  %1194 = vmatpush1.bf16.msra.mxu0 %v1049
  %1195 = vmatprep.subr.bf16.mxu0 %v1054
  %1196 = vmatpush1.bf16.msra.mxu0 %v1053
  %1197 = vmatprep.subr.bf16.mxu0 %v1058
  %1198 = vmatpush1.bf16.msra.mxu0 %v1057
  %1199 = vmatprep.subr.bf16.mxu0 %v1062
  %1200 = vmatpush1.bf16.msra.mxu0 %v1061
  %1201 = vmatprep.subr.bf16.mxu0 %v1066
  %1202 = vmatpush1.bf16.msra.mxu0 %v1065
  %1203 = vmatprep.subr.bf16.mxu0 %v1070
  %1204 = vmatpush1.bf16.msra.mxu0 %v1069
  %1205 = vmatprep.subr.bf16.mxu0 %v1074
  %1206 = vmatpush1.bf16.msra.mxu0 %v1073
  %1207 = vmatprep.subr.bf16.mxu0 %v1078
  %1208 = vmatpush1.bf16.msra.mxu0 %v1077
  %1209 = vmatprep.subr.bf16.mxu0 %v1082
  %1210 = vmatpush1.bf16.msra.mxu0 %v1081
  %1211 = vmatprep.subr.bf16.mxu0 %v1086
  %1212 = vmatpush1.bf16.msra.mxu0 %v1085
  %1213 = vmatprep.subr.bf16.mxu0 %v1090
  %1214 = vmatpush1.bf16.msra.mxu0 %v1089
  %1215 = vmatprep.subr.bf16.mxu0 %v1094
  %1216 = vmatpush1.bf16.msra.mxu0 %v1093
  %1217 = vmatprep.subr.bf16.mxu0 %v1098
  %1218 = vmatpush1.bf16.msra.mxu0 %v1097
  %1219 = vmatprep.subr.bf16.mxu0 %v1102
  %1220 = vmatpush1.bf16.msra.mxu0 %v1101
  %1221 = vmatprep.subr.bf16.mxu0 %v1106
  %1222 = vmatpush1.bf16.msra.mxu0 %v1105
  %1223 = vmatprep.subr.bf16.mxu0 %v1110
  %1224 = vmatpush1.bf16.msra.mxu0 %v1109
  %1225 = vmatprep.mubr.bf16.mxu0 %v1162
  %1226 = vmatmul.mubr.bf16.gmra.mrb[0].mxu0 %v1161
  %v1227 = vpop.f32.mrb[0].mxu0
  %v1228 = vadd.f32 0.0, %v1227
  %v1229 = vpop.f32.mrb[0].mxu0
  %v1230 = vadd.f32 0.0, %v1229
  %v1231 = vpop.f32.mrb[0].mxu0
  %v1232 = vadd.f32 0.0, %v1231
  %v1233 = vpop.f32.mrb[0].mxu0
  %v1234 = vadd.f32 0.0, %v1233
  %1235 = vmatprep.mubr.bf16.mxu0 %v1164
  %1236 = vmatmul.mubr.bf16.gmra.mrb[0].mxu0 %v1163
  %v1237 = vpop.f32.mrb[0].mxu0
  %v1238 = vadd.f32 0.0, %v1237
  %v1239 = vpop.f32.mrb[0].mxu0
  %v1240 = vadd.f32 0.0, %v1239
  %v1241 = vpop.f32.mrb[0].mxu0
  %v1242 = vadd.f32 0.0, %v1241
  %v1243 = vpop.f32.mrb[0].mxu0
  %v1244 = vadd.f32 0.0, %v1243
  %1245 = vmatprep.mubr.bf16.mxu0 %v1166
  %1246 = vmatmul.mubr.bf16.gmra.mrb[0].mxu0 %v1165
  %v1247 = vpop.f32.mrb[0].mxu0
  %v1248 = vadd.f32 0.0, %v1247
  %v1249 = vpop.f32.mrb[0].mxu0
  %v1250 = vadd.f32 0.0, %v1249
  %v1251 = vpop.f32.mrb[0].mxu0
  %v1252 = vadd.f32 0.0, %v1251
  %v1253 = vpop.f32.mrb[0].mxu0
  %v1254 = vadd.f32 0.0, %v1253
  %1255 = vmatprep.mubr.bf16.mxu0 %v1168
  %1256 = vmatmul.mubr.bf16.gmra.mrb[0].mxu0 %v1167
  %v1257 = vpop.f32.mrb[0].mxu0
  %v1258 = vadd.f32 0.0, %v1257
  %v1259 = vpop.f32.mrb[0].mxu0
  %v1260 = vadd.f32 0.0, %v1259
  %v1261 = vpop.f32.mrb[0].mxu0
  %v1262 = vadd.f32 0.0, %v1261
  %v1263 = vpop.f32.mrb[0].mxu0
  %v1264 = vadd.f32 0.0, %v1263
  %1265 = vmatprep.mubr.bf16.mxu0 %v1170
  %1266 = vmatmul.mubr.bf16.gmra.mrb[0].mxu0 %v1169
  %v1267 = vpop.f32.mrb[0].mxu0
  %v1268 = vadd.f32 0.0, %v1267
  %v1269 = vpop.f32.mrb[0].mxu0
  %v1270 = vadd.f32 0.0, %v1269
  %v1271 = vpop.f32.mrb[0].mxu0
  %v1272 = vadd.f32 0.0, %v1271
  %v1273 = vpop.f32.mrb[0].mxu0
  %v1274 = vadd.f32 0.0, %v1273
  %1275 = vmatprep.mubr.bf16.mxu0 %v1172
  %1276 = vmatmul.mubr.bf16.gmra.mrb[0].mxu0 %v1171
  %v1277 = vpop.f32.mrb[0].mxu0
  %v1278 = vadd.f32 0.0, %v1277
  %v1279 = vpop.f32.mrb[0].mxu0
  %v1280 = vadd.f32 0.0, %v1279
  %v1281 = vpop.f32.mrb[0].mxu0
  %v1282 = vadd.f32 0.0, %v1281
  %v1283 = vpop.f32.mrb[0].mxu0
  %v1284 = vadd.f32 0.0, %v1283
  %1285 = vmatprep.mubr.bf16.mxu0 %v1174
  %1286 = vmatmul.mubr.bf16.gmra.mrb[0].mxu0 %v1173
  %v1287 = vpop.f32.mrb[0].mxu0
  %v1288 = vadd.f32 0.0, %v1287
  %v1289 = vpop.f32.mrb[0].mxu0
  %v1290 = vadd.f32 0.0, %v1289
  %v1291 = vpop.f32.mrb[0].mxu0
  %v1292 = vadd.f32 0.0, %v1291
  %v1293 = vpop.f32.mrb[0].mxu0
  %v1294 = vadd.f32 0.0, %v1293
  %1295 = vmatprep.mubr.bf16.mxu0 %v1176
  %1296 = vmatmul.mubr.bf16.gmra.mrb[0].mxu0 %v1175
  %v1297 = vpop.f32.mrb[0].mxu0
  %v1298 = vadd.f32 0.0, %v1297
  %v1299 = vpop.f32.mrb[0].mxu0
  %v1300 = vadd.f32 0.0, %v1299
  %v1301 = vpop.f32.mrb[0].mxu0
  %v1302 = vadd.f32 0.0, %v1301
  %v1303 = vpop.f32.mrb[0].mxu0
  %v1304 = vadd.f32 0.0, %v1303
  %1305 = vdwg.mxu0
  %1306 = vmatprep.subr.bf16.mxu0 %v1052
  %1307 = vmatpush1.bf16.msra.mxu0 %v1051
  %1308 = vmatprep.subr.bf16.mxu0 %v1056
  %1309 = vmatpush1.bf16.msra.mxu0 %v1055
  %1310 = vmatprep.subr.bf16.mxu0 %v1060
  %1311 = vmatpush1.bf16.msra.mxu0 %v1059
  %1312 = vmatprep.subr.bf16.mxu0 %v1064
  %1313 = vmatpush1.bf16.msra.mxu0 %v1063
  %1314 = vmatprep.subr.bf16.mxu0 %v1068
  %1315 = vmatpush1.bf16.msra.mxu0 %v1067
  %1316 = vmatprep.subr.bf16.mxu0 %v1072
  %1317 = vmatpush1.bf16.msra.mxu0 %v1071
  %1318 = vmatprep.subr.bf16.mxu0 %v1076
  %1319 = vmatpush1.bf16.msra.mxu0 %v1075
  %1320 = vmatprep.subr.bf16.mxu0 %v1080
  %1321 = vmatpush1.bf16.msra.mxu0 %v1079
  %1322 = vmatprep.subr.bf16.mxu0 %v1084
  %1323 = vmatpush1.bf16.msra.mxu0 %v1083
  %1324 = vmatprep.subr.bf16.mxu0 %v1088
  %1325 = vmatpush1.bf16.msra.mxu0 %v1087
  %1326 = vmatprep.subr.bf16.mxu0 %v1092
  %1327 = vmatpush1.bf16.msra.mxu0 %v1091
  %1328 = vmatprep.subr.bf16.mxu0 %v1096
  %1329 = vmatpush1.bf16.msra.mxu0 %v1095
  %1330 = vmatprep.subr.bf16.mxu0 %v1100
  %1331 = vmatpush1.bf16.msra.mxu0 %v1099
  %1332 = vmatprep.subr.bf16.mxu0 %v1104
  %1333 = vmatpush1.bf16.msra.mxu0 %v1103
  %1334 = vmatprep.subr.bf16.mxu0 %v1108
  %1335 = vmatpush1.bf16.msra.mxu0 %v1107
  %1336 = vmatprep.subr.bf16.mxu0 %v1112
  %1337 = vmatpush1.bf16.msra.mxu0 %v1111
  %1338 = vmatprep.mubr.bf16.mxu0 %v1162
  %1339 = vmatmul.mubr.bf16.gmra.mrb[0].mxu0 %v1161
  %v1340 = vpop.f32.mrb[0].mxu0
  %v1341 = vadd.f32 0.0, %v1340
  %v1342 = vpop.f32.mrb[0].mxu0
  %v1343 = vadd.f32 0.0, %v1342
  %v1344 = vpop.f32.mrb[0].mxu0
  %v1345 = vadd.f32 0.0, %v1344
  %v1346 = vpop.f32.mrb[0].mxu0
  %v1347 = vadd.f32 0.0, %v1346
  %1348 = vmatprep.mubr.bf16.mxu0 %v1164
  %1349 = vmatmul.mubr.bf16.gmra.mrb[0].mxu0 %v1163
  %v1350 = vpop.f32.mrb[0].mxu0
  %v1351 = vadd.f32 0.0, %v1350
  %v1352 = vpop.f32.mrb[0].mxu0
  %v1353 = vadd.f32 0.0, %v1352
  %v1354 = vpop.f32.mrb[0].mxu0
  %v1355 = vadd.f32 0.0, %v1354
  %v1356 = vpop.f32.mrb[0].mxu0
  %v1357 = vadd.f32 0.0, %v1356
  %1358 = vmatprep.mubr.bf16.mxu0 %v1166
  %1359 = vmatmul.mubr.bf16.gmra.mrb[0].mxu0 %v1165
  %v1360 = vpop.f32.mrb[0].mxu0
  %v1361 = vadd.f32 0.0, %v1360
  %v1362 = vpop.f32.mrb[0].mxu0
  %v1363 = vadd.f32 0.0, %v1362
  %v1364 = vpop.f32.mrb[0].mxu0
  %v1365 = vadd.f32 0.0, %v1364
  %v1366 = vpop.f32.mrb[0].mxu0
  %v1367 = vadd.f32 0.0, %v1366
  %1368 = vmatprep.mubr.bf16.mxu0 %v1168
  %1369 = vmatmul.mubr.bf16.gmra.mrb[0].mxu0 %v1167
  %v1370 = vpop.f32.mrb[0].mxu0
  %v1371 = vadd.f32 0.0, %v1370
  %v1372 = vpop.f32.mrb[0].mxu0
  %v1373 = vadd.f32 0.0, %v1372
  %v1374 = vpop.f32.mrb[0].mxu0
  %v1375 = vadd.f32 0.0, %v1374
  %v1376 = vpop.f32.mrb[0].mxu0
  %v1377 = vadd.f32 0.0, %v1376
  %1378 = vmatprep.mubr.bf16.mxu0 %v1170
  %1379 = vmatmul.mubr.bf16.gmra.mrb[0].mxu0 %v1169
  %v1380 = vpop.f32.mrb[0].mxu0
  %v1381 = vadd.f32 0.0, %v1380
  %v1382 = vpop.f32.mrb[0].mxu0
  %v1383 = vadd.f32 0.0, %v1382
  %v1384 = vpop.f32.mrb[0].mxu0
  %v1385 = vadd.f32 0.0, %v1384
  %v1386 = vpop.f32.mrb[0].mxu0
  %v1387 = vadd.f32 0.0, %v1386
  %1388 = vmatprep.mubr.bf16.mxu0 %v1172
  %1389 = vmatmul.mubr.bf16.gmra.mrb[0].mxu0 %v1171
  %v1390 = vpop.f32.mrb[0].mxu0
  %v1391 = vadd.f32 0.0, %v1390
  %v1392 = vpop.f32.mrb[0].mxu0
  %v1393 = vadd.f32 0.0, %v1392
  %v1394 = vpop.f32.mrb[0].mxu0
  %v1395 = vadd.f32 0.0, %v1394
  %v1396 = vpop.f32.mrb[0].mxu0
  %v1397 = vadd.f32 0.0, %v1396
  %1398 = vmatprep.mubr.bf16.mxu0 %v1174
  %1399 = vmatmul.mubr.bf16.gmra.mrb[0].mxu0 %v1173
  %v1400 = vpop.f32.mrb[0].mxu0
  %v1401 = vadd.f32 0.0, %v1400
  %v1402 = vpop.f32.mrb[0].mxu0
  %v1403 = vadd.f32 0.0, %v1402
  %v1404 = vpop.f32.mrb[0].mxu0
  %v1405 = vadd.f32 0.0, %v1404
  %v1406 = vpop.f32.mrb[0].mxu0
  %v1407 = vadd.f32 0.0, %v1406
  %1408 = vmatprep.mubr.bf16.mxu0 %v1176
  %1409 = vmatmul.mubr.bf16.gmra.mrb[0].mxu0 %v1175
  %v1410 = vpop.f32.mrb[0].mxu0
  %v1411 = vadd.f32 0.0, %v1410
  %v1412 = vpop.f32.mrb[0].mxu0
  %v1413 = vadd.f32 0.0, %v1412
  %v1414 = vpop.f32.mrb[0].mxu0
  %v1415 = vadd.f32 0.0, %v1414
  %v1416 = vpop.f32.mrb[0].mxu0
  %v1417 = vadd.f32 0.0, %v1416
  %1418 = vdwg.mxu0
  %v1419 = vadd.f32 %v969, %v1228
  %v1420 = vadd.f32 %v970, %v1230
  %v1421 = vadd.f32 %v971, %v1341
  %v1422 = vadd.f32 %v972, %v1343
  %v1423 = vadd.f32 %v973, %v1232
  %v1424 = vadd.f32 %v974, %v1234
  %v1425 = vadd.f32 %v975, %v1345
  %v1426 = vadd.f32 %v976, %v1347
  %v1427 = vadd.f32 %v977, %v1238
  %v1428 = vadd.f32 %v978, %v1240
  %v1429 = vadd.f32 %v979, %v1351
  %v1430 = vadd.f32 %v980, %v1353
  %v1431 = vadd.f32 %v981, %v1242
  %v1432 = vadd.f32 %v982, %v1244
  %v1433 = vadd.f32 %v983, %v1355
  %v1434 = vadd.f32 %v984, %v1357
  %v1435 = vadd.f32 %v985, %v1248
  %v1436 = vadd.f32 %v986, %v1250
  %v1437 = vadd.f32 %v987, %v1361
  %v1438 = vadd.f32 %v988, %v1363
  %v1439 = vadd.f32 %v989, %v1252
  %v1440 = vadd.f32 %v990, %v1254
  %v1441 = vadd.f32 %v991, %v1365
  %v1442 = vadd.f32 %v992, %v1367
  %v1443 = vadd.f32 %v993, %v1258
  %v1444 = vadd.f32 %v994, %v1260
  %v1445 = vadd.f32 %v995, %v1371
  %v1446 = vadd.f32 %v996, %v1373
  %v1447 = vadd.f32 %v997, %v1262
  %v1448 = vadd.f32 %v998, %v1264
  %v1449 = vadd.f32 %v999, %v1375
  %v1450 = vadd.f32 %v1000, %v1377
  %v1451 = vadd.f32 %v1001, %v1268
  %v1452 = vadd.f32 %v1002, %v1270
  %v1453 = vadd.f32 %v1003, %v1381
  %v1454 = vadd.f32 %v1004, %v1383
  %v1455 = vadd.f32 %v1005, %v1272
  %v1456 = vadd.f32 %v1006, %v1274
  %v1457 = vadd.f32 %v1007, %v1385
  %v1458 = vadd.f32 %v1008, %v1387
  %v1459 = vadd.f32 %v1009, %v1278
  %v1460 = vadd.f32 %v1010, %v1280
  %v1461 = vadd.f32 %v1011, %v1391
  %v1462 = vadd.f32 %v1012, %v1393
  %v1463 = vadd.f32 %v1013, %v1282
  %v1464 = vadd.f32 %v1014, %v1284
  %v1465 = vadd.f32 %v1015, %v1395
  %v1466 = vadd.f32 %v1016, %v1397
  %v1467 = vadd.f32 %v1017, %v1288
  %v1468 = vadd.f32 %v1018, %v1290
  %v1469 = vadd.f32 %v1019, %v1401
  %v1470 = vadd.f32 %v1020, %v1403
  %v1471 = vadd.f32 %v1021, %v1292
  %v1472 = vadd.f32 %v1022, %v1294
  %v1473 = vadd.f32 %v1023, %v1405
  %v1474 = vadd.f32 %v1024, %v1407
  %v1475 = vadd.f32 %v1025, %v1298
  %v1476 = vadd.f32 %v1026, %v1300
  %v1477 = vadd.f32 %v1027, %v1411
  %v1478 = vadd.f32 %v1028, %v1413
  %v1479 = vadd.f32 %v1029, %v1302
  %v1480 = vadd.f32 %v1030, %v1304
  %v1481 = vadd.f32 %v1031, %v1415
  %v1482 = vadd.f32 %v1032, %v1417
  %1483 = vst [vmem:[#allocation3] sm:$0xff] %v1419
  %1484 = vst [vmem:[#allocation3 + $0x8] sm:$0xff] %v1420
  %1485 = vst [vmem:[#allocation3 + $0x10] sm:$0xff] %v1421
  %1486 = vst [vmem:[#allocation3 + $0x18] sm:$0xff] %v1422
  %1487 = vst [vmem:[#allocation3 + $0x20] sm:$0xff] %v1423
  %1488 = vst [vmem:[#allocation3 + $0x28] sm:$0xff] %v1424
  %1489 = vst [vmem:[#allocation3 + $0x30] sm:$0xff] %v1425
  %1490 = vst [vmem:[#allocation3 + $0x38] sm:$0xff] %v1426
  %1491 = vst [vmem:[#allocation3 + $0x40] sm:$0xff] %v1427
  %1492 = vst [vmem:[#allocation3 + $0x48] sm:$0xff] %v1428
  %1493 = vst [vmem:[#allocation3 + $0x50] sm:$0xff] %v1429
  %1494 = vst [vmem:[#allocation3 + $0x58] sm:$0xff] %v1430
  %1495 = vst [vmem:[#allocation3 + $0x60] sm:$0xff] %v1431
  %1496 = vst [vmem:[#allocation3 + $0x68] sm:$0xff] %v1432
  %1497 = vst [vmem:[#allocation3 + $0x70] sm:$0xff] %v1433
  %1498 = vst [vmem:[#allocation3 + $0x78] sm:$0xff] %v1434
  %1499 = vst [vmem:[#allocation3 + $0x80] sm:$0xff] %v1435
  %1500 = vst [vmem:[#allocation3 + $0x88] sm:$0xff] %v1436
  %1501 = vst [vmem:[#allocation3 + $0x90] sm:$0xff] %v1437
  %1502 = vst [vmem:[#allocation3 + $0x98] sm:$0xff] %v1438
  %1503 = vst [vmem:[#allocation3 + $0xa0] sm:$0xff] %v1439
  %1504 = vst [vmem:[#allocation3 + $0xa8] sm:$0xff] %v1440
  %1505 = vst [vmem:[#allocation3 + $0xb0] sm:$0xff] %v1441
  %1506 = vst [vmem:[#allocation3 + $0xb8] sm:$0xff] %v1442
  %1507 = vst [vmem:[#allocation3 + $0xc0] sm:$0xff] %v1443
  %1508 = vst [vmem:[#allocation3 + $0xc8] sm:$0xff] %v1444
  %1509 = vst [vmem:[#allocation3 + $0xd0] sm:$0xff] %v1445
  %1510 = vst [vmem:[#allocation3 + $0xd8] sm:$0xff] %v1446
  %1511 = vst [vmem:[#allocation3 + $0xe0] sm:$0xff] %v1447
  %1512 = vst [vmem:[#allocation3 + $0xe8] sm:$0xff] %v1448
  %1513 = vst [vmem:[#allocation3 + $0xf0] sm:$0xff] %v1449
  %1514 = vst [vmem:[#allocation3 + $0xf8] sm:$0xff] %v1450
  %1515 = vst [vmem:[#allocation3 + $0x100] sm:$0xff] %v1451
  %1516 = vst [vmem:[#allocation3 + $0x108] sm:$0xff] %v1452
  %1517 = vst [vmem:[#allocation3 + $0x110] sm:$0xff] %v1453
  %1518 = vst [vmem:[#allocation3 + $0x118] sm:$0xff] %v1454
  %1519 = vst [vmem:[#allocation3 + $0x120] sm:$0xff] %v1455
  %1520 = vst [vmem:[#allocation3 + $0x128] sm:$0xff] %v1456
  %1521 = vst [vmem:[#allocation3 + $0x130] sm:$0xff] %v1457
  %1522 = vst [vmem:[#allocation3 + $0x138] sm:$0xff] %v1458
  %1523 = vst [vmem:[#allocation3 + $0x140] sm:$0xff] %v1459
  %1524 = vst [vmem:[#allocation3 + $0x148] sm:$0xff] %v1460
  %1525 = vst [vmem:[#allocation3 + $0x150] sm:$0xff] %v1461
  %1526 = vst [vmem:[#allocation3 + $0x158] sm:$0xff] %v1462
  %1527 = vst [vmem:[#allocation3 + $0x160] sm:$0xff] %v1463
  %1528 = vst [vmem:[#allocation3 + $0x168] sm:$0xff] %v1464
  %1529 = vst [vmem:[#allocation3 + $0x170] sm:$0xff] %v1465
  %1530 = vst [vmem:[#allocation3 + $0x178] sm:$0xff] %v1466
  %1531 = vst [vmem:[#allocation3 + $0x180] sm:$0xff] %v1467
  %1532 = vst [vmem:[#allocation3 + $0x188] sm:$0xff] %v1468
  %1533 = vst [vmem:[#allocation3 + $0x190] sm:$0xff] %v1469
  %1534 = vst [vmem:[#allocation3 + $0x198] sm:$0xff] %v1470
  %1535 = vst [vmem:[#allocation3 + $0x1a0] sm:$0xff] %v1471
  %1536 = vst [vmem:[#allocation3 + $0x1a8] sm:$0xff] %v1472
  %1537 = vst [vmem:[#allocation3 + $0x1b0] sm:$0xff] %v1473
  %1538 = vst [vmem:[#allocation3 + $0x1b8] sm:$0xff] %v1474
  %1539 = vst [vmem:[#allocation3 + $0x1c0] sm:$0xff] %v1475
  %1540 = vst [vmem:[#allocation3 + $0x1c8] sm:$0xff] %v1476
  %1541 = vst [vmem:[#allocation3 + $0x1d0] sm:$0xff] %v1477
  %1542 = vst [vmem:[#allocation3 + $0x1d8] sm:$0xff] %v1478
  %1543 = vst [vmem:[#allocation3 + $0x1e0] sm:$0xff] %v1479
  %1544 = vst [vmem:[#allocation3 + $0x1e8] sm:$0xff] %v1480
  %1545 = vst [vmem:[#allocation3 + $0x1f0] sm:$0xff] %v1481
  %1546 = vst [vmem:[#allocation3 + $0x1f8] sm:$0xff] %v1482
  // Predicated region
  $region26: #{forward.5} parent=0 // pred_check
    %p1547 = pneg %p901
  $region27: #{forward.5} parent=0 // pred_check_branch
    %1549 = sbr.rel (%p1547) target = $region29
  $region28: #{forward.5} parent=0 // pred_region
    %v1550 = vld [vmem:[#allocation3] sm:$0xff]
    %v1551 = vld [vmem:[#allocation3 + $0x8] sm:$0xff]
    %v1552 = vld [vmem:[#allocation3 + $0x10] sm:$0xff]
    %v1553 = vld [vmem:[#allocation3 + $0x18] sm:$0xff]
    %v1554 = vld [vmem:[#allocation3 + $0x20] sm:$0xff]
    %v1555 = vld [vmem:[#allocation3 + $0x28] sm:$0xff]
    %v1556 = vld [vmem:[#allocation3 + $0x30] sm:$0xff]
    %v1557 = vld [vmem:[#allocation3 + $0x38] sm:$0xff]
    %v1558 = vld [vmem:[#allocation3 + $0x40] sm:$0xff]
    %v1559 = vld [vmem:[#allocation3 + $0x48] sm:$0xff]
    %v1560 = vld [vmem:[#allocation3 + $0x50] sm:$0xff]
    %v1561 = vld [vmem:[#allocation3 + $0x58] sm:$0xff]
    %v1562 = vld [vmem:[#allocation3 + $0x60] sm:$0xff]
    %v1563 = vld [vmem:[#allocation3 + $0x68] sm:$0xff]
    %v1564 = vld [vmem:[#allocation3 + $0x70] sm:$0xff]
    %v1565 = vld [vmem:[#allocation3 + $0x78] sm:$0xff]
    %v1566 = vld [vmem:[#allocation3 + $0x80] sm:$0xff]
    %v1567 = vld [vmem:[#allocation3 + $0x88] sm:$0xff]
    %v1568 = vld [vmem:[#allocation3 + $0x90] sm:$0xff]
    %v1569 = vld [vmem:[#allocation3 + $0x98] sm:$0xff]
    %v1570 = vld [vmem:[#allocation3 + $0xa0] sm:$0xff]
    %v1571 = vld [vmem:[#allocation3 + $0xa8] sm:$0xff]
    %v1572 = vld [vmem:[#allocation3 + $0xb0] sm:$0xff]
    %v1573 = vld [vmem:[#allocation3 + $0xb8] sm:$0xff]
    %v1574 = vld [vmem:[#allocation3 + $0xc0] sm:$0xff]
    %v1575 = vld [vmem:[#allocation3 + $0xc8] sm:$0xff]
    %v1576 = vld [vmem:[#allocation3 + $0xd0] sm:$0xff]
    %v1577 = vld [vmem:[#allocation3 + $0xd8] sm:$0xff]
    %v1578 = vld [vmem:[#allocation3 + $0xe0] sm:$0xff]
    %v1579 = vld [vmem:[#allocation3 + $0xe8] sm:$0xff]
    %v1580 = vld [vmem:[#allocation3 + $0xf0] sm:$0xff]
    %v1581 = vld [vmem:[#allocation3 + $0xf8] sm:$0xff]
    %v1582 = vld [vmem:[#allocation3 + $0x100] sm:$0xff]
    %v1583 = vld [vmem:[#allocation3 + $0x108] sm:$0xff]
    %v1584 = vld [vmem:[#allocation3 + $0x110] sm:$0xff]
    %v1585 = vld [vmem:[#allocation3 + $0x118] sm:$0xff]
    %v1586 = vld [vmem:[#allocation3 + $0x120] sm:$0xff]
    %v1587 = vld [vmem:[#allocation3 + $0x128] sm:$0xff]
    %v1588 = vld [vmem:[#allocation3 + $0x130] sm:$0xff]
    %v1589 = vld [vmem:[#allocation3 + $0x138] sm:$0xff]
    %v1590 = vld [vmem:[#allocation3 + $0x140] sm:$0xff]
    %v1591 = vld [vmem:[#allocation3 + $0x148] sm:$0xff]
    %v1592 = vld [vmem:[#allocation3 + $0x150] sm:$0xff]
    %v1593 = vld [vmem:[#allocation3 + $0x158] sm:$0xff]
    %v1594 = vld [vmem:[#allocation3 + $0x160] sm:$0xff]
    %v1595 = vld [vmem:[#allocation3 + $0x168] sm:$0xff]
    %v1596 = vld [vmem:[#allocation3 + $0x170] sm:$0xff]
    %v1597 = vld [vmem:[#allocation3 + $0x178] sm:$0xff]
    %v1598 = vld [vmem:[#allocation3 + $0x180] sm:$0xff]
    %v1599 = vld [vmem:[#allocation3 + $0x188] sm:$0xff]
    %v1600 = vld [vmem:[#allocation3 + $0x190] sm:$0xff]
    %v1601 = vld [vmem:[#allocation3 + $0x198] sm:$0xff]
    %v1602 = vld [vmem:[#allocation3 + $0x1a0] sm:$0xff]
    %v1603 = vld [vmem:[#allocation3 + $0x1a8] sm:$0xff]
    %v1604 = vld [vmem:[#allocation3 + $0x1b0] sm:$0xff]
    %v1605 = vld [vmem:[#allocation3 + $0x1b8] sm:$0xff]
    %v1606 = vld [vmem:[#allocation3 + $0x1c0] sm:$0xff]
    %v1607 = vld [vmem:[#allocation3 + $0x1c8] sm:$0xff]
    %v1608 = vld [vmem:[#allocation3 + $0x1d0] sm:$0xff]
    %v1609 = vld [vmem:[#allocation3 + $0x1d8] sm:$0xff]
    %v1610 = vld [vmem:[#allocation3 + $0x1e0] sm:$0xff]
    %v1611 = vld [vmem:[#allocation3 + $0x1e8] sm:$0xff]
    %v1612 = vld [vmem:[#allocation3 + $0x1f0] sm:$0xff]
    %v1613 = vld [vmem:[#allocation3 + $0x1f8] sm:$0xff]
    %v1614 = vpack.c.bf16 %v1554, %v1550
    %v1615 = vpack.c.bf16 %v1555, %v1551
    %v1616 = vpack.c.bf16 %v1556, %v1552
    %v1617 = vpack.c.bf16 %v1557, %v1553
    %v1618 = vpack.c.bf16 %v1562, %v1558
    %v1619 = vpack.c.bf16 %v1563, %v1559
    %v1620 = vpack.c.bf16 %v1564, %v1560
    %v1621 = vpack.c.bf16 %v1565, %v1561
    %v1622 = vpack.c.bf16 %v1570, %v1566
    %v1623 = vpack.c.bf16 %v1571, %v1567
    %v1624 = vpack.c.bf16 %v1572, %v1568
    %v1625 = vpack.c.bf16 %v1573, %v1569
    %v1626 = vpack.c.bf16 %v1578, %v1574
    %v1627 = vpack.c.bf16 %v1579, %v1575
    %v1628 = vpack.c.bf16 %v1580, %v1576
    %v1629 = vpack.c.bf16 %v1581, %v1577
    %v1630 = vpack.c.bf16 %v1586, %v1582
    %v1631 = vpack.c.bf16 %v1587, %v1583
    %v1632 = vpack.c.bf16 %v1588, %v1584
    %v1633 = vpack.c.bf16 %v1589, %v1585
    %v1634 = vpack.c.bf16 %v1594, %v1590
    %v1635 = vpack.c.bf16 %v1595, %v1591
    %v1636 = vpack.c.bf16 %v1596, %v1592
    %v1637 = vpack.c.bf16 %v1597, %v1593
    %v1638 = vpack.c.bf16 %v1602, %v1598
    %v1639 = vpack.c.bf16 %v1603, %v1599
    %v1640 = vpack.c.bf16 %v1604, %v1600
    %v1641 = vpack.c.bf16 %v1605, %v1601
    %v1642 = vpack.c.bf16 %v1610, %v1606
    %v1643 = vpack.c.bf16 %v1611, %v1607
    %v1644 = vpack.c.bf16 %v1612, %v1608
    %v1645 = vpack.c.bf16 %v1613, %v1609
    %v1678 = vunpack.c.l.b16 %v1614
    %v1679 = vunpack.c.l.b16 %v1615
    %v1680 = vunpack.c.l.b16 %v1616
    %v1681 = vunpack.c.l.b16 %v1617
    %v1682 = vunpack.c.h.b16 %v1614
    %v1683 = vunpack.c.h.b16 %v1615
    %v1684 = vunpack.c.h.b16 %v1616
    %v1685 = vunpack.c.h.b16 %v1617
    %v1686 = vunpack.c.l.b16 %v1618
    %v1687 = vunpack.c.l.b16 %v1619
    %v1688 = vunpack.c.l.b16 %v1620
    %v1689 = vunpack.c.l.b16 %v1621
    %v1690 = vunpack.c.h.b16 %v1618
    %v1691 = vunpack.c.h.b16 %v1619
    %v1692 = vunpack.c.h.b16 %v1620
    %v1693 = vunpack.c.h.b16 %v1621
    %v1694 = vunpack.c.l.b16 %v1622
    %v1695 = vunpack.c.l.b16 %v1623
    %v1696 = vunpack.c.l.b16 %v1624
    %v1697 = vunpack.c.l.b16 %v1625
    %v1698 = vunpack.c.h.b16 %v1622
    %v1699 = vunpack.c.h.b16 %v1623
    %v1700 = vunpack.c.h.b16 %v1624
    %v1701 = vunpack.c.h.b16 %v1625
    %v1702 = vunpack.c.l.b16 %v1626
    %v1703 = vunpack.c.l.b16 %v1627
    %v1704 = vunpack.c.l.b16 %v1628
    %v1705 = vunpack.c.l.b16 %v1629
    %v1706 = vunpack.c.h.b16 %v1626
    %v1707 = vunpack.c.h.b16 %v1627
    %v1708 = vunpack.c.h.b16 %v1628
    %v1709 = vunpack.c.h.b16 %v1629
    %v1710 = vunpack.c.l.b16 %v1630
    %v1711 = vunpack.c.l.b16 %v1631
    %v1712 = vunpack.c.l.b16 %v1632
    %v1713 = vunpack.c.l.b16 %v1633
    %v1714 = vunpack.c.h.b16 %v1630
    %v1715 = vunpack.c.h.b16 %v1631
    %v1716 = vunpack.c.h.b16 %v1632
    %v1717 = vunpack.c.h.b16 %v1633
    %v1718 = vunpack.c.l.b16 %v1634
    %v1719 = vunpack.c.l.b16 %v1635
    %v1720 = vunpack.c.l.b16 %v1636
    %v1721 = vunpack.c.l.b16 %v1637
    %v1722 = vunpack.c.h.b16 %v1634
    %v1723 = vunpack.c.h.b16 %v1635
    %v1724 = vunpack.c.h.b16 %v1636
    %v1725 = vunpack.c.h.b16 %v1637
    %v1726 = vunpack.c.l.b16 %v1638
    %v1727 = vunpack.c.l.b16 %v1639
    %v1728 = vunpack.c.l.b16 %v1640
    %v1729 = vunpack.c.l.b16 %v1641
    %v1730 = vunpack.c.h.b16 %v1638
    %v1731 = vunpack.c.h.b16 %v1639
    %v1732 = vunpack.c.h.b16 %v1640
    %v1733 = vunpack.c.h.b16 %v1641
    %v1734 = vunpack.c.l.b16 %v1642
    %v1735 = vunpack.c.l.b16 %v1643
    %v1736 = vunpack.c.l.b16 %v1644
    %v1737 = vunpack.c.l.b16 %v1645
    %v1738 = vunpack.c.h.b16 %v1642
    %v1739 = vunpack.c.h.b16 %v1643
    %v1740 = vunpack.c.h.b16 %v1644
    %v1741 = vunpack.c.h.b16 %v1645
    %v1742 = vpack.c.b16 %v1679, %v1678
    %v1743 = vpack.c.b16 %v1681, %v1680
    %v1744 = vpack.c.b16 %v1683, %v1682
    %v1745 = vpack.c.b16 %v1685, %v1684
    %v1746 = vpack.c.b16 %v1687, %v1686
    %v1747 = vpack.c.b16 %v1689, %v1688
    %v1748 = vpack.c.b16 %v1691, %v1690
    %v1749 = vpack.c.b16 %v1693, %v1692
    %v1750 = vpack.c.b16 %v1695, %v1694
    %v1751 = vpack.c.b16 %v1697, %v1696
    %v1752 = vpack.c.b16 %v1699, %v1698
    %v1753 = vpack.c.b16 %v1701, %v1700
    %v1754 = vpack.c.b16 %v1703, %v1702
    %v1755 = vpack.c.b16 %v1705, %v1704
    %v1756 = vpack.c.b16 %v1707, %v1706
    %v1757 = vpack.c.b16 %v1709, %v1708
    %v1758 = vpack.c.b16 %v1711, %v1710
    %v1759 = vpack.c.b16 %v1713, %v1712
    %v1760 = vpack.c.b16 %v1715, %v1714
    %v1761 = vpack.c.b16 %v1717, %v1716
    %v1762 = vpack.c.b16 %v1719, %v1718
    %v1763 = vpack.c.b16 %v1721, %v1720
    %v1764 = vpack.c.b16 %v1723, %v1722
    %v1765 = vpack.c.b16 %v1725, %v1724
    %v1766 = vpack.c.b16 %v1727, %v1726
    %v1767 = vpack.c.b16 %v1729, %v1728
    %v1768 = vpack.c.b16 %v1731, %v1730
    %v1769 = vpack.c.b16 %v1733, %v1732
    %v1770 = vpack.c.b16 %v1735, %v1734
    %v1771 = vpack.c.b16 %v1737, %v1736
    %v1772 = vpack.c.b16 %v1739, %v1738
    %v1773 = vpack.c.b16 %v1741, %v1740
    %1806 = vst [vmem:[%s4] sm:$0xff] %v1742
    %1807 = vst [vmem:[%s4 + $0x8] sm:$0xff] %v1743
    %1808 = vst [vmem:[%s4 + $0x10] sm:$0xff] %v1744
    %1809 = vst [vmem:[%s4 + $0x18] sm:$0xff] %v1745
    %1810 = vst [vmem:[%s4 + $0x20] sm:$0xff] %v1746
    %1811 = vst [vmem:[%s4 + $0x28] sm:$0xff] %v1747
    %1812 = vst [vmem:[%s4 + $0x30] sm:$0xff] %v1748
    %1813 = vst [vmem:[%s4 + $0x38] sm:$0xff] %v1749
    %1814 = vst [vmem:[%s4 + $0x40] sm:$0xff] %v1750
    %1815 = vst [vmem:[%s4 + $0x48] sm:$0xff] %v1751
    %1816 = vst [vmem:[%s4 + $0x50] sm:$0xff] %v1752
    %1817 = vst [vmem:[%s4 + $0x58] sm:$0xff] %v1753
    %1818 = vst [vmem:[%s4 + $0x60] sm:$0xff] %v1754
    %1819 = vst [vmem:[%s4 + $0x68] sm:$0xff] %v1755
    %1820 = vst [vmem:[%s4 + $0x70] sm:$0xff] %v1756
    %1821 = vst [vmem:[%s4 + $0x78] sm:$0xff] %v1757
    %1822 = vst [vmem:[%s4 + $0x80] sm:$0xff] %v1758
    %1823 = vst [vmem:[%s4 + $0x88] sm:$0xff] %v1759
    %1824 = vst [vmem:[%s4 + $0x90] sm:$0xff] %v1760
    %1825 = vst [vmem:[%s4 + $0x98] sm:$0xff] %v1761
    %1826 = vst [vmem:[%s4 + $0xa0] sm:$0xff] %v1762
    %1827 = vst [vmem:[%s4 + $0xa8] sm:$0xff] %v1763
    %1828 = vst [vmem:[%s4 + $0xb0] sm:$0xff] %v1764
    %1829 = vst [vmem:[%s4 + $0xb8] sm:$0xff] %v1765
    %1830 = vst [vmem:[%s4 + $0xc0] sm:$0xff] %v1766
    %1831 = vst [vmem:[%s4 + $0xc8] sm:$0xff] %v1767
    %1832 = vst [vmem:[%s4 + $0xd0] sm:$0xff] %v1768
    %1833 = vst [vmem:[%s4 + $0xd8] sm:$0xff] %v1769
    %1834 = vst [vmem:[%s4 + $0xe0] sm:$0xff] %v1770
    %1835 = vst [vmem:[%s4 + $0xe8] sm:$0xff] %v1771
    %1836 = vst [vmem:[%s4 + $0xf0] sm:$0xff] %v1772
    %1837 = vst [vmem:[%s4 + $0xf8] sm:$0xff] %v1773
  $region29: #{forward.5} parent=0 // pred_fallthru
    _
  // Predicated region
  $region30: #{forward.5} parent=0 // pred_check
    _
  $region31: #{forward.5} parent=0 // pred_check_branch
    %1839 = sbr.rel (0) target = $region33
  $region32: #{forward.5} parent=0 // pred_region
    _
  $region33: #{forward.5} parent=0 // pred_fallthru
    _
  // Predicated region
  $region34: #{forward.5} parent=0 // pred_check
    _
  $region35: #{forward.5} parent=0 // pred_check_branch
    %1841 = sbr.rel (0) target = $region37
  $region36: #{forward.5} parent=0 // pred_region
    _
  $region37: #{forward.5} parent=0 // pred_fallthru
    _

// kernel: forward.3
$region0: #{forward.3}
  #allocation0 [shape = 'u32[]', space=smem, size = 0x4, offset = 0x4, fixed_abs, tag = 'smem constant byte address 0x4 - core index']
  #allocation1 [shape = 'u32[144,128]{1,0:T(1,128)}', space=vmem, size = 0x12000, scoped, tag = 'internal scratch']
  #allocation2 [shape = 'bf16[256,512]{1,0:T(16,128)(2,1)}', space=vmem, size = 0x40000, scoped, tag = 'scratch operand']
  #allocation3 [shape = 'f32[128,512]{1,0:T(8,128)}', space=vmem, size = 0x40000, scoped, tag = 'scratch operand']
  %s0 = inlined_call_operand.vmem [shape: bf16[128,256], index: 0, kind: input, shape index: {}]
  %s1 = inlined_call_operand.vmem [shape: s8[128,512], index: 1, kind: input, shape index: {}]
  %s2 = inlined_call_operand.vmem [shape: bf16[1,2,512], index: 2, kind: input, shape index: {}]
  %s3 = inlined_call_operand.vmem [shape: bf16[1,2,512], index: 3, kind: input, shape index: {}]
  %s4 = inlined_call_operand.vmem [shape: bf16[128,512], index: 4, kind: output, shape index: {}]
  %s5 = sld [smem:[#allocation0]]
  $region38: #{forward.3} parent=0
    _
  %s7 = ssub.s32 1, %s5
  %s8 = scalar_select 0, %s7, %s5
  // Predicated region
  $region2: #{forward.3} parent=0 // pred_check
    _
  $region3: #{forward.3} parent=0 // pred_check_branch
    %10 = sbr.rel (0) target = $region5
  $region4: #{forward.3} parent=0 // pred_region
    _
  $region5: #{forward.3} parent=0 // pred_fallthru
    _
  // Predicated region
  $region6: #{forward.3} parent=0 // pred_check
    _
  $region7: #{forward.3} parent=0 // pred_check_branch
    %12 = sbr.rel (0) target = $region9
  $region8: #{forward.3} parent=0 // pred_region
    _
  $region9: #{forward.3} parent=0 // pred_fallthru
    _
  // Predicated region
  $region10: #{forward.3} parent=0 // pred_check
    _
  $region11: #{forward.3} parent=0 // pred_check_branch
    %14 = sbr.rel (0) target = $region13
  $region12: #{forward.3} parent=0 // pred_region
    _
  $region13: #{forward.3} parent=0 // pred_fallthru
    _
  // Predicated region
  $region14: #{forward.3} parent=0 // pred_check
    _
  $region15: #{forward.3} parent=0 // pred_check_branch
    %16 = sbr.rel (0) target = $region17
  $region16: #{forward.3} parent=0 // pred_region
    _
  $region17: #{forward.3} parent=0 // pred_fallthru
    _
  %p17 = scmp.eq.s32.totalorder 0, 0
  // Predicated region
  $region18: #{forward.3} parent=0 // pred_check
    %p18 = pneg %p17
  $region19: #{forward.3} parent=0 // pred_check_branch
    %20 = sbr.rel (%p18) target = $region21
  $region20: #{forward.3} parent=0 // pred_region
    %v21 = vld [vmem:[%s1] sm:$0xff]
    %v22 = vld [vmem:[%s1 + $0x8] sm:$0xff]
    %v23 = vld [vmem:[%s1 + $0x10] sm:$0xff]
    %v24 = vld [vmem:[%s1 + $0x18] sm:$0xff]
    %v25 = vld [vmem:[%s1 + $0x20] sm:$0xff]
    %v26 = vld [vmem:[%s1 + $0x28] sm:$0xff]
    %v27 = vld [vmem:[%s1 + $0x30] sm:$0xff]
    %v28 = vld [vmem:[%s1 + $0x38] sm:$0xff]
    %v29 = vunpack.c.0.s8 %v21
    %v30 = vunpack.c.0.s8 %v22
    %v31 = vunpack.c.0.s8 %v23
    %v32 = vunpack.c.0.s8 %v24
    %v33 = vunpack.c.1.s8 %v21
    %v34 = vunpack.c.1.s8 %v22
    %v35 = vunpack.c.1.s8 %v23
    %v36 = vunpack.c.1.s8 %v24
    %v37 = vunpack.c.2.s8 %v21
    %v38 = vunpack.c.2.s8 %v22
    %v39 = vunpack.c.2.s8 %v23
    %v40 = vunpack.c.2.s8 %v24
    %v41 = vunpack.c.3.s8 %v21
    %v42 = vunpack.c.3.s8 %v22
    %v43 = vunpack.c.3.s8 %v23
    %v44 = vunpack.c.3.s8 %v24
    %v45 = vunpack.c.0.s8 %v25
    %v46 = vunpack.c.0.s8 %v26
    %v47 = vunpack.c.0.s8 %v27
    %v48 = vunpack.c.0.s8 %v28
    %v49 = vunpack.c.1.s8 %v25
    %v50 = vunpack.c.1.s8 %v26
    %v51 = vunpack.c.1.s8 %v27
    %v52 = vunpack.c.1.s8 %v28
    %v53 = vunpack.c.2.s8 %v25
    %v54 = vunpack.c.2.s8 %v26
    %v55 = vunpack.c.2.s8 %v27
    %v56 = vunpack.c.2.s8 %v28
    %v57 = vunpack.c.3.s8 %v25
    %v58 = vunpack.c.3.s8 %v26
    %v59 = vunpack.c.3.s8 %v27
    %v60 = vunpack.c.3.s8 %v28
    %v61 = vld [vmem:[%s2] sm:$0xf]
    %v62 = vld [vmem:[%s3] sm:$0xf]
    %v63 = vand.u32 %v29, 15
    %v64 = vand.u32 %v30, 15
    %v65 = vand.u32 %v31, 15
    %v66 = vand.u32 %v32, 15
    %v67 = vand.u32 %v33, 15
    %v68 = vand.u32 %v34, 15
    %v69 = vand.u32 %v35, 15
    %v70 = vand.u32 %v36, 15
    %v71 = vand.u32 %v37, 15
    %v72 = vand.u32 %v38, 15
    %v73 = vand.u32 %v39, 15
    %v74 = vand.u32 %v40, 15
    %v75 = vand.u32 %v41, 15
    %v76 = vand.u32 %v42, 15
    %v77 = vand.u32 %v43, 15
    %v78 = vand.u32 %v44, 15
    %v79 = vand.u32 %v45, 15
    %v80 = vand.u32 %v46, 15
    %v81 = vand.u32 %v47, 15
    %v82 = vand.u32 %v48, 15
    %v83 = vand.u32 %v49, 15
    %v84 = vand.u32 %v50, 15
    %v85 = vand.u32 %v51, 15
    %v86 = vand.u32 %v52, 15
    %v87 = vand.u32 %v53, 15
    %v88 = vand.u32 %v54, 15
    %v89 = vand.u32 %v55, 15
    %v90 = vand.u32 %v56, 15
    %v91 = vand.u32 %v57, 15
    %v92 = vand.u32 %v58, 15
    %v93 = vand.u32 %v59, 15
    %v94 = vand.u32 %v60, 15
    %v95 = vcvt.s32.f32 %v63
    %v96 = vcvt.s32.f32 %v64
    %v97 = vcvt.s32.f32 %v65
    %v98 = vcvt.s32.f32 %v66
    %v99 = vcvt.s32.f32 %v67
    %v100 = vcvt.s32.f32 %v68
    %v101 = vcvt.s32.f32 %v69
    %v102 = vcvt.s32.f32 %v70
    %v103 = vcvt.s32.f32 %v71
    %v104 = vcvt.s32.f32 %v72
    %v105 = vcvt.s32.f32 %v73
    %v106 = vcvt.s32.f32 %v74
    %v107 = vcvt.s32.f32 %v75
    %v108 = vcvt.s32.f32 %v76
    %v109 = vcvt.s32.f32 %v77
    %v110 = vcvt.s32.f32 %v78
    %v111 = vcvt.s32.f32 %v79
    %v112 = vcvt.s32.f32 %v80
    %v113 = vcvt.s32.f32 %v81
    %v114 = vcvt.s32.f32 %v82
    %v115 = vcvt.s32.f32 %v83
    %v116 = vcvt.s32.f32 %v84
    %v117 = vcvt.s32.f32 %v85
    %v118 = vcvt.s32.f32 %v86
    %v119 = vcvt.s32.f32 %v87
    %v120 = vcvt.s32.f32 %v88
    %v121 = vcvt.s32.f32 %v89
    %v122 = vcvt.s32.f32 %v90
    %v123 = vcvt.s32.f32 %v91
    %v124 = vcvt.s32.f32 %v92
    %v125 = vcvt.s32.f32 %v93
    %v126 = vcvt.s32.f32 %v94
    %v127 = vpack.c.bf16 %v99, %v95
    %v128 = vpack.c.bf16 %v100, %v96
    %v129 = vpack.c.bf16 %v101, %v97
    %v130 = vpack.c.bf16 %v102, %v98
    %v131 = vpack.c.bf16 %v107, %v103
    %v132 = vpack.c.bf16 %v108, %v104
    %v133 = vpack.c.bf16 %v109, %v105
    %v134 = vpack.c.bf16 %v110, %v106
    %v135 = vpack.c.bf16 %v115, %v111
    %v136 = vpack.c.bf16 %v116, %v112
    %v137 = vpack.c.bf16 %v117, %v113
    %v138 = vpack.c.bf16 %v118, %v114
    %v139 = vpack.c.bf16 %v123, %v119
    %v140 = vpack.c.bf16 %v124, %v120
    %v141 = vpack.c.bf16 %v125, %v121
    %v142 = vpack.c.bf16 %v126, %v122
    %v143 = vshra.s32 %v29, 4
    %v144 = vshra.s32 %v30, 4
    %v145 = vshra.s32 %v31, 4
    %v146 = vshra.s32 %v32, 4
    %v147 = vshra.s32 %v33, 4
    %v148 = vshra.s32 %v34, 4
    %v149 = vshra.s32 %v35, 4
    %v150 = vshra.s32 %v36, 4
    %v151 = vshra.s32 %v37, 4
    %v152 = vshra.s32 %v38, 4
    %v153 = vshra.s32 %v39, 4
    %v154 = vshra.s32 %v40, 4
    %v155 = vshra.s32 %v41, 4
    %v156 = vshra.s32 %v42, 4
    %v157 = vshra.s32 %v43, 4
    %v158 = vshra.s32 %v44, 4
    %v159 = vshra.s32 %v45, 4
    %v160 = vshra.s32 %v46, 4
    %v161 = vshra.s32 %v47, 4
    %v162 = vshra.s32 %v48, 4
    %v163 = vshra.s32 %v49, 4
    %v164 = vshra.s32 %v50, 4
    %v165 = vshra.s32 %v51, 4
    %v166 = vshra.s32 %v52, 4
    %v167 = vshra.s32 %v53, 4
    %v168 = vshra.s32 %v54, 4
    %v169 = vshra.s32 %v55, 4
    %v170 = vshra.s32 %v56, 4
    %v171 = vshra.s32 %v57, 4
    %v172 = vshra.s32 %v58, 4
    %v173 = vshra.s32 %v59, 4
    %v174 = vshra.s32 %v60, 4
    %v175 = vand.u32 %v143, 15
    %v176 = vand.u32 %v144, 15
    %v177 = vand.u32 %v145, 15
    %v178 = vand.u32 %v146, 15
    %v179 = vand.u32 %v147, 15
    %v180 = vand.u32 %v148, 15
    %v181 = vand.u32 %v149, 15
    %v182 = vand.u32 %v150, 15
    %v183 = vand.u32 %v151, 15
    %v184 = vand.u32 %v152, 15
    %v185 = vand.u32 %v153, 15
    %v186 = vand.u32 %v154, 15
    %v187 = vand.u32 %v155, 15
    %v188 = vand.u32 %v156, 15
    %v189 = vand.u32 %v157, 15
    %v190 = vand.u32 %v158, 15
    %v191 = vand.u32 %v159, 15
    %v192 = vand.u32 %v160, 15
    %v193 = vand.u32 %v161, 15
    %v194 = vand.u32 %v162, 15
    %v195 = vand.u32 %v163, 15
    %v196 = vand.u32 %v164, 15
    %v197 = vand.u32 %v165, 15
    %v198 = vand.u32 %v166, 15
    %v199 = vand.u32 %v167, 15
    %v200 = vand.u32 %v168, 15
    %v201 = vand.u32 %v169, 15
    %v202 = vand.u32 %v170, 15
    %v203 = vand.u32 %v171, 15
    %v204 = vand.u32 %v172, 15
    %v205 = vand.u32 %v173, 15
    %v206 = vand.u32 %v174, 15
    %v207 = vcvt.s32.f32 %v175
    %v208 = vcvt.s32.f32 %v176
    %v209 = vcvt.s32.f32 %v177
    %v210 = vcvt.s32.f32 %v178
    %v211 = vcvt.s32.f32 %v179
    %v212 = vcvt.s32.f32 %v180
    %v213 = vcvt.s32.f32 %v181
    %v214 = vcvt.s32.f32 %v182
    %v215 = vcvt.s32.f32 %v183
    %v216 = vcvt.s32.f32 %v184
    %v217 = vcvt.s32.f32 %v185
    %v218 = vcvt.s32.f32 %v186
    %v219 = vcvt.s32.f32 %v187
    %v220 = vcvt.s32.f32 %v188
    %v221 = vcvt.s32.f32 %v189
    %v222 = vcvt.s32.f32 %v190
    %v223 = vcvt.s32.f32 %v191
    %v224 = vcvt.s32.f32 %v192
    %v225 = vcvt.s32.f32 %v193
    %v226 = vcvt.s32.f32 %v194
    %v227 = vcvt.s32.f32 %v195
    %v228 = vcvt.s32.f32 %v196
    %v229 = vcvt.s32.f32 %v197
    %v230 = vcvt.s32.f32 %v198
    %v231 = vcvt.s32.f32 %v199
    %v232 = vcvt.s32.f32 %v200
    %v233 = vcvt.s32.f32 %v201
    %v234 = vcvt.s32.f32 %v202
    %v235 = vcvt.s32.f32 %v203
    %v236 = vcvt.s32.f32 %v204
    %v237 = vcvt.s32.f32 %v205
    %v238 = vcvt.s32.f32 %v206
    %v239 = vpack.c.bf16 %v211, %v207
    %v240 = vpack.c.bf16 %v212, %v208
    %v241 = vpack.c.bf16 %v213, %v209
    %v242 = vpack.c.bf16 %v214, %v210
    %v243 = vpack.c.bf16 %v219, %v215
    %v244 = vpack.c.bf16 %v220, %v216
    %v245 = vpack.c.bf16 %v221, %v217
    %v246 = vpack.c.bf16 %v222, %v218
    %v247 = vpack.c.bf16 %v227, %v223
    %v248 = vpack.c.bf16 %v228, %v224
    %v249 = vpack.c.bf16 %v229, %v225
    %v250 = vpack.c.bf16 %v230, %v226
    %v251 = vpack.c.bf16 %v235, %v231
    %v252 = vpack.c.bf16 %v236, %v232
    %v253 = vpack.c.bf16 %v237, %v233
    %v254 = vpack.c.bf16 %v238, %v234
    %v257 = vunpack.c.l.s4 1966171168
    %v258 = vunpack.c.0.s8 %v257
    %v259 = vlaneseq
    %v260 = vshrl.u32 %v259, 7
    %v261 = vsub.s32 %v258, %v260
    %v262 = vrot.slane %v61, %v261
    %v263 = vcombine.high %v262, %v262
    %v265 = vunpack.c.l.s4 1966171168
    %v266 = vunpack.c.0.s8 %v265
    %v267 = vlaneseq
    %v268 = vshrl.u32 %v267, 7
    %v269 = vsub.s32 %v266, %v268
    %v270 = vrot.slane %v262, %v269
    %v272 = vunpack.c.l.s4 1966171168
    %v273 = vunpack.c.0.s8 %v272
    %v274 = vlaneseq
    %v275 = vshrl.u32 %v274, 7
    %v276 = vsub.s32 %v273, %v275
    %v277 = vrot.slane %v263, %v276
    %v278 = vcombine.high %v270, %v270
    %v279 = vcombine.high %v277, %v277
    %v281 = vpack.i.b16 %v270, %v270
    %v283 = vlaneseq
    %v284 = vshrl.u32 %v283, 7
    %v285 = vsub.s32 0, %v284
    %v286 = vrot.slane %v281, %v285
    %v288 = vpack.i.b16 %v277, %v277
    %v290 = vlaneseq
    %v291 = vshrl.u32 %v290, 7
    %v292 = vsub.s32 0, %v291
    %v293 = vrot.slane %v288, %v292
    %v295 = vpack.i.b16 %v278, %v278
    %v297 = vlaneseq
    %v298 = vshrl.u32 %v297, 7
    %v299 = vsub.s32 0, %v298
    %v300 = vrot.slane %v295, %v299
    %v302 = vpack.i.b16 %v279, %v279
    %v304 = vlaneseq
    %v305 = vshrl.u32 %v304, 7
    %v306 = vsub.s32 0, %v305
    %v307 = vrot.slane %v302, %v306
    %v308 = vmul.bf16 %v127, %v286
    %v309 = vmul.bf16 %v128, %v293
    %v310 = vmul.bf16 %v129, %v300
    %v311 = vmul.bf16 %v130, %v307
    %v312 = vmul.bf16 %v131, %v286
    %v313 = vmul.bf16 %v132, %v293
    %v314 = vmul.bf16 %v133, %v300
    %v315 = vmul.bf16 %v134, %v307
    %v316 = vmul.bf16 %v135, %v286
    %v317 = vmul.bf16 %v136, %v293
    %v318 = vmul.bf16 %v137, %v300
    %v319 = vmul.bf16 %v138, %v307
    %v320 = vmul.bf16 %v139, %v286
    %v321 = vmul.bf16 %v140, %v293
    %v322 = vmul.bf16 %v141, %v300
    %v323 = vmul.bf16 %v142, %v307
    %v326 = vunpack.c.l.s4 1966171168
    %v327 = vunpack.c.0.s8 %v326
    %v328 = vlaneseq
    %v329 = vshrl.u32 %v328, 7
    %v330 = vsub.s32 %v327, %v329
    %v331 = vrot.slane %v62, %v330
    %v332 = vcombine.high %v331, %v331
    %v334 = vunpack.c.l.s4 1966171168
    %v335 = vunpack.c.0.s8 %v334
    %v336 = vlaneseq
    %v337 = vshrl.u32 %v336, 7
    %v338 = vsub.s32 %v335, %v337
    %v339 = vrot.slane %v331, %v338
    %v341 = vunpack.c.l.s4 1966171168
    %v342 = vunpack.c.0.s8 %v341
    %v343 = vlaneseq
    %v344 = vshrl.u32 %v343, 7
    %v345 = vsub.s32 %v342, %v344
    %v346 = vrot.slane %v332, %v345
    %v347 = vcombine.high %v339, %v339
    %v348 = vcombine.high %v346, %v346
    %v350 = vpack.i.b16 %v339, %v339
    %v352 = vlaneseq
    %v353 = vshrl.u32 %v352, 7
    %v354 = vsub.s32 0, %v353
    %v355 = vrot.slane %v350, %v354
    %v357 = vpack.i.b16 %v346, %v346
    %v359 = vlaneseq
    %v360 = vshrl.u32 %v359, 7
    %v361 = vsub.s32 0, %v360
    %v362 = vrot.slane %v357, %v361
    %v364 = vpack.i.b16 %v347, %v347
    %v366 = vlaneseq
    %v367 = vshrl.u32 %v366, 7
    %v368 = vsub.s32 0, %v367
    %v369 = vrot.slane %v364, %v368
    %v371 = vpack.i.b16 %v348, %v348
    %v373 = vlaneseq
    %v374 = vshrl.u32 %v373, 7
    %v375 = vsub.s32 0, %v374
    %v376 = vrot.slane %v371, %v375
    %v377 = vsub.bf16 %v308, %v355
    %v378 = vsub.bf16 %v309, %v362
    %v379 = vsub.bf16 %v310, %v369
    %v380 = vsub.bf16 %v311, %v376
    %v381 = vsub.bf16 %v312, %v355
    %v382 = vsub.bf16 %v313, %v362
    %v383 = vsub.bf16 %v314, %v369
    %v384 = vsub.bf16 %v315, %v376
    %v385 = vsub.bf16 %v316, %v355
    %v386 = vsub.bf16 %v317, %v362
    %v387 = vsub.bf16 %v318, %v369
    %v388 = vsub.bf16 %v319, %v376
    %v389 = vsub.bf16 %v320, %v355
    %v390 = vsub.bf16 %v321, %v362
    %v391 = vsub.bf16 %v322, %v369
    %v392 = vsub.bf16 %v323, %v376
    %393 = vst [vmem:[#allocation2] sm:$0xff] %v377
    %394 = vst [vmem:[#allocation2 + $0x8] sm:$0xff] %v378
    %395 = vst [vmem:[#allocation2 + $0x10] sm:$0xff] %v379
    %396 = vst [vmem:[#allocation2 + $0x18] sm:$0xff] %v380
    %397 = vst [vmem:[#allocation2 + $0x20] sm:$0xff] %v381
    %398 = vst [vmem:[#allocation2 + $0x28] sm:$0xff] %v382
    %399 = vst [vmem:[#allocation2 + $0x30] sm:$0xff] %v383
    %400 = vst [vmem:[#allocation2 + $0x38] sm:$0xff] %v384
    %401 = vst [vmem:[#allocation2 + $0x40] sm:$0xff] %v385
    %402 = vst [vmem:[#allocation2 + $0x48] sm:$0xff] %v386
    %403 = vst [vmem:[#allocation2 + $0x50] sm:$0xff] %v387
    %404 = vst [vmem:[#allocation2 + $0x58] sm:$0xff] %v388
    %405 = vst [vmem:[#allocation2 + $0x60] sm:$0xff] %v389
    %406 = vst [vmem:[#allocation2 + $0x68] sm:$0xff] %v390
    %407 = vst [vmem:[#allocation2 + $0x70] sm:$0xff] %v391
    %408 = vst [vmem:[#allocation2 + $0x78] sm:$0xff] %v392
    %v409 = vmul.bf16 %v239, %v286
    %v410 = vmul.bf16 %v240, %v293
    %v411 = vmul.bf16 %v241, %v300
    %v412 = vmul.bf16 %v242, %v307
    %v413 = vmul.bf16 %v243, %v286
    %v414 = vmul.bf16 %v244, %v293
    %v415 = vmul.bf16 %v245, %v300
    %v416 = vmul.bf16 %v246, %v307
    %v417 = vmul.bf16 %v247, %v286
    %v418 = vmul.bf16 %v248, %v293
    %v419 = vmul.bf16 %v249, %v300
    %v420 = vmul.bf16 %v250, %v307
    %v421 = vmul.bf16 %v251, %v286
    %v422 = vmul.bf16 %v252, %v293
    %v423 = vmul.bf16 %v253, %v300
    %v424 = vmul.bf16 %v254, %v307
    %v425 = vsub.bf16 %v409, %v355
    %v426 = vsub.bf16 %v410, %v362
    %v427 = vsub.bf16 %v411, %v369
    %v428 = vsub.bf16 %v412, %v376
    %v429 = vsub.bf16 %v413, %v355
    %v430 = vsub.bf16 %v414, %v362
    %v431 = vsub.bf16 %v415, %v369
    %v432 = vsub.bf16 %v416, %v376
    %v433 = vsub.bf16 %v417, %v355
    %v434 = vsub.bf16 %v418, %v362
    %v435 = vsub.bf16 %v419, %v369
    %v436 = vsub.bf16 %v420, %v376
    %v437 = vsub.bf16 %v421, %v355
    %v438 = vsub.bf16 %v422, %v362
    %v439 = vsub.bf16 %v423, %v369
    %v440 = vsub.bf16 %v424, %v376
    %441 = vst [vmem:[#allocation2 + $0x80] sm:$0xff] %v425
    %442 = vst [vmem:[#allocation2 + $0x88] sm:$0xff] %v426
    %443 = vst [vmem:[#allocation2 + $0x90] sm:$0xff] %v427
    %444 = vst [vmem:[#allocation2 + $0x98] sm:$0xff] %v428
    %445 = vst [vmem:[#allocation2 + $0xa0] sm:$0xff] %v429
    %446 = vst [vmem:[#allocation2 + $0xa8] sm:$0xff] %v430
    %447 = vst [vmem:[#allocation2 + $0xb0] sm:$0xff] %v431
    %448 = vst [vmem:[#allocation2 + $0xb8] sm:$0xff] %v432
    %449 = vst [vmem:[#allocation2 + $0xc0] sm:$0xff] %v433
    %450 = vst [vmem:[#allocation2 + $0xc8] sm:$0xff] %v434
    %451 = vst [vmem:[#allocation2 + $0xd0] sm:$0xff] %v435
    %452 = vst [vmem:[#allocation2 + $0xd8] sm:$0xff] %v436
    %453 = vst [vmem:[#allocation2 + $0xe0] sm:$0xff] %v437
    %454 = vst [vmem:[#allocation2 + $0xe8] sm:$0xff] %v438
    %455 = vst [vmem:[#allocation2 + $0xf0] sm:$0xff] %v439
    %456 = vst [vmem:[#allocation2 + $0xf8] sm:$0xff] %v440
    %v457 = vld [vmem:[%s1 + $0x40] sm:$0xff]
    %v458 = vld [vmem:[%s1 + $0x48] sm:$0xff]
    %v459 = vld [vmem:[%s1 + $0x50] sm:$0xff]
    %v460 = vld [vmem:[%s1 + $0x58] sm:$0xff]
    %v461 = vld [vmem:[%s1 + $0x60] sm:$0xff]
    %v462 = vld [vmem:[%s1 + $0x68] sm:$0xff]
    %v463 = vld [vmem:[%s1 + $0x70] sm:$0xff]
    %v464 = vld [vmem:[%s1 + $0x78] sm:$0xff]
    %v465 = vunpack.c.0.s8 %v457
    %v466 = vunpack.c.0.s8 %v458
    %v467 = vunpack.c.0.s8 %v459
    %v468 = vunpack.c.0.s8 %v460
    %v469 = vunpack.c.1.s8 %v457
    %v470 = vunpack.c.1.s8 %v458
    %v471 = vunpack.c.1.s8 %v459
    %v472 = vunpack.c.1.s8 %v460
    %v473 = vunpack.c.2.s8 %v457
    %v474 = vunpack.c.2.s8 %v458
    %v475 = vunpack.c.2.s8 %v459
    %v476 = vunpack.c.2.s8 %v460
    %v477 = vunpack.c.3.s8 %v457
    %v478 = vunpack.c.3.s8 %v458
    %v479 = vunpack.c.3.s8 %v459
    %v480 = vunpack.c.3.s8 %v460
    %v481 = vunpack.c.0.s8 %v461
    %v482 = vunpack.c.0.s8 %v462
    %v483 = vunpack.c.0.s8 %v463
    %v484 = vunpack.c.0.s8 %v464
    %v485 = vunpack.c.1.s8 %v461
    %v486 = vunpack.c.1.s8 %v462
    %v487 = vunpack.c.1.s8 %v463
    %v488 = vunpack.c.1.s8 %v464
    %v489 = vunpack.c.2.s8 %v461
    %v490 = vunpack.c.2.s8 %v462
    %v491 = vunpack.c.2.s8 %v463
    %v492 = vunpack.c.2.s8 %v464
    %v493 = vunpack.c.3.s8 %v461
    %v494 = vunpack.c.3.s8 %v462
    %v495 = vunpack.c.3.s8 %v463
    %v496 = vunpack.c.3.s8 %v464
    %v497 = vld [vmem:[%s2] sm:$0xf]
    %v498 = vld [vmem:[%s3] sm:$0xf]
    %v499 = vand.u32 %v465, 15
    %v500 = vand.u32 %v466, 15
    %v501 = vand.u32 %v467, 15
    %v502 = vand.u32 %v468, 15
    %v503 = vand.u32 %v469, 15
    %v504 = vand.u32 %v470, 15
    %v505 = vand.u32 %v471, 15
    %v506 = vand.u32 %v472, 15
    %v507 = vand.u32 %v473, 15
    %v508 = vand.u32 %v474, 15
    %v509 = vand.u32 %v475, 15
    %v510 = vand.u32 %v476, 15
    %v511 = vand.u32 %v477, 15
    %v512 = vand.u32 %v478, 15
    %v513 = vand.u32 %v479, 15
    %v514 = vand.u32 %v480, 15
    %v515 = vand.u32 %v481, 15
    %v516 = vand.u32 %v482, 15
    %v517 = vand.u32 %v483, 15
    %v518 = vand.u32 %v484, 15
    %v519 = vand.u32 %v485, 15
    %v520 = vand.u32 %v486, 15
    %v521 = vand.u32 %v487, 15
    %v522 = vand.u32 %v488, 15
    %v523 = vand.u32 %v489, 15
    %v524 = vand.u32 %v490, 15
    %v525 = vand.u32 %v491, 15
    %v526 = vand.u32 %v492, 15
    %v527 = vand.u32 %v493, 15
    %v528 = vand.u32 %v494, 15
    %v529 = vand.u32 %v495, 15
    %v530 = vand.u32 %v496, 15
    %v531 = vcvt.s32.f32 %v499
    %v532 = vcvt.s32.f32 %v500
    %v533 = vcvt.s32.f32 %v501
    %v534 = vcvt.s32.f32 %v502
    %v535 = vcvt.s32.f32 %v503
    %v536 = vcvt.s32.f32 %v504
    %v537 = vcvt.s32.f32 %v505
    %v538 = vcvt.s32.f32 %v506
    %v539 = vcvt.s32.f32 %v507
    %v540 = vcvt.s32.f32 %v508
    %v541 = vcvt.s32.f32 %v509
    %v542 = vcvt.s32.f32 %v510
    %v543 = vcvt.s32.f32 %v511
    %v544 = vcvt.s32.f32 %v512
    %v545 = vcvt.s32.f32 %v513
    %v546 = vcvt.s32.f32 %v514
    %v547 = vcvt.s32.f32 %v515
    %v548 = vcvt.s32.f32 %v516
    %v549 = vcvt.s32.f32 %v517
    %v550 = vcvt.s32.f32 %v518
    %v551 = vcvt.s32.f32 %v519
    %v552 = vcvt.s32.f32 %v520
    %v553 = vcvt.s32.f32 %v521
    %v554 = vcvt.s32.f32 %v522
    %v555 = vcvt.s32.f32 %v523
    %v556 = vcvt.s32.f32 %v524
    %v557 = vcvt.s32.f32 %v525
    %v558 = vcvt.s32.f32 %v526
    %v559 = vcvt.s32.f32 %v527
    %v560 = vcvt.s32.f32 %v528
    %v561 = vcvt.s32.f32 %v529
    %v562 = vcvt.s32.f32 %v530
    %v563 = vpack.c.bf16 %v535, %v531
    %v564 = vpack.c.bf16 %v536, %v532
    %v565 = vpack.c.bf16 %v537, %v533
    %v566 = vpack.c.bf16 %v538, %v534
    %v567 = vpack.c.bf16 %v543, %v539
    %v568 = vpack.c.bf16 %v544, %v540
    %v569 = vpack.c.bf16 %v545, %v541
    %v570 = vpack.c.bf16 %v546, %v542
    %v571 = vpack.c.bf16 %v551, %v547
    %v572 = vpack.c.bf16 %v552, %v548
    %v573 = vpack.c.bf16 %v553, %v549
    %v574 = vpack.c.bf16 %v554, %v550
    %v575 = vpack.c.bf16 %v559, %v555
    %v576 = vpack.c.bf16 %v560, %v556
    %v577 = vpack.c.bf16 %v561, %v557
    %v578 = vpack.c.bf16 %v562, %v558
    %v579 = vshra.s32 %v465, 4
    %v580 = vshra.s32 %v466, 4
    %v581 = vshra.s32 %v467, 4
    %v582 = vshra.s32 %v468, 4
    %v583 = vshra.s32 %v469, 4
    %v584 = vshra.s32 %v470, 4
    %v585 = vshra.s32 %v471, 4
    %v586 = vshra.s32 %v472, 4
    %v587 = vshra.s32 %v473, 4
    %v588 = vshra.s32 %v474, 4
    %v589 = vshra.s32 %v475, 4
    %v590 = vshra.s32 %v476, 4
    %v591 = vshra.s32 %v477, 4
    %v592 = vshra.s32 %v478, 4
    %v593 = vshra.s32 %v479, 4
    %v594 = vshra.s32 %v480, 4
    %v595 = vshra.s32 %v481, 4
    %v596 = vshra.s32 %v482, 4
    %v597 = vshra.s32 %v483, 4
    %v598 = vshra.s32 %v484, 4
    %v599 = vshra.s32 %v485, 4
    %v600 = vshra.s32 %v486, 4
    %v601 = vshra.s32 %v487, 4
    %v602 = vshra.s32 %v488, 4
    %v603 = vshra.s32 %v489, 4
    %v604 = vshra.s32 %v490, 4
    %v605 = vshra.s32 %v491, 4
    %v606 = vshra.s32 %v492, 4
    %v607 = vshra.s32 %v493, 4
    %v608 = vshra.s32 %v494, 4
    %v609 = vshra.s32 %v495, 4
    %v610 = vshra.s32 %v496, 4
    %v611 = vand.u32 %v579, 15
    %v612 = vand.u32 %v580, 15
    %v613 = vand.u32 %v581, 15
    %v614 = vand.u32 %v582, 15
    %v615 = vand.u32 %v583, 15
    %v616 = vand.u32 %v584, 15
    %v617 = vand.u32 %v585, 15
    %v618 = vand.u32 %v586, 15
    %v619 = vand.u32 %v587, 15
    %v620 = vand.u32 %v588, 15
    %v621 = vand.u32 %v589, 15
    %v622 = vand.u32 %v590, 15
    %v623 = vand.u32 %v591, 15
    %v624 = vand.u32 %v592, 15
    %v625 = vand.u32 %v593, 15
    %v626 = vand.u32 %v594, 15
    %v627 = vand.u32 %v595, 15
    %v628 = vand.u32 %v596, 15
    %v629 = vand.u32 %v597, 15
    %v630 = vand.u32 %v598, 15
    %v631 = vand.u32 %v599, 15
    %v632 = vand.u32 %v600, 15
    %v633 = vand.u32 %v601, 15
    %v634 = vand.u32 %v602, 15
    %v635 = vand.u32 %v603, 15
    %v636 = vand.u32 %v604, 15
    %v637 = vand.u32 %v605, 15
    %v638 = vand.u32 %v606, 15
    %v639 = vand.u32 %v607, 15
    %v640 = vand.u32 %v608, 15
    %v641 = vand.u32 %v609, 15
    %v642 = vand.u32 %v610, 15
    %v643 = vcvt.s32.f32 %v611
    %v644 = vcvt.s32.f32 %v612
    %v645 = vcvt.s32.f32 %v613
    %v646 = vcvt.s32.f32 %v614
    %v647 = vcvt.s32.f32 %v615
    %v648 = vcvt.s32.f32 %v616
    %v649 = vcvt.s32.f32 %v617
    %v650 = vcvt.s32.f32 %v618
    %v651 = vcvt.s32.f32 %v619
    %v652 = vcvt.s32.f32 %v620
    %v653 = vcvt.s32.f32 %v621
    %v654 = vcvt.s32.f32 %v622
    %v655 = vcvt.s32.f32 %v623
    %v656 = vcvt.s32.f32 %v624
    %v657 = vcvt.s32.f32 %v625
    %v658 = vcvt.s32.f32 %v626
    %v659 = vcvt.s32.f32 %v627
    %v660 = vcvt.s32.f32 %v628
    %v661 = vcvt.s32.f32 %v629
    %v662 = vcvt.s32.f32 %v630
    %v663 = vcvt.s32.f32 %v631
    %v664 = vcvt.s32.f32 %v632
    %v665 = vcvt.s32.f32 %v633
    %v666 = vcvt.s32.f32 %v634
    %v667 = vcvt.s32.f32 %v635
    %v668 = vcvt.s32.f32 %v636
    %v669 = vcvt.s32.f32 %v637
    %v670 = vcvt.s32.f32 %v638
    %v671 = vcvt.s32.f32 %v639
    %v672 = vcvt.s32.f32 %v640
    %v673 = vcvt.s32.f32 %v641
    %v674 = vcvt.s32.f32 %v642
    %v675 = vpack.c.bf16 %v647, %v643
    %v676 = vpack.c.bf16 %v648, %v644
    %v677 = vpack.c.bf16 %v649, %v645
    %v678 = vpack.c.bf16 %v650, %v646
    %v679 = vpack.c.bf16 %v655, %v651
    %v680 = vpack.c.bf16 %v656, %v652
    %v681 = vpack.c.bf16 %v657, %v653
    %v682 = vpack.c.bf16 %v658, %v654
    %v683 = vpack.c.bf16 %v663, %v659
    %v684 = vpack.c.bf16 %v664, %v660
    %v685 = vpack.c.bf16 %v665, %v661
    %v686 = vpack.c.bf16 %v666, %v662
    %v687 = vpack.c.bf16 %v671, %v667
    %v688 = vpack.c.bf16 %v672, %v668
    %v689 = vpack.c.bf16 %v673, %v669
    %v690 = vpack.c.bf16 %v674, %v670
    %v693 = vunpack.c.l.s4 1966171168
    %v694 = vunpack.c.0.s8 %v693
    %v695 = vlaneseq
    %v696 = vshrl.u32 %v695, 7
    %v697 = vsub.s32 %v694, %v696
    %v698 = vrot.slane %v497, %v697
    %v699 = vcombine.high %v698, %v698
    %v701 = vunpack.c.l.s4 1966171168
    %v702 = vunpack.c.0.s8 %v701
    %v703 = vlaneseq
    %v704 = vshrl.u32 %v703, 7
    %v705 = vsub.s32 %v702, %v704
    %v706 = vrot.slane %v698, %v705
    %v708 = vunpack.c.l.s4 1966171168
    %v709 = vunpack.c.0.s8 %v708
    %v710 = vlaneseq
    %v711 = vshrl.u32 %v710, 7
    %v712 = vsub.s32 %v709, %v711
    %v713 = vrot.slane %v699, %v712
    %v714 = vcombine.high %v706, %v706
    %v715 = vcombine.high %v713, %v713
    %v717 = vshrl.u32 %v706, 16
    %v718 = vpack.i.b16 %v717, %v717
    %v720 = vlaneseq
    %v721 = vshrl.u32 %v720, 7
    %v722 = vsub.s32 0, %v721
    %v723 = vrot.slane %v718, %v722
    %v725 = vshrl.u32 %v713, 16
    %v726 = vpack.i.b16 %v725, %v725
    %v728 = vlaneseq
    %v729 = vshrl.u32 %v728, 7
    %v730 = vsub.s32 0, %v729
    %v731 = vrot.slane %v726, %v730
    %v733 = vshrl.u32 %v714, 16
    %v734 = vpack.i.b16 %v733, %v733
    %v736 = vlaneseq
    %v737 = vshrl.u32 %v736, 7
    %v738 = vsub.s32 0, %v737
    %v739 = vrot.slane %v734, %v738
    %v741 = vshrl.u32 %v715, 16
    %v742 = vpack.i.b16 %v741, %v741
    %v744 = vlaneseq
    %v745 = vshrl.u32 %v744, 7
    %v746 = vsub.s32 0, %v745
    %v747 = vrot.slane %v742, %v746
    %v748 = vmul.bf16 %v563, %v723
    %v749 = vmul.bf16 %v564, %v731
    %v750 = vmul.bf16 %v565, %v739
    %v751 = vmul.bf16 %v566, %v747
    %v752 = vmul.bf16 %v567, %v723
    %v753 = vmul.bf16 %v568, %v731
    %v754 = vmul.bf16 %v569, %v739
    %v755 = vmul.bf16 %v570, %v747
    %v756 = vmul.bf16 %v571, %v723
    %v757 = vmul.bf16 %v572, %v731
    %v758 = vmul.bf16 %v573, %v739
    %v759 = vmul.bf16 %v574, %v747
    %v760 = vmul.bf16 %v575, %v723
    %v761 = vmul.bf16 %v576, %v731
    %v762 = vmul.bf16 %v577, %v739
    %v763 = vmul.bf16 %v578, %v747
    %v766 = vunpack.c.l.s4 1966171168
    %v767 = vunpack.c.0.s8 %v766
    %v768 = vlaneseq
    %v769 = vshrl.u32 %v768, 7
    %v770 = vsub.s32 %v767, %v769
    %v771 = vrot.slane %v498, %v770
    %v772 = vcombine.high %v771, %v771
    %v774 = vunpack.c.l.s4 1966171168
    %v775 = vunpack.c.0.s8 %v774
    %v776 = vlaneseq
    %v777 = vshrl.u32 %v776, 7
    %v778 = vsub.s32 %v775, %v777
    %v779 = vrot.slane %v771, %v778
    %v781 = vunpack.c.l.s4 1966171168
    %v782 = vunpack.c.0.s8 %v781
    %v783 = vlaneseq
    %v784 = vshrl.u32 %v783, 7
    %v785 = vsub.s32 %v782, %v784
    %v786 = vrot.slane %v772, %v785
    %v787 = vcombine.high %v779, %v779
    %v788 = vcombine.high %v786, %v786
    %v790 = vshrl.u32 %v779, 16
    %v791 = vpack.i.b16 %v790, %v790
    %v793 = vlaneseq
    %v794 = vshrl.u32 %v793, 7
    %v795 = vsub.s32 0, %v794
    %v796 = vrot.slane %v791, %v795
    %v798 = vshrl.u32 %v786, 16
    %v799 = vpack.i.b16 %v798, %v798
    %v801 = vlaneseq
    %v802 = vshrl.u32 %v801, 7
    %v803 = vsub.s32 0, %v802
    %v804 = vrot.slane %v799, %v803
    %v806 = vshrl.u32 %v787, 16
    %v807 = vpack.i.b16 %v806, %v806
    %v809 = vlaneseq
    %v810 = vshrl.u32 %v809, 7
    %v811 = vsub.s32 0, %v810
    %v812 = vrot.slane %v807, %v811
    %v814 = vshrl.u32 %v788, 16
    %v815 = vpack.i.b16 %v814, %v814
    %v817 = vlaneseq
    %v818 = vshrl.u32 %v817, 7
    %v819 = vsub.s32 0, %v818
    %v820 = vrot.slane %v815, %v819
    %v821 = vsub.bf16 %v748, %v796
    %v822 = vsub.bf16 %v749, %v804
    %v823 = vsub.bf16 %v750, %v812
    %v824 = vsub.bf16 %v751, %v820
    %v825 = vsub.bf16 %v752, %v796
    %v826 = vsub.bf16 %v753, %v804
    %v827 = vsub.bf16 %v754, %v812
    %v828 = vsub.bf16 %v755, %v820
    %v829 = vsub.bf16 %v756, %v796
    %v830 = vsub.bf16 %v757, %v804
    %v831 = vsub.bf16 %v758, %v812
    %v832 = vsub.bf16 %v759, %v820
    %v833 = vsub.bf16 %v760, %v796
    %v834 = vsub.bf16 %v761, %v804
    %v835 = vsub.bf16 %v762, %v812
    %v836 = vsub.bf16 %v763, %v820
    %837 = vst [vmem:[#allocation2 + $0x100] sm:$0xff] %v821
    %838 = vst [vmem:[#allocation2 + $0x108] sm:$0xff] %v822
    %839 = vst [vmem:[#allocation2 + $0x110] sm:$0xff] %v823
    %840 = vst [vmem:[#allocation2 + $0x118] sm:$0xff] %v824
    %841 = vst [vmem:[#allocation2 + $0x120] sm:$0xff] %v825
    %842 = vst [vmem:[#allocation2 + $0x128] sm:$0xff] %v826
    %843 = vst [vmem:[#allocation2 + $0x130] sm:$0xff] %v827
    %844 = vst [vmem:[#allocation2 + $0x138] sm:$0xff] %v828
    %845 = vst [vmem:[#allocation2 + $0x140] sm:$0xff] %v829
    %846 = vst [vmem:[#allocation2 + $0x148] sm:$0xff] %v830
    %847 = vst [vmem:[#allocation2 + $0x150] sm:$0xff] %v831
    %848 = vst [vmem:[#allocation2 + $0x158] sm:$0xff] %v832
    %849 = vst [vmem:[#allocation2 + $0x160] sm:$0xff] %v833
    %850 = vst [vmem:[#allocation2 + $0x168] sm:$0xff] %v834
    %851 = vst [vmem:[#allocation2 + $0x170] sm:$0xff] %v835
    %852 = vst [vmem:[#allocation2 + $0x178] sm:$0xff] %v836
    %v853 = vmul.bf16 %v675, %v723
    %v854 = vmul.bf16 %v676, %v731
    %v855 = vmul.bf16 %v677, %v739
    %v856 = vmul.bf16 %v678, %v747
    %v857 = vmul.bf16 %v679, %v723
    %v858 = vmul.bf16 %v680, %v731
    %v859 = vmul.bf16 %v681, %v739
    %v860 = vmul.bf16 %v682, %v747
    %v861 = vmul.bf16 %v683, %v723
    %v862 = vmul.bf16 %v684, %v731
    %v863 = vmul.bf16 %v685, %v739
    %v864 = vmul.bf16 %v686, %v747
    %v865 = vmul.bf16 %v687, %v723
    %v866 = vmul.bf16 %v688, %v731
    %v867 = vmul.bf16 %v689, %v739
    %v868 = vmul.bf16 %v690, %v747
    %v869 = vsub.bf16 %v853, %v796
    %v870 = vsub.bf16 %v854, %v804
    %v871 = vsub.bf16 %v855, %v812
    %v872 = vsub.bf16 %v856, %v820
    %v873 = vsub.bf16 %v857, %v796
    %v874 = vsub.bf16 %v858, %v804
    %v875 = vsub.bf16 %v859, %v812
    %v876 = vsub.bf16 %v860, %v820
    %v877 = vsub.bf16 %v861, %v796
    %v878 = vsub.bf16 %v862, %v804
    %v879 = vsub.bf16 %v863, %v812
    %v880 = vsub.bf16 %v864, %v820
    %v881 = vsub.bf16 %v865, %v796
    %v882 = vsub.bf16 %v866, %v804
    %v883 = vsub.bf16 %v867, %v812
    %v884 = vsub.bf16 %v868, %v820
    %885 = vst [vmem:[#allocation2 + $0x180] sm:$0xff] %v869
    %886 = vst [vmem:[#allocation2 + $0x188] sm:$0xff] %v870
    %887 = vst [vmem:[#allocation2 + $0x190] sm:$0xff] %v871
    %888 = vst [vmem:[#allocation2 + $0x198] sm:$0xff] %v872
    %889 = vst [vmem:[#allocation2 + $0x1a0] sm:$0xff] %v873
    %890 = vst [vmem:[#allocation2 + $0x1a8] sm:$0xff] %v874
    %891 = vst [vmem:[#allocation2 + $0x1b0] sm:$0xff] %v875
    %892 = vst [vmem:[#allocation2 + $0x1b8] sm:$0xff] %v876
    %893 = vst [vmem:[#allocation2 + $0x1c0] sm:$0xff] %v877
    %894 = vst [vmem:[#allocation2 + $0x1c8] sm:$0xff] %v878
    %895 = vst [vmem:[#allocation2 + $0x1d0] sm:$0xff] %v879
    %896 = vst [vmem:[#allocation2 + $0x1d8] sm:$0xff] %v880
    %897 = vst [vmem:[#allocation2 + $0x1e0] sm:$0xff] %v881
    %898 = vst [vmem:[#allocation2 + $0x1e8] sm:$0xff] %v882
    %899 = vst [vmem:[#allocation2 + $0x1f0] sm:$0xff] %v883
    %900 = vst [vmem:[#allocation2 + $0x1f8] sm:$0xff] %v884
  $region21: #{forward.3} parent=0 // pred_fallthru
    _
  %p901 = scmp.eq.s32.totalorder 0, 0
  // Predicated region
  $region22: #{forward.3} parent=0 // pred_check
    %p902 = pneg %p901
  $region23: #{forward.3} parent=0 // pred_check_branch
    %904 = sbr.rel (%p902) target = $region25
  $region24: #{forward.3} parent=0 // pred_region
    %905 = vst [vmem:[#allocation3] sm:$0xff] 0.0
    %906 = vst [vmem:[#allocation3 + $0x8] sm:$0xff] 0.0
    %907 = vst [vmem:[#allocation3 + $0x10] sm:$0xff] 0.0
    %908 = vst [vmem:[#allocation3 + $0x18] sm:$0xff] 0.0
    %909 = vst [vmem:[#allocation3 + $0x20] sm:$0xff] 0.0
    %910 = vst [vmem:[#allocation3 + $0x28] sm:$0xff] 0.0
    %911 = vst [vmem:[#allocation3 + $0x30] sm:$0xff] 0.0
    %912 = vst [vmem:[#allocation3 + $0x38] sm:$0xff] 0.0
    %913 = vst [vmem:[#allocation3 + $0x40] sm:$0xff] 0.0
    %914 = vst [vmem:[#allocation3 + $0x48] sm:$0xff] 0.0
    %915 = vst [vmem:[#allocation3 + $0x50] sm:$0xff] 0.0
    %916 = vst [vmem:[#allocation3 + $0x58] sm:$0xff] 0.0
    %917 = vst [vmem:[#allocation3 + $0x60] sm:$0xff] 0.0
    %918 = vst [vmem:[#allocation3 + $0x68] sm:$0xff] 0.0
    %919 = vst [vmem:[#allocation3 + $0x70] sm:$0xff] 0.0
    %920 = vst [vmem:[#allocation3 + $0x78] sm:$0xff] 0.0
    %921 = vst [vmem:[#allocation3 + $0x80] sm:$0xff] 0.0
    %922 = vst [vmem:[#allocation3 + $0x88] sm:$0xff] 0.0
    %923 = vst [vmem:[#allocation3 + $0x90] sm:$0xff] 0.0
    %924 = vst [vmem:[#allocation3 + $0x98] sm:$0xff] 0.0
    %925 = vst [vmem:[#allocation3 + $0xa0] sm:$0xff] 0.0
    %926 = vst [vmem:[#allocation3 + $0xa8] sm:$0xff] 0.0
    %927 = vst [vmem:[#allocation3 + $0xb0] sm:$0xff] 0.0
    %928 = vst [vmem:[#allocation3 + $0xb8] sm:$0xff] 0.0
    %929 = vst [vmem:[#allocation3 + $0xc0] sm:$0xff] 0.0
    %930 = vst [vmem:[#allocation3 + $0xc8] sm:$0xff] 0.0
    %931 = vst [vmem:[#allocation3 + $0xd0] sm:$0xff] 0.0
    %932 = vst [vmem:[#allocation3 + $0xd8] sm:$0xff] 0.0
    %933 = vst [vmem:[#allocation3 + $0xe0] sm:$0xff] 0.0
    %934 = vst [vmem:[#allocation3 + $0xe8] sm:$0xff] 0.0
    %935 = vst [vmem:[#allocation3 + $0xf0] sm:$0xff] 0.0
    %936 = vst [vmem:[#allocation3 + $0xf8] sm:$0xff] 0.0
    %937 = vst [vmem:[#allocation3 + $0x100] sm:$0xff] 0.0
    %938 = vst [vmem:[#allocation3 + $0x108] sm:$0xff] 0.0
    %939 = vst [vmem:[#allocation3 + $0x110] sm:$0xff] 0.0
    %940 = vst [vmem:[#allocation3 + $0x118] sm:$0xff] 0.0
    %941 = vst [vmem:[#allocation3 + $0x120] sm:$0xff] 0.0
    %942 = vst [vmem:[#allocation3 + $0x128] sm:$0xff] 0.0
    %943 = vst [vmem:[#allocation3 + $0x130] sm:$0xff] 0.0
    %944 = vst [vmem:[#allocation3 + $0x138] sm:$0xff] 0.0
    %945 = vst [vmem:[#allocation3 + $0x140] sm:$0xff] 0.0
    %946 = vst [vmem:[#allocation3 + $0x148] sm:$0xff] 0.0
    %947 = vst [vmem:[#allocation3 + $0x150] sm:$0xff] 0.0
    %948 = vst [vmem:[#allocation3 + $0x158] sm:$0xff] 0.0
    %949 = vst [vmem:[#allocation3 + $0x160] sm:$0xff] 0.0
    %950 = vst [vmem:[#allocation3 + $0x168] sm:$0xff] 0.0
    %951 = vst [vmem:[#allocation3 + $0x170] sm:$0xff] 0.0
    %952 = vst [vmem:[#allocation3 + $0x178] sm:$0xff] 0.0
    %953 = vst [vmem:[#allocation3 + $0x180] sm:$0xff] 0.0
    %954 = vst [vmem:[#allocation3 + $0x188] sm:$0xff] 0.0
    %955 = vst [vmem:[#allocation3 + $0x190] sm:$0xff] 0.0
    %956 = vst [vmem:[#allocation3 + $0x198] sm:$0xff] 0.0
    %957 = vst [vmem:[#allocation3 + $0x1a0] sm:$0xff] 0.0
    %958 = vst [vmem:[#allocation3 + $0x1a8] sm:$0xff] 0.0
    %959 = vst [vmem:[#allocation3 + $0x1b0] sm:$0xff] 0.0
    %960 = vst [vmem:[#allocation3 + $0x1b8] sm:$0xff] 0.0
    %961 = vst [vmem:[#allocation3 + $0x1c0] sm:$0xff] 0.0
    %962 = vst [vmem:[#allocation3 + $0x1c8] sm:$0xff] 0.0
    %963 = vst [vmem:[#allocation3 + $0x1d0] sm:$0xff] 0.0
    %964 = vst [vmem:[#allocation3 + $0x1d8] sm:$0xff] 0.0
    %965 = vst [vmem:[#allocation3 + $0x1e0] sm:$0xff] 0.0
    %966 = vst [vmem:[#allocation3 + $0x1e8] sm:$0xff] 0.0
    %967 = vst [vmem:[#allocation3 + $0x1f0] sm:$0xff] 0.0
    %968 = vst [vmem:[#allocation3 + $0x1f8] sm:$0xff] 0.0
  $region25: #{forward.3} parent=0 // pred_fallthru
    _
  %v969 = vld [vmem:[#allocation3] sm:$0xff]
  %v970 = vld [vmem:[#allocation3 + $0x8] sm:$0xff]
  %v971 = vld [vmem:[#allocation3 + $0x10] sm:$0xff]
  %v972 = vld [vmem:[#allocation3 + $0x18] sm:$0xff]
  %v973 = vld [vmem:[#allocation3 + $0x20] sm:$0xff]
  %v974 = vld [vmem:[#allocation3 + $0x28] sm:$0xff]
  %v975 = vld [vmem:[#allocation3 + $0x30] sm:$0xff]
  %v976 = vld [vmem:[#allocation3 + $0x38] sm:$0xff]
  %v977 = vld [vmem:[#allocation3 + $0x40] sm:$0xff]
  %v978 = vld [vmem:[#allocation3 + $0x48] sm:$0xff]
  %v979 = vld [vmem:[#allocation3 + $0x50] sm:$0xff]
  %v980 = vld [vmem:[#allocation3 + $0x58] sm:$0xff]
  %v981 = vld [vmem:[#allocation3 + $0x60] sm:$0xff]
  %v982 = vld [vmem:[#allocation3 + $0x68] sm:$0xff]
  %v983 = vld [vmem:[#allocation3 + $0x70] sm:$0xff]
  %v984 = vld [vmem:[#allocation3 + $0x78] sm:$0xff]
  %v985 = vld [vmem:[#allocation3 + $0x80] sm:$0xff]
  %v986 = vld [vmem:[#allocation3 + $0x88] sm:$0xff]
  %v987 = vld [vmem:[#allocation3 + $0x90] sm:$0xff]
  %v988 = vld [vmem:[#allocation3 + $0x98] sm:$0xff]
  %v989 = vld [vmem:[#allocation3 + $0xa0] sm:$0xff]
  %v990 = vld [vmem:[#allocation3 + $0xa8] sm:$0xff]
  %v991 = vld [vmem:[#allocation3 + $0xb0] sm:$0xff]
  %v992 = vld [vmem:[#allocation3 + $0xb8] sm:$0xff]
  %v993 = vld [vmem:[#allocation3 + $0xc0] sm:$0xff]
  %v994 = vld [vmem:[#allocation3 + $0xc8] sm:$0xff]
  %v995 = vld [vmem:[#allocation3 + $0xd0] sm:$0xff]
  %v996 = vld [vmem:[#allocation3 + $0xd8] sm:$0xff]
  %v997 = vld [vmem:[#allocation3 + $0xe0] sm:$0xff]
  %v998 = vld [vmem:[#allocation3 + $0xe8] sm:$0xff]
  %v999 = vld [vmem:[#allocation3 + $0xf0] sm:$0xff]
  %v1000 = vld [vmem:[#allocation3 + $0xf8] sm:$0xff]
  %v1001 = vld [vmem:[#allocation3 + $0x100] sm:$0xff]
  %v1002 = vld [vmem:[#allocation3 + $0x108] sm:$0xff]
  %v1003 = vld [vmem:[#allocation3 + $0x110] sm:$0xff]
  %v1004 = vld [vmem:[#allocation3 + $0x118] sm:$0xff]
  %v1005 = vld [vmem:[#allocation3 + $0x120] sm:$0xff]
  %v1006 = vld [vmem:[#allocation3 + $0x128] sm:$0xff]
  %v1007 = vld [vmem:[#allocation3 + $0x130] sm:$0xff]
  %v1008 = vld [vmem:[#allocation3 + $0x138] sm:$0xff]
  %v1009 = vld [vmem:[#allocation3 + $0x140] sm:$0xff]
  %v1010 = vld [vmem:[#allocation3 + $0x148] sm:$0xff]
  %v1011 = vld [vmem:[#allocation3 + $0x150] sm:$0xff]
  %v1012 = vld [vmem:[#allocation3 + $0x158] sm:$0xff]
  %v1013 = vld [vmem:[#allocation3 + $0x160] sm:$0xff]
  %v1014 = vld [vmem:[#allocation3 + $0x168] sm:$0xff]
  %v1015 = vld [vmem:[#allocation3 + $0x170] sm:$0xff]
  %v1016 = vld [vmem:[#allocation3 + $0x178] sm:$0xff]
  %v1017 = vld [vmem:[#allocation3 + $0x180] sm:$0xff]
  %v1018 = vld [vmem:[#allocation3 + $0x188] sm:$0xff]
  %v1019 = vld [vmem:[#allocation3 + $0x190] sm:$0xff]
  %v1020 = vld [vmem:[#allocation3 + $0x198] sm:$0xff]
  %v1021 = vld [vmem:[#allocation3 + $0x1a0] sm:$0xff]
  %v1022 = vld [vmem:[#allocation3 + $0x1a8] sm:$0xff]
  %v1023 = vld [vmem:[#allocation3 + $0x1b0] sm:$0xff]
  %v1024 = vld [vmem:[#allocation3 + $0x1b8] sm:$0xff]
  %v1025 = vld [vmem:[#allocation3 + $0x1c0] sm:$0xff]
  %v1026 = vld [vmem:[#allocation3 + $0x1c8] sm:$0xff]
  %v1027 = vld [vmem:[#allocation3 + $0x1d0] sm:$0xff]
  %v1028 = vld [vmem:[#allocation3 + $0x1d8] sm:$0xff]
  %v1029 = vld [vmem:[#allocation3 + $0x1e0] sm:$0xff]
  %v1030 = vld [vmem:[#allocation3 + $0x1e8] sm:$0xff]
  %v1031 = vld [vmem:[#allocation3 + $0x1f0] sm:$0xff]
  %v1032 = vld [vmem:[#allocation3 + $0x1f8] sm:$0xff]
  %v1033 = vld [vmem:[%s0] sm:$0xff]
  %v1034 = vld [vmem:[%s0 + $0x8] sm:$0xff]
  %v1035 = vld [vmem:[%s0 + $0x10] sm:$0xff]
  %v1036 = vld [vmem:[%s0 + $0x18] sm:$0xff]
  %v1037 = vld [vmem:[%s0 + $0x20] sm:$0xff]
  %v1038 = vld [vmem:[%s0 + $0x28] sm:$0xff]
  %v1039 = vld [vmem:[%s0 + $0x30] sm:$0xff]
  %v1040 = vld [vmem:[%s0 + $0x38] sm:$0xff]
  %v1041 = vld [vmem:[%s0 + $0x40] sm:$0xff]
  %v1042 = vld [vmem:[%s0 + $0x48] sm:$0xff]
  %v1043 = vld [vmem:[%s0 + $0x50] sm:$0xff]
  %v1044 = vld [vmem:[%s0 + $0x58] sm:$0xff]
  %v1045 = vld [vmem:[%s0 + $0x60] sm:$0xff]
  %v1046 = vld [vmem:[%s0 + $0x68] sm:$0xff]
  %v1047 = vld [vmem:[%s0 + $0x70] sm:$0xff]
  %v1048 = vld [vmem:[%s0 + $0x78] sm:$0xff]
  %v1049 = vld [vmem:[#allocation2] sm:$0xff]
  %v1050 = vld [vmem:[#allocation2 + $0x8] sm:$0xff]
  %v1051 = vld [vmem:[#allocation2 + $0x10] sm:$0xff]
  %v1052 = vld [vmem:[#allocation2 + $0x18] sm:$0xff]
  %v1053 = vld [vmem:[#allocation2 + $0x20] sm:$0xff]
  %v1054 = vld [vmem:[#allocation2 + $0x28] sm:$0xff]
  %v1055 = vld [vmem:[#allocation2 + $0x30] sm:$0xff]
  %v1056 = vld [vmem:[#allocation2 + $0x38] sm:$0xff]
  %v1057 = vld [vmem:[#allocation2 + $0x40] sm:$0xff]
  %v1058 = vld [vmem:[#allocation2 + $0x48] sm:$0xff]
  %v1059 = vld [vmem:[#allocation2 + $0x50] sm:$0xff]
  %v1060 = vld [vmem:[#allocation2 + $0x58] sm:$0xff]
  %v1061 = vld [vmem:[#allocation2 + $0x60] sm:$0xff]
  %v1062 = vld [vmem:[#allocation2 + $0x68] sm:$0xff]
  %v1063 = vld [vmem:[#allocation2 + $0x70] sm:$0xff]
  %v1064 = vld [vmem:[#allocation2 + $0x78] sm:$0xff]
  %v1065 = vld [vmem:[#allocation2 + $0x80] sm:$0xff]
  %v1066 = vld [vmem:[#allocation2 + $0x88] sm:$0xff]
  %v1067 = vld [vmem:[#allocation2 + $0x90] sm:$0xff]
  %v1068 = vld [vmem:[#allocation2 + $0x98] sm:$0xff]
  %v1069 = vld [vmem:[#allocation2 + $0xa0] sm:$0xff]
  %v1070 = vld [vmem:[#allocation2 + $0xa8] sm:$0xff]
  %v1071 = vld [vmem:[#allocation2 + $0xb0] sm:$0xff]
  %v1072 = vld [vmem:[#allocation2 + $0xb8] sm:$0xff]
  %v1073 = vld [vmem:[#allocation2 + $0xc0] sm:$0xff]
  %v1074 = vld [vmem:[#allocation2 + $0xc8] sm:$0xff]
  %v1075 = vld [vmem:[#allocation2 + $0xd0] sm:$0xff]
  %v1076 = vld [vmem:[#allocation2 + $0xd8] sm:$0xff]
  %v1077 = vld [vmem:[#allocation2 + $0xe0] sm:$0xff]
  %v1078 = vld [vmem:[#allocation2 + $0xe8] sm:$0xff]
  %v1079 = vld [vmem:[#allocation2 + $0xf0] sm:$0xff]
  %v1080 = vld [vmem:[#allocation2 + $0xf8] sm:$0xff]
  %v1081 = vld [vmem:[#allocation2 + $0x100] sm:$0xff]
  %v1082 = vld [vmem:[#allocation2 + $0x108] sm:$0xff]
  %v1083 = vld [vmem:[#allocation2 + $0x110] sm:$0xff]
  %v1084 = vld [vmem:[#allocation2 + $0x118] sm:$0xff]
  %v1085 = vld [vmem:[#allocation2 + $0x120] sm:$0xff]
  %v1086 = vld [vmem:[#allocation2 + $0x128] sm:$0xff]
  %v1087 = vld [vmem:[#allocation2 + $0x130] sm:$0xff]
  %v1088 = vld [vmem:[#allocation2 + $0x138] sm:$0xff]
  %v1089 = vld [vmem:[#allocation2 + $0x140] sm:$0xff]
  %v1090 = vld [vmem:[#allocation2 + $0x148] sm:$0xff]
  %v1091 = vld [vmem:[#allocation2 + $0x150] sm:$0xff]
  %v1092 = vld [vmem:[#allocation2 + $0x158] sm:$0xff]
  %v1093 = vld [vmem:[#allocation2 + $0x160] sm:$0xff]
  %v1094 = vld [vmem:[#allocation2 + $0x168] sm:$0xff]
  %v1095 = vld [vmem:[#allocation2 + $0x170] sm:$0xff]
  %v1096 = vld [vmem:[#allocation2 + $0x178] sm:$0xff]
  %v1097 = vld [vmem:[#allocation2 + $0x180] sm:$0xff]
  %v1098 = vld [vmem:[#allocation2 + $0x188] sm:$0xff]
  %v1099 = vld [vmem:[#allocation2 + $0x190] sm:$0xff]
  %v1100 = vld [vmem:[#allocation2 + $0x198] sm:$0xff]
  %v1101 = vld [vmem:[#allocation2 + $0x1a0] sm:$0xff]
  %v1102 = vld [vmem:[#allocation2 + $0x1a8] sm:$0xff]
  %v1103 = vld [vmem:[#allocation2 + $0x1b0] sm:$0xff]
  %v1104 = vld [vmem:[#allocation2 + $0x1b8] sm:$0xff]
  %v1105 = vld [vmem:[#allocation2 + $0x1c0] sm:$0xff]
  %v1106 = vld [vmem:[#allocation2 + $0x1c8] sm:$0xff]
  %v1107 = vld [vmem:[#allocation2 + $0x1d0] sm:$0xff]
  %v1108 = vld [vmem:[#allocation2 + $0x1d8] sm:$0xff]
  %v1109 = vld [vmem:[#allocation2 + $0x1e0] sm:$0xff]
  %v1110 = vld [vmem:[#allocation2 + $0x1e8] sm:$0xff]
  %v1111 = vld [vmem:[#allocation2 + $0x1f0] sm:$0xff]
  %v1112 = vld [vmem:[#allocation2 + $0x1f8] sm:$0xff]
  %v1129 = vunpack.c.l.b16 %v1033
  %v1130 = vunpack.c.h.b16 %v1033
  %v1131 = vunpack.c.l.b16 %v1034
  %v1132 = vunpack.c.h.b16 %v1034
  %v1133 = vunpack.c.l.b16 %v1035
  %v1134 = vunpack.c.h.b16 %v1035
  %v1135 = vunpack.c.l.b16 %v1036
  %v1136 = vunpack.c.h.b16 %v1036
  %v1137 = vunpack.c.l.b16 %v1037
  %v1138 = vunpack.c.h.b16 %v1037
  %v1139 = vunpack.c.l.b16 %v1038
  %v1140 = vunpack.c.h.b16 %v1038
  %v1141 = vunpack.c.l.b16 %v1039
  %v1142 = vunpack.c.h.b16 %v1039
  %v1143 = vunpack.c.l.b16 %v1040
  %v1144 = vunpack.c.h.b16 %v1040
  %v1145 = vunpack.c.l.b16 %v1041
  %v1146 = vunpack.c.h.b16 %v1041
  %v1147 = vunpack.c.l.b16 %v1042
  %v1148 = vunpack.c.h.b16 %v1042
  %v1149 = vunpack.c.l.b16 %v1043
  %v1150 = vunpack.c.h.b16 %v1043
  %v1151 = vunpack.c.l.b16 %v1044
  %v1152 = vunpack.c.h.b16 %v1044
  %v1153 = vunpack.c.l.b16 %v1045
  %v1154 = vunpack.c.h.b16 %v1045
  %v1155 = vunpack.c.l.b16 %v1046
  %v1156 = vunpack.c.h.b16 %v1046
  %v1157 = vunpack.c.l.b16 %v1047
  %v1158 = vunpack.c.h.b16 %v1047
  %v1159 = vunpack.c.l.b16 %v1048
  %v1160 = vunpack.c.h.b16 %v1048
  %v1161 = vpack.c.b16 %v1131, %v1129
  %v1162 = vpack.c.b16 %v1132, %v1130
  %v1163 = vpack.c.b16 %v1135, %v1133
  %v1164 = vpack.c.b16 %v1136, %v1134
  %v1165 = vpack.c.b16 %v1139, %v1137
  %v1166 = vpack.c.b16 %v1140, %v1138
  %v1167 = vpack.c.b16 %v1143, %v1141
  %v1168 = vpack.c.b16 %v1144, %v1142
  %v1169 = vpack.c.b16 %v1147, %v1145
  %v1170 = vpack.c.b16 %v1148, %v1146
  %v1171 = vpack.c.b16 %v1151, %v1149
  %v1172 = vpack.c.b16 %v1152, %v1150
  %v1173 = vpack.c.b16 %v1155, %v1153
  %v1174 = vpack.c.b16 %v1156, %v1154
  %v1175 = vpack.c.b16 %v1159, %v1157
  %v1176 = vpack.c.b16 %v1160, %v1158
  %1193 = vmatprep.subr.bf16.mxu0 %v1050
  %1194 = vmatpush1.bf16.msra.mxu0 %v1049
  %1195 = vmatprep.subr.bf16.mxu0 %v1054
  %1196 = vmatpush1.bf16.msra.mxu0 %v1053
  %1197 = vmatprep.subr.bf16.mxu0 %v1058
  %1198 = vmatpush1.bf16.msra.mxu0 %v1057
  %1199 = vmatprep.subr.bf16.mxu0 %v1062
  %1200 = vmatpush1.bf16.msra.mxu0 %v1061
  %1201 = vmatprep.subr.bf16.mxu0 %v1066
  %1202 = vmatpush1.bf16.msra.mxu0 %v1065
  %1203 = vmatprep.subr.bf16.mxu0 %v1070
  %1204 = vmatpush1.bf16.msra.mxu0 %v1069
  %1205 = vmatprep.subr.bf16.mxu0 %v1074
  %1206 = vmatpush1.bf16.msra.mxu0 %v1073
  %1207 = vmatprep.subr.bf16.mxu0 %v1078
  %1208 = vmatpush1.bf16.msra.mxu0 %v1077
  %1209 = vmatprep.subr.bf16.mxu0 %v1082
  %1210 = vmatpush1.bf16.msra.mxu0 %v1081
  %1211 = vmatprep.subr.bf16.mxu0 %v1086
  %1212 = vmatpush1.bf16.msra.mxu0 %v1085
  %1213 = vmatprep.subr.bf16.mxu0 %v1090
  %1214 = vmatpush1.bf16.msra.mxu0 %v1089
  %1215 = vmatprep.subr.bf16.mxu0 %v1094
  %1216 = vmatpush1.bf16.msra.mxu0 %v1093
  %1217 = vmatprep.subr.bf16.mxu0 %v1098
  %1218 = vmatpush1.bf16.msra.mxu0 %v1097
  %1219 = vmatprep.subr.bf16.mxu0 %v1102
  %1220 = vmatpush1.bf16.msra.mxu0 %v1101
  %1221 = vmatprep.subr.bf16.mxu0 %v1106
  %1222 = vmatpush1.bf16.msra.mxu0 %v1105
  %1223 = vmatprep.subr.bf16.mxu0 %v1110
  %1224 = vmatpush1.bf16.msra.mxu0 %v1109
  %1225 = vmatprep.mubr.bf16.mxu0 %v1162
  %1226 = vmatmul.mubr.bf16.gmra.mrb[0].mxu0 %v1161
  %v1227 = vpop.f32.mrb[0].mxu0
  %v1228 = vadd.f32 0.0, %v1227
  %v1229 = vpop.f32.mrb[0].mxu0
  %v1230 = vadd.f32 0.0, %v1229
  %v1231 = vpop.f32.mrb[0].mxu0
  %v1232 = vadd.f32 0.0, %v1231
  %v1233 = vpop.f32.mrb[0].mxu0
  %v1234 = vadd.f32 0.0, %v1233
  %1235 = vmatprep.mubr.bf16.mxu0 %v1164
  %1236 = vmatmul.mubr.bf16.gmra.mrb[0].mxu0 %v1163
  %v1237 = vpop.f32.mrb[0].mxu0
  %v1238 = vadd.f32 0.0, %v1237
  %v1239 = vpop.f32.mrb[0].mxu0
  %v1240 = vadd.f32 0.0, %v1239
  %v1241 = vpop.f32.mrb[0].mxu0
  %v1242 = vadd.f32 0.0, %v1241
  %v1243 = vpop.f32.mrb[0].mxu0
  %v1244 = vadd.f32 0.0, %v1243
  %1245 = vmatprep.mubr.bf16.mxu0 %v1166
  %1246 = vmatmul.mubr.bf16.gmra.mrb[0].mxu0 %v1165
  %v1247 = vpop.f32.mrb[0].mxu0
  %v1248 = vadd.f32 0.0, %v1247
  %v1249 = vpop.f32.mrb[0].mxu0
  %v1250 = vadd.f32 0.0, %v1249
  %v1251 = vpop.f32.mrb[0].mxu0
  %v1252 = vadd.f32 0.0, %v1251
  %v1253 = vpop.f32.mrb[0].mxu0
  %v1254 = vadd.f32 0.0, %v1253
  %1255 = vmatprep.mubr.bf16.mxu0 %v1168
  %1256 = vmatmul.mubr.bf16.gmra.mrb[0].mxu0 %v1167
  %v1257 = vpop.f32.mrb[0].mxu0
  %v1258 = vadd.f32 0.0, %v1257
  %v1259 = vpop.f32.mrb[0].mxu0
  %v1260 = vadd.f32 0.0, %v1259
  %v1261 = vpop.f32.mrb[0].mxu0
  %v1262 = vadd.f32 0.0, %v1261
  %v1263 = vpop.f32.mrb[0].mxu0
  %v1264 = vadd.f32 0.0, %v1263
  %1265 = vmatprep.mubr.bf16.mxu0 %v1170
  %1266 = vmatmul.mubr.bf16.gmra.mrb[0].mxu0 %v1169
  %v1267 = vpop.f32.mrb[0].mxu0
  %v1268 = vadd.f32 0.0, %v1267
  %v1269 = vpop.f32.mrb[0].mxu0
  %v1270 = vadd.f32 0.0, %v1269
  %v1271 = vpop.f32.mrb[0].mxu0
  %v1272 = vadd.f32 0.0, %v1271
  %v1273 = vpop.f32.mrb[0].mxu0
  %v1274 = vadd.f32 0.0, %v1273
  %1275 = vmatprep.mubr.bf16.mxu0 %v1172
  %1276 = vmatmul.mubr.bf16.gmra.mrb[0].mxu0 %v1171
  %v1277 = vpop.f32.mrb[0].mxu0
  %v1278 = vadd.f32 0.0, %v1277
  %v1279 = vpop.f32.mrb[0].mxu0
  %v1280 = vadd.f32 0.0, %v1279
  %v1281 = vpop.f32.mrb[0].mxu0
  %v1282 = vadd.f32 0.0, %v1281
  %v1283 = vpop.f32.mrb[0].mxu0
  %v1284 = vadd.f32 0.0, %v1283
  %1285 = vmatprep.mubr.bf16.mxu0 %v1174
  %1286 = vmatmul.mubr.bf16.gmra.mrb[0].mxu0 %v1173
  %v1287 = vpop.f32.mrb[0].mxu0
  %v1288 = vadd.f32 0.0, %v1287
  %v1289 = vpop.f32.mrb[0].mxu0
  %v1290 = vadd.f32 0.0, %v1289
  %v1291 = vpop.f32.mrb[0].mxu0
  %v1292 = vadd.f32 0.0, %v1291
  %v1293 = vpop.f32.mrb[0].mxu0
  %v1294 = vadd.f32 0.0, %v1293
  %1295 = vmatprep.mubr.bf16.mxu0 %v1176
  %1296 = vmatmul.mubr.bf16.gmra.mrb[0].mxu0 %v1175
  %v1297 = vpop.f32.mrb[0].mxu0
  %v1298 = vadd.f32 0.0, %v1297
  %v1299 = vpop.f32.mrb[0].mxu0
  %v1300 = vadd.f32 0.0, %v1299
  %v1301 = vpop.f32.mrb[0].mxu0
  %v1302 = vadd.f32 0.0, %v1301
  %v1303 = vpop.f32.mrb[0].mxu0
  %v1304 = vadd.f32 0.0, %v1303
  %1305 = vdwg.mxu0
  %1306 = vmatprep.subr.bf16.mxu0 %v1052
  %1307 = vmatpush1.bf16.msra.mxu0 %v1051
  %1308 = vmatprep.subr.bf16.mxu0 %v1056
  %1309 = vmatpush1.bf16.msra.mxu0 %v1055
  %1310 = vmatprep.subr.bf16.mxu0 %v1060
  %1311 = vmatpush1.bf16.msra.mxu0 %v1059
  %1312 = vmatprep.subr.bf16.mxu0 %v1064
  %1313 = vmatpush1.bf16.msra.mxu0 %v1063
  %1314 = vmatprep.subr.bf16.mxu0 %v1068
  %1315 = vmatpush1.bf16.msra.mxu0 %v1067
  %1316 = vmatprep.subr.bf16.mxu0 %v1072
  %1317 = vmatpush1.bf16.msra.mxu0 %v1071
  %1318 = vmatprep.subr.bf16.mxu0 %v1076
  %1319 = vmatpush1.bf16.msra.mxu0 %v1075
  %1320 = vmatprep.subr.bf16.mxu0 %v1080
  %1321 = vmatpush1.bf16.msra.mxu0 %v1079
  %1322 = vmatprep.subr.bf16.mxu0 %v1084
  %1323 = vmatpush1.bf16.msra.mxu0 %v1083
  %1324 = vmatprep.subr.bf16.mxu0 %v1088
  %1325 = vmatpush1.bf16.msra.mxu0 %v1087
  %1326 = vmatprep.subr.bf16.mxu0 %v1092
  %1327 = vmatpush1.bf16.msra.mxu0 %v1091
  %1328 = vmatprep.subr.bf16.mxu0 %v1096
  %1329 = vmatpush1.bf16.msra.mxu0 %v1095
  %1330 = vmatprep.subr.bf16.mxu0 %v1100
  %1331 = vmatpush1.bf16.msra.mxu0 %v1099
  %1332 = vmatprep.subr.bf16.mxu0 %v1104
  %1333 = vmatpush1.bf16.msra.mxu0 %v1103
  %1334 = vmatprep.subr.bf16.mxu0 %v1108
  %1335 = vmatpush1.bf16.msra.mxu0 %v1107
  %1336 = vmatprep.subr.bf16.mxu0 %v1112
  %1337 = vmatpush1.bf16.msra.mxu0 %v1111
  %1338 = vmatprep.mubr.bf16.mxu0 %v1162
  %1339 = vmatmul.mubr.bf16.gmra.mrb[0].mxu0 %v1161
  %v1340 = vpop.f32.mrb[0].mxu0
  %v1341 = vadd.f32 0.0, %v1340
  %v1342 = vpop.f32.mrb[0].mxu0
  %v1343 = vadd.f32 0.0, %v1342
  %v1344 = vpop.f32.mrb[0].mxu0
  %v1345 = vadd.f32 0.0, %v1344
  %v1346 = vpop.f32.mrb[0].mxu0
  %v1347 = vadd.f32 0.0, %v1346
  %1348 = vmatprep.mubr.bf16.mxu0 %v1164
  %1349 = vmatmul.mubr.bf16.gmra.mrb[0].mxu0 %v1163
  %v1350 = vpop.f32.mrb[0].mxu0
  %v1351 = vadd.f32 0.0, %v1350
  %v1352 = vpop.f32.mrb[0].mxu0
  %v1353 = vadd.f32 0.0, %v1352
  %v1354 = vpop.f32.mrb[0].mxu0
  %v1355 = vadd.f32 0.0, %v1354
  %v1356 = vpop.f32.mrb[0].mxu0
  %v1357 = vadd.f32 0.0, %v1356
  %1358 = vmatprep.mubr.bf16.mxu0 %v1166
  %1359 = vmatmul.mubr.bf16.gmra.mrb[0].mxu0 %v1165
  %v1360 = vpop.f32.mrb[0].mxu0
  %v1361 = vadd.f32 0.0, %v1360
  %v1362 = vpop.f32.mrb[0].mxu0
  %v1363 = vadd.f32 0.0, %v1362
  %v1364 = vpop.f32.mrb[0].mxu0
  %v1365 = vadd.f32 0.0, %v1364
  %v1366 = vpop.f32.mrb[0].mxu0
  %v1367 = vadd.f32 0.0, %v1366
  %1368 = vmatprep.mubr.bf16.mxu0 %v1168
  %1369 = vmatmul.mubr.bf16.gmra.mrb[0].mxu0 %v1167
  %v1370 = vpop.f32.mrb[0].mxu0
  %v1371 = vadd.f32 0.0, %v1370
  %v1372 = vpop.f32.mrb[0].mxu0
  %v1373 = vadd.f32 0.0, %v1372
  %v1374 = vpop.f32.mrb[0].mxu0
  %v1375 = vadd.f32 0.0, %v1374
  %v1376 = vpop.f32.mrb[0].mxu0
  %v1377 = vadd.f32 0.0, %v1376
  %1378 = vmatprep.mubr.bf16.mxu0 %v1170
  %1379 = vmatmul.mubr.bf16.gmra.mrb[0].mxu0 %v1169
  %v1380 = vpop.f32.mrb[0].mxu0
  %v1381 = vadd.f32 0.0, %v1380
  %v1382 = vpop.f32.mrb[0].mxu0
  %v1383 = vadd.f32 0.0, %v1382
  %v1384 = vpop.f32.mrb[0].mxu0
  %v1385 = vadd.f32 0.0, %v1384
  %v1386 = vpop.f32.mrb[0].mxu0
  %v1387 = vadd.f32 0.0, %v1386
  %1388 = vmatprep.mubr.bf16.mxu0 %v1172
  %1389 = vmatmul.mubr.bf16.gmra.mrb[0].mxu0 %v1171
  %v1390 = vpop.f32.mrb[0].mxu0
  %v1391 = vadd.f32 0.0, %v1390
  %v1392 = vpop.f32.mrb[0].mxu0
  %v1393 = vadd.f32 0.0, %v1392
  %v1394 = vpop.f32.mrb[0].mxu0
  %v1395 = vadd.f32 0.0, %v1394
  %v1396 = vpop.f32.mrb[0].mxu0
  %v1397 = vadd.f32 0.0, %v1396
  %1398 = vmatprep.mubr.bf16.mxu0 %v1174
  %1399 = vmatmul.mubr.bf16.gmra.mrb[0].mxu0 %v1173
  %v1400 = vpop.f32.mrb[0].mxu0
  %v1401 = vadd.f32 0.0, %v1400
  %v1402 = vpop.f32.mrb[0].mxu0
  %v1403 = vadd.f32 0.0, %v1402
  %v1404 = vpop.f32.mrb[0].mxu0
  %v1405 = vadd.f32 0.0, %v1404
  %v1406 = vpop.f32.mrb[0].mxu0
  %v1407 = vadd.f32 0.0, %v1406
  %1408 = vmatprep.mubr.bf16.mxu0 %v1176
  %1409 = vmatmul.mubr.bf16.gmra.mrb[0].mxu0 %v1175
  %v1410 = vpop.f32.mrb[0].mxu0
  %v1411 = vadd.f32 0.0, %v1410
  %v1412 = vpop.f32.mrb[0].mxu0
  %v1413 = vadd.f32 0.0, %v1412
  %v1414 = vpop.f32.mrb[0].mxu0
  %v1415 = vadd.f32 0.0, %v1414
  %v1416 = vpop.f32.mrb[0].mxu0
  %v1417 = vadd.f32 0.0, %v1416
  %1418 = vdwg.mxu0
  %v1419 = vadd.f32 %v969, %v1228
  %v1420 = vadd.f32 %v970, %v1230
  %v1421 = vadd.f32 %v971, %v1341
  %v1422 = vadd.f32 %v972, %v1343
  %v1423 = vadd.f32 %v973, %v1232
  %v1424 = vadd.f32 %v974, %v1234
  %v1425 = vadd.f32 %v975, %v1345
  %v1426 = vadd.f32 %v976, %v1347
  %v1427 = vadd.f32 %v977, %v1238
  %v1428 = vadd.f32 %v978, %v1240
  %v1429 = vadd.f32 %v979, %v1351
  %v1430 = vadd.f32 %v980, %v1353
  %v1431 = vadd.f32 %v981, %v1242
  %v1432 = vadd.f32 %v982, %v1244
  %v1433 = vadd.f32 %v983, %v1355
  %v1434 = vadd.f32 %v984, %v1357
  %v1435 = vadd.f32 %v985, %v1248
  %v1436 = vadd.f32 %v986, %v1250
  %v1437 = vadd.f32 %v987, %v1361
  %v1438 = vadd.f32 %v988, %v1363
  %v1439 = vadd.f32 %v989, %v1252
  %v1440 = vadd.f32 %v990, %v1254
  %v1441 = vadd.f32 %v991, %v1365
  %v1442 = vadd.f32 %v992, %v1367
  %v1443 = vadd.f32 %v993, %v1258
  %v1444 = vadd.f32 %v994, %v1260
  %v1445 = vadd.f32 %v995, %v1371
  %v1446 = vadd.f32 %v996, %v1373
  %v1447 = vadd.f32 %v997, %v1262
  %v1448 = vadd.f32 %v998, %v1264
  %v1449 = vadd.f32 %v999, %v1375
  %v1450 = vadd.f32 %v1000, %v1377
  %v1451 = vadd.f32 %v1001, %v1268
  %v1452 = vadd.f32 %v1002, %v1270
  %v1453 = vadd.f32 %v1003, %v1381
  %v1454 = vadd.f32 %v1004, %v1383
  %v1455 = vadd.f32 %v1005, %v1272
  %v1456 = vadd.f32 %v1006, %v1274
  %v1457 = vadd.f32 %v1007, %v1385
  %v1458 = vadd.f32 %v1008, %v1387
  %v1459 = vadd.f32 %v1009, %v1278
  %v1460 = vadd.f32 %v1010, %v1280
  %v1461 = vadd.f32 %v1011, %v1391
  %v1462 = vadd.f32 %v1012, %v1393
  %v1463 = vadd.f32 %v1013, %v1282
  %v1464 = vadd.f32 %v1014, %v1284
  %v1465 = vadd.f32 %v1015, %v1395
  %v1466 = vadd.f32 %v1016, %v1397
  %v1467 = vadd.f32 %v1017, %v1288
  %v1468 = vadd.f32 %v1018, %v1290
  %v1469 = vadd.f32 %v1019, %v1401
  %v1470 = vadd.f32 %v1020, %v1403
  %v1471 = vadd.f32 %v1021, %v1292
  %v1472 = vadd.f32 %v1022, %v1294
  %v1473 = vadd.f32 %v1023, %v1405
  %v1474 = vadd.f32 %v1024, %v1407
  %v1475 = vadd.f32 %v1025, %v1298
  %v1476 = vadd.f32 %v1026, %v1300
  %v1477 = vadd.f32 %v1027, %v1411
  %v1478 = vadd.f32 %v1028, %v1413
  %v1479 = vadd.f32 %v1029, %v1302
  %v1480 = vadd.f32 %v1030, %v1304
  %v1481 = vadd.f32 %v1031, %v1415
  %v1482 = vadd.f32 %v1032, %v1417
  %1483 = vst [vmem:[#allocation3] sm:$0xff] %v1419
  %1484 = vst [vmem:[#allocation3 + $0x8] sm:$0xff] %v1420
  %1485 = vst [vmem:[#allocation3 + $0x10] sm:$0xff] %v1421
  %1486 = vst [vmem:[#allocation3 + $0x18] sm:$0xff] %v1422
  %1487 = vst [vmem:[#allocation3 + $0x20] sm:$0xff] %v1423
  %1488 = vst [vmem:[#allocation3 + $0x28] sm:$0xff] %v1424
  %1489 = vst [vmem:[#allocation3 + $0x30] sm:$0xff] %v1425
  %1490 = vst [vmem:[#allocation3 + $0x38] sm:$0xff] %v1426
  %1491 = vst [vmem:[#allocation3 + $0x40] sm:$0xff] %v1427
  %1492 = vst [vmem:[#allocation3 + $0x48] sm:$0xff] %v1428
  %1493 = vst [vmem:[#allocation3 + $0x50] sm:$0xff] %v1429
  %1494 = vst [vmem:[#allocation3 + $0x58] sm:$0xff] %v1430
  %1495 = vst [vmem:[#allocation3 + $0x60] sm:$0xff] %v1431
  %1496 = vst [vmem:[#allocation3 + $0x68] sm:$0xff] %v1432
  %1497 = vst [vmem:[#allocation3 + $0x70] sm:$0xff] %v1433
  %1498 = vst [vmem:[#allocation3 + $0x78] sm:$0xff] %v1434
  %1499 = vst [vmem:[#allocation3 + $0x80] sm:$0xff] %v1435
  %1500 = vst [vmem:[#allocation3 + $0x88] sm:$0xff] %v1436
  %1501 = vst [vmem:[#allocation3 + $0x90] sm:$0xff] %v1437
  %1502 = vst [vmem:[#allocation3 + $0x98] sm:$0xff] %v1438
  %1503 = vst [vmem:[#allocation3 + $0xa0] sm:$0xff] %v1439
  %1504 = vst [vmem:[#allocation3 + $0xa8] sm:$0xff] %v1440
  %1505 = vst [vmem:[#allocation3 + $0xb0] sm:$0xff] %v1441
  %1506 = vst [vmem:[#allocation3 + $0xb8] sm:$0xff] %v1442
  %1507 = vst [vmem:[#allocation3 + $0xc0] sm:$0xff] %v1443
  %1508 = vst [vmem:[#allocation3 + $0xc8] sm:$0xff] %v1444
  %1509 = vst [vmem:[#allocation3 + $0xd0] sm:$0xff] %v1445
  %1510 = vst [vmem:[#allocation3 + $0xd8] sm:$0xff] %v1446
  %1511 = vst [vmem:[#allocation3 + $0xe0] sm:$0xff] %v1447
  %1512 = vst [vmem:[#allocation3 + $0xe8] sm:$0xff] %v1448
  %1513 = vst [vmem:[#allocation3 + $0xf0] sm:$0xff] %v1449
  %1514 = vst [vmem:[#allocation3 + $0xf8] sm:$0xff] %v1450
  %1515 = vst [vmem:[#allocation3 + $0x100] sm:$0xff] %v1451
  %1516 = vst [vmem:[#allocation3 + $0x108] sm:$0xff] %v1452
  %1517 = vst [vmem:[#allocation3 + $0x110] sm:$0xff] %v1453
  %1518 = vst [vmem:[#allocation3 + $0x118] sm:$0xff] %v1454
  %1519 = vst [vmem:[#allocation3 + $0x120] sm:$0xff] %v1455
  %1520 = vst [vmem:[#allocation3 + $0x128] sm:$0xff] %v1456
  %1521 = vst [vmem:[#allocation3 + $0x130] sm:$0xff] %v1457
  %1522 = vst [vmem:[#allocation3 + $0x138] sm:$0xff] %v1458
  %1523 = vst [vmem:[#allocation3 + $0x140] sm:$0xff] %v1459
  %1524 = vst [vmem:[#allocation3 + $0x148] sm:$0xff] %v1460
  %1525 = vst [vmem:[#allocation3 + $0x150] sm:$0xff] %v1461
  %1526 = vst [vmem:[#allocation3 + $0x158] sm:$0xff] %v1462
  %1527 = vst [vmem:[#allocation3 + $0x160] sm:$0xff] %v1463
  %1528 = vst [vmem:[#allocation3 + $0x168] sm:$0xff] %v1464
  %1529 = vst [vmem:[#allocation3 + $0x170] sm:$0xff] %v1465
  %1530 = vst [vmem:[#allocation3 + $0x178] sm:$0xff] %v1466
  %1531 = vst [vmem:[#allocation3 + $0x180] sm:$0xff] %v1467
  %1532 = vst [vmem:[#allocation3 + $0x188] sm:$0xff] %v1468
  %1533 = vst [vmem:[#allocation3 + $0x190] sm:$0xff] %v1469
  %1534 = vst [vmem:[#allocation3 + $0x198] sm:$0xff] %v1470
  %1535 = vst [vmem:[#allocation3 + $0x1a0] sm:$0xff] %v1471
  %1536 = vst [vmem:[#allocation3 + $0x1a8] sm:$0xff] %v1472
  %1537 = vst [vmem:[#allocation3 + $0x1b0] sm:$0xff] %v1473
  %1538 = vst [vmem:[#allocation3 + $0x1b8] sm:$0xff] %v1474
  %1539 = vst [vmem:[#allocation3 + $0x1c0] sm:$0xff] %v1475
  %1540 = vst [vmem:[#allocation3 + $0x1c8] sm:$0xff] %v1476
  %1541 = vst [vmem:[#allocation3 + $0x1d0] sm:$0xff] %v1477
  %1542 = vst [vmem:[#allocation3 + $0x1d8] sm:$0xff] %v1478
  %1543 = vst [vmem:[#allocation3 + $0x1e0] sm:$0xff] %v1479
  %1544 = vst [vmem:[#allocation3 + $0x1e8] sm:$0xff] %v1480
  %1545 = vst [vmem:[#allocation3 + $0x1f0] sm:$0xff] %v1481
  %1546 = vst [vmem:[#allocation3 + $0x1f8] sm:$0xff] %v1482
  // Predicated region
  $region26: #{forward.3} parent=0 // pred_check
    %p1547 = pneg %p901
  $region27: #{forward.3} parent=0 // pred_check_branch
    %1549 = sbr.rel (%p1547) target = $region29
  $region28: #{forward.3} parent=0 // pred_region
    %v1550 = vld [vmem:[#allocation3] sm:$0xff]
    %v1551 = vld [vmem:[#allocation3 + $0x8] sm:$0xff]
    %v1552 = vld [vmem:[#allocation3 + $0x10] sm:$0xff]
    %v1553 = vld [vmem:[#allocation3 + $0x18] sm:$0xff]
    %v1554 = vld [vmem:[#allocation3 + $0x20] sm:$0xff]
    %v1555 = vld [vmem:[#allocation3 + $0x28] sm:$0xff]
    %v1556 = vld [vmem:[#allocation3 + $0x30] sm:$0xff]
    %v1557 = vld [vmem:[#allocation3 + $0x38] sm:$0xff]
    %v1558 = vld [vmem:[#allocation3 + $0x40] sm:$0xff]
    %v1559 = vld [vmem:[#allocation3 + $0x48] sm:$0xff]
    %v1560 = vld [vmem:[#allocation3 + $0x50] sm:$0xff]
    %v1561 = vld [vmem:[#allocation3 + $0x58] sm:$0xff]
    %v1562 = vld [vmem:[#allocation3 + $0x60] sm:$0xff]
    %v1563 = vld [vmem:[#allocation3 + $0x68] sm:$0xff]
    %v1564 = vld [vmem:[#allocation3 + $0x70] sm:$0xff]
    %v1565 = vld [vmem:[#allocation3 + $0x78] sm:$0xff]
    %v1566 = vld [vmem:[#allocation3 + $0x80] sm:$0xff]
    %v1567 = vld [vmem:[#allocation3 + $0x88] sm:$0xff]
    %v1568 = vld [vmem:[#allocation3 + $0x90] sm:$0xff]
    %v1569 = vld [vmem:[#allocation3 + $0x98] sm:$0xff]
    %v1570 = vld [vmem:[#allocation3 + $0xa0] sm:$0xff]
    %v1571 = vld [vmem:[#allocation3 + $0xa8] sm:$0xff]
    %v1572 = vld [vmem:[#allocation3 + $0xb0] sm:$0xff]
    %v1573 = vld [vmem:[#allocation3 + $0xb8] sm:$0xff]
    %v1574 = vld [vmem:[#allocation3 + $0xc0] sm:$0xff]
    %v1575 = vld [vmem:[#allocation3 + $0xc8] sm:$0xff]
    %v1576 = vld [vmem:[#allocation3 + $0xd0] sm:$0xff]
    %v1577 = vld [vmem:[#allocation3 + $0xd8] sm:$0xff]
    %v1578 = vld [vmem:[#allocation3 + $0xe0] sm:$0xff]
    %v1579 = vld [vmem:[#allocation3 + $0xe8] sm:$0xff]
    %v1580 = vld [vmem:[#allocation3 + $0xf0] sm:$0xff]
    %v1581 = vld [vmem:[#allocation3 + $0xf8] sm:$0xff]
    %v1582 = vld [vmem:[#allocation3 + $0x100] sm:$0xff]
    %v1583 = vld [vmem:[#allocation3 + $0x108] sm:$0xff]
    %v1584 = vld [vmem:[#allocation3 + $0x110] sm:$0xff]
    %v1585 = vld [vmem:[#allocation3 + $0x118] sm:$0xff]
    %v1586 = vld [vmem:[#allocation3 + $0x120] sm:$0xff]
    %v1587 = vld [vmem:[#allocation3 + $0x128] sm:$0xff]
    %v1588 = vld [vmem:[#allocation3 + $0x130] sm:$0xff]
    %v1589 = vld [vmem:[#allocation3 + $0x138] sm:$0xff]
    %v1590 = vld [vmem:[#allocation3 + $0x140] sm:$0xff]
    %v1591 = vld [vmem:[#allocation3 + $0x148] sm:$0xff]
    %v1592 = vld [vmem:[#allocation3 + $0x150] sm:$0xff]
    %v1593 = vld [vmem:[#allocation3 + $0x158] sm:$0xff]
    %v1594 = vld [vmem:[#allocation3 + $0x160] sm:$0xff]
    %v1595 = vld [vmem:[#allocation3 + $0x168] sm:$0xff]
    %v1596 = vld [vmem:[#allocation3 + $0x170] sm:$0xff]
    %v1597 = vld [vmem:[#allocation3 + $0x178] sm:$0xff]
    %v1598 = vld [vmem:[#allocation3 + $0x180] sm:$0xff]
    %v1599 = vld [vmem:[#allocation3 + $0x188] sm:$0xff]
    %v1600 = vld [vmem:[#allocation3 + $0x190] sm:$0xff]
    %v1601 = vld [vmem:[#allocation3 + $0x198] sm:$0xff]
    %v1602 = vld [vmem:[#allocation3 + $0x1a0] sm:$0xff]
    %v1603 = vld [vmem:[#allocation3 + $0x1a8] sm:$0xff]
    %v1604 = vld [vmem:[#allocation3 + $0x1b0] sm:$0xff]
    %v1605 = vld [vmem:[#allocation3 + $0x1b8] sm:$0xff]
    %v1606 = vld [vmem:[#allocation3 + $0x1c0] sm:$0xff]
    %v1607 = vld [vmem:[#allocation3 + $0x1c8] sm:$0xff]
    %v1608 = vld [vmem:[#allocation3 + $0x1d0] sm:$0xff]
    %v1609 = vld [vmem:[#allocation3 + $0x1d8] sm:$0xff]
    %v1610 = vld [vmem:[#allocation3 + $0x1e0] sm:$0xff]
    %v1611 = vld [vmem:[#allocation3 + $0x1e8] sm:$0xff]
    %v1612 = vld [vmem:[#allocation3 + $0x1f0] sm:$0xff]
    %v1613 = vld [vmem:[#allocation3 + $0x1f8] sm:$0xff]
    %v1614 = vmul.f32 %v1550, %v1550
    %v1615 = vmul.f32 %v1551, %v1551
    %v1616 = vmul.f32 %v1552, %v1552
    %v1617 = vmul.f32 %v1553, %v1553
    %v1618 = vmul.f32 %v1554, %v1554
    %v1619 = vmul.f32 %v1555, %v1555
    %v1620 = vmul.f32 %v1556, %v1556
    %v1621 = vmul.f32 %v1557, %v1557
    %v1622 = vmul.f32 %v1558, %v1558
    %v1623 = vmul.f32 %v1559, %v1559
    %v1624 = vmul.f32 %v1560, %v1560
    %v1625 = vmul.f32 %v1561, %v1561
    %v1626 = vmul.f32 %v1562, %v1562
    %v1627 = vmul.f32 %v1563, %v1563
    %v1628 = vmul.f32 %v1564, %v1564
    %v1629 = vmul.f32 %v1565, %v1565
    %v1630 = vmul.f32 %v1566, %v1566
    %v1631 = vmul.f32 %v1567, %v1567
    %v1632 = vmul.f32 %v1568, %v1568
    %v1633 = vmul.f32 %v1569, %v1569
    %v1634 = vmul.f32 %v1570, %v1570
    %v1635 = vmul.f32 %v1571, %v1571
    %v1636 = vmul.f32 %v1572, %v1572
    %v1637 = vmul.f32 %v1573, %v1573
    %v1638 = vmul.f32 %v1574, %v1574
    %v1639 = vmul.f32 %v1575, %v1575
    %v1640 = vmul.f32 %v1576, %v1576
    %v1641 = vmul.f32 %v1577, %v1577
    %v1642 = vmul.f32 %v1578, %v1578
    %v1643 = vmul.f32 %v1579, %v1579
    %v1644 = vmul.f32 %v1580, %v1580
    %v1645 = vmul.f32 %v1581, %v1581
    %v1646 = vmul.f32 %v1582, %v1582
    %v1647 = vmul.f32 %v1583, %v1583
    %v1648 = vmul.f32 %v1584, %v1584
    %v1649 = vmul.f32 %v1585, %v1585
    %v1650 = vmul.f32 %v1586, %v1586
    %v1651 = vmul.f32 %v1587, %v1587
    %v1652 = vmul.f32 %v1588, %v1588
    %v1653 = vmul.f32 %v1589, %v1589
    %v1654 = vmul.f32 %v1590, %v1590
    %v1655 = vmul.f32 %v1591, %v1591
    %v1656 = vmul.f32 %v1592, %v1592
    %v1657 = vmul.f32 %v1593, %v1593
    %v1658 = vmul.f32 %v1594, %v1594
    %v1659 = vmul.f32 %v1595, %v1595
    %v1660 = vmul.f32 %v1596, %v1596
    %v1661 = vmul.f32 %v1597, %v1597
    %v1662 = vmul.f32 %v1598, %v1598
    %v1663 = vmul.f32 %v1599, %v1599
    %v1664 = vmul.f32 %v1600, %v1600
    %v1665 = vmul.f32 %v1601, %v1601
    %v1666 = vmul.f32 %v1602, %v1602
    %v1667 = vmul.f32 %v1603, %v1603
    %v1668 = vmul.f32 %v1604, %v1604
    %v1669 = vmul.f32 %v1605, %v1605
    %v1670 = vmul.f32 %v1606, %v1606
    %v1671 = vmul.f32 %v1607, %v1607
    %v1672 = vmul.f32 %v1608, %v1608
    %v1673 = vmul.f32 %v1609, %v1609
    %v1674 = vmul.f32 %v1610, %v1610
    %v1675 = vmul.f32 %v1611, %v1611
    %v1676 = vmul.f32 %v1612, %v1612
    %v1677 = vmul.f32 %v1613, %v1613
    %v1678 = vmul.f32 %v1550, %v1614
    %v1679 = vmul.f32 %v1551, %v1615
    %v1680 = vmul.f32 %v1552, %v1616
    %v1681 = vmul.f32 %v1553, %v1617
    %v1682 = vmul.f32 %v1554, %v1618
    %v1683 = vmul.f32 %v1555, %v1619
    %v1684 = vmul.f32 %v1556, %v1620
    %v1685 = vmul.f32 %v1557, %v1621
    %v1686 = vmul.f32 %v1558, %v1622
    %v1687 = vmul.f32 %v1559, %v1623
    %v1688 = vmul.f32 %v1560, %v1624
    %v1689 = vmul.f32 %v1561, %v1625
    %v1690 = vmul.f32 %v1562, %v1626
    %v1691 = vmul.f32 %v1563, %v1627
    %v1692 = vmul.f32 %v1564, %v1628
    %v1693 = vmul.f32 %v1565, %v1629
    %v1694 = vmul.f32 %v1566, %v1630
    %v1695 = vmul.f32 %v1567, %v1631
    %v1696 = vmul.f32 %v1568, %v1632
    %v1697 = vmul.f32 %v1569, %v1633
    %v1698 = vmul.f32 %v1570, %v1634
    %v1699 = vmul.f32 %v1571, %v1635
    %v1700 = vmul.f32 %v1572, %v1636
    %v1701 = vmul.f32 %v1573, %v1637
    %v1702 = vmul.f32 %v1574, %v1638
    %v1703 = vmul.f32 %v1575, %v1639
    %v1704 = vmul.f32 %v1576, %v1640
    %v1705 = vmul.f32 %v1577, %v1641
    %v1706 = vmul.f32 %v1578, %v1642
    %v1707 = vmul.f32 %v1579, %v1643
    %v1708 = vmul.f32 %v1580, %v1644
    %v1709 = vmul.f32 %v1581, %v1645
    %v1710 = vmul.f32 %v1582, %v1646
    %v1711 = vmul.f32 %v1583, %v1647
    %v1712 = vmul.f32 %v1584, %v1648
    %v1713 = vmul.f32 %v1585, %v1649
    %v1714 = vmul.f32 %v1586, %v1650
    %v1715 = vmul.f32 %v1587, %v1651
    %v1716 = vmul.f32 %v1588, %v1652
    %v1717 = vmul.f32 %v1589, %v1653
    %v1718 = vmul.f32 %v1590, %v1654
    %v1719 = vmul.f32 %v1591, %v1655
    %v1720 = vmul.f32 %v1592, %v1656
    %v1721 = vmul.f32 %v1593, %v1657
    %v1722 = vmul.f32 %v1594, %v1658
    %v1723 = vmul.f32 %v1595, %v1659
    %v1724 = vmul.f32 %v1596, %v1660
    %v1725 = vmul.f32 %v1597, %v1661
    %v1726 = vmul.f32 %v1598, %v1662
    %v1727 = vmul.f32 %v1599, %v1663
    %v1728 = vmul.f32 %v1600, %v1664
    %v1729 = vmul.f32 %v1601, %v1665
    %v1730 = vmul.f32 %v1602, %v1666
    %v1731 = vmul.f32 %v1603, %v1667
    %v1732 = vmul.f32 %v1604, %v1668
    %v1733 = vmul.f32 %v1605, %v1669
    %v1734 = vmul.f32 %v1606, %v1670
    %v1735 = vmul.f32 %v1607, %v1671
    %v1736 = vmul.f32 %v1608, %v1672
    %v1737 = vmul.f32 %v1609, %v1673
    %v1738 = vmul.f32 %v1610, %v1674
    %v1739 = vmul.f32 %v1611, %v1675
    %v1740 = vmul.f32 %v1612, %v1676
    %v1741 = vmul.f32 %v1613, %v1677
    %v1742 = vmul.f32 %v1678, 0.044715
    %v1743 = vmul.f32 %v1679, 0.044715
    %v1744 = vmul.f32 %v1680, 0.044715
    %v1745 = vmul.f32 %v1681, 0.044715
    %v1746 = vmul.f32 %v1682, 0.044715
    %v1747 = vmul.f32 %v1683, 0.044715
    %v1748 = vmul.f32 %v1684, 0.044715
    %v1749 = vmul.f32 %v1685, 0.044715
    %v1750 = vmul.f32 %v1686, 0.044715
    %v1751 = vmul.f32 %v1687, 0.044715
    %v1752 = vmul.f32 %v1688, 0.044715
    %v1753 = vmul.f32 %v1689, 0.044715
    %v1754 = vmul.f32 %v1690, 0.044715
    %v1755 = vmul.f32 %v1691, 0.044715
    %v1756 = vmul.f32 %v1692, 0.044715
    %v1757 = vmul.f32 %v1693, 0.044715
    %v1758 = vmul.f32 %v1694, 0.044715
    %v1759 = vmul.f32 %v1695, 0.044715
    %v1760 = vmul.f32 %v1696, 0.044715
    %v1761 = vmul.f32 %v1697, 0.044715
    %v1762 = vmul.f32 %v1698, 0.044715
    %v1763 = vmul.f32 %v1699, 0.044715
    %v1764 = vmul.f32 %v1700, 0.044715
    %v1765 = vmul.f32 %v1701, 0.044715
    %v1766 = vmul.f32 %v1702, 0.044715
    %v1767 = vmul.f32 %v1703, 0.044715
    %v1768 = vmul.f32 %v1704, 0.044715
    %v1769 = vmul.f32 %v1705, 0.044715
    %v1770 = vmul.f32 %v1706, 0.044715
    %v1771 = vmul.f32 %v1707, 0.044715
    %v1772 = vmul.f32 %v1708, 0.044715
    %v1773 = vmul.f32 %v1709, 0.044715
    %v1774 = vmul.f32 %v1710, 0.044715
    %v1775 = vmul.f32 %v1711, 0.044715
    %v1776 = vmul.f32 %v1712, 0.044715
    %v1777 = vmul.f32 %v1713, 0.044715
    %v1778 = vmul.f32 %v1714, 0.044715
    %v1779 = vmul.f32 %v1715, 0.044715
    %v1780 = vmul.f32 %v1716, 0.044715
    %v1781 = vmul.f32 %v1717, 0.044715
    %v1782 = vmul.f32 %v1718, 0.044715
    %v1783 = vmul.f32 %v1719, 0.044715
    %v1784 = vmul.f32 %v1720, 0.044715
    %v1785 = vmul.f32 %v1721, 0.044715
    %v1786 = vmul.f32 %v1722, 0.044715
    %v1787 = vmul.f32 %v1723, 0.044715
    %v1788 = vmul.f32 %v1724, 0.044715
    %v1789 = vmul.f32 %v1725, 0.044715
    %v1790 = vmul.f32 %v1726, 0.044715
    %v1791 = vmul.f32 %v1727, 0.044715
    %v1792 = vmul.f32 %v1728, 0.044715
    %v1793 = vmul.f32 %v1729, 0.044715
    %v1794 = vmul.f32 %v1730, 0.044715
    %v1795 = vmul.f32 %v1731, 0.044715
    %v1796 = vmul.f32 %v1732, 0.044715
    %v1797 = vmul.f32 %v1733, 0.044715
    %v1798 = vmul.f32 %v1734, 0.044715
    %v1799 = vmul.f32 %v1735, 0.044715
    %v1800 = vmul.f32 %v1736, 0.044715
    %v1801 = vmul.f32 %v1737, 0.044715
    %v1802 = vmul.f32 %v1738, 0.044715
    %v1803 = vmul.f32 %v1739, 0.044715
    %v1804 = vmul.f32 %v1740, 0.044715
    %v1805 = vmul.f32 %v1741, 0.044715
    %v1806 = vadd.f32 %v1550, %v1742
    %v1807 = vadd.f32 %v1551, %v1743
    %v1808 = vadd.f32 %v1552, %v1744
    %v1809 = vadd.f32 %v1553, %v1745
    %v1810 = vadd.f32 %v1554, %v1746
    %v1811 = vadd.f32 %v1555, %v1747
    %v1812 = vadd.f32 %v1556, %v1748
    %v1813 = vadd.f32 %v1557, %v1749
    %v1814 = vadd.f32 %v1558, %v1750
    %v1815 = vadd.f32 %v1559, %v1751
    %v1816 = vadd.f32 %v1560, %v1752
    %v1817 = vadd.f32 %v1561, %v1753
    %v1818 = vadd.f32 %v1562, %v1754
    %v1819 = vadd.f32 %v1563, %v1755
    %v1820 = vadd.f32 %v1564, %v1756
    %v1821 = vadd.f32 %v1565, %v1757
    %v1822 = vadd.f32 %v1566, %v1758
    %v1823 = vadd.f32 %v1567, %v1759
    %v1824 = vadd.f32 %v1568, %v1760
    %v1825 = vadd.f32 %v1569, %v1761
    %v1826 = vadd.f32 %v1570, %v1762
    %v1827 = vadd.f32 %v1571, %v1763
    %v1828 = vadd.f32 %v1572, %v1764
    %v1829 = vadd.f32 %v1573, %v1765
    %v1830 = vadd.f32 %v1574, %v1766
    %v1831 = vadd.f32 %v1575, %v1767
    %v1832 = vadd.f32 %v1576, %v1768
    %v1833 = vadd.f32 %v1577, %v1769
    %v1834 = vadd.f32 %v1578, %v1770
    %v1835 = vadd.f32 %v1579, %v1771
    %v1836 = vadd.f32 %v1580, %v1772
    %v1837 = vadd.f32 %v1581, %v1773
    %v1838 = vadd.f32 %v1582, %v1774
    %v1839 = vadd.f32 %v1583, %v1775
    %v1840 = vadd.f32 %v1584, %v1776
    %v1841 = vadd.f32 %v1585, %v1777
    %v1842 = vadd.f32 %v1586, %v1778
    %v1843 = vadd.f32 %v1587, %v1779
    %v1844 = vadd.f32 %v1588, %v1780
    %v1845 = vadd.f32 %v1589, %v1781
    %v1846 = vadd.f32 %v1590, %v1782
    %v1847 = vadd.f32 %v1591, %v1783
    %v1848 = vadd.f32 %v1592, %v1784
    %v1849 = vadd.f32 %v1593, %v1785
    %v1850 = vadd.f32 %v1594, %v1786
    %v1851 = vadd.f32 %v1595, %v1787
    %v1852 = vadd.f32 %v1596, %v1788
    %v1853 = vadd.f32 %v1597, %v1789
    %v1854 = vadd.f32 %v1598, %v1790
    %v1855 = vadd.f32 %v1599, %v1791
    %v1856 = vadd.f32 %v1600, %v1792
    %v1857 = vadd.f32 %v1601, %v1793
    %v1858 = vadd.f32 %v1602, %v1794
    %v1859 = vadd.f32 %v1603, %v1795
    %v1860 = vadd.f32 %v1604, %v1796
    %v1861 = vadd.f32 %v1605, %v1797
    %v1862 = vadd.f32 %v1606, %v1798
    %v1863 = vadd.f32 %v1607, %v1799
    %v1864 = vadd.f32 %v1608, %v1800
    %v1865 = vadd.f32 %v1609, %v1801
    %v1866 = vadd.f32 %v1610, %v1802
    %v1867 = vadd.f32 %v1611, %v1803
    %v1868 = vadd.f32 %v1612, %v1804
    %v1869 = vadd.f32 %v1613, %v1805
    %v1870 = vmul.f32 %v1806, 0.7978846
    %v1871 = vmul.f32 %v1807, 0.7978846
    %v1872 = vmul.f32 %v1808, 0.7978846
    %v1873 = vmul.f32 %v1809, 0.7978846
    %v1874 = vmul.f32 %v1810, 0.7978846
    %v1875 = vmul.f32 %v1811, 0.7978846
    %v1876 = vmul.f32 %v1812, 0.7978846
    %v1877 = vmul.f32 %v1813, 0.7978846
    %v1878 = vmul.f32 %v1814, 0.7978846
    %v1879 = vmul.f32 %v1815, 0.7978846
    %v1880 = vmul.f32 %v1816, 0.7978846
    %v1881 = vmul.f32 %v1817, 0.7978846
    %v1882 = vmul.f32 %v1818, 0.7978846
    %v1883 = vmul.f32 %v1819, 0.7978846
    %v1884 = vmul.f32 %v1820, 0.7978846
    %v1885 = vmul.f32 %v1821, 0.7978846
    %v1886 = vmul.f32 %v1822, 0.7978846
    %v1887 = vmul.f32 %v1823, 0.7978846
    %v1888 = vmul.f32 %v1824, 0.7978846
    %v1889 = vmul.f32 %v1825, 0.7978846
    %v1890 = vmul.f32 %v1826, 0.7978846
    %v1891 = vmul.f32 %v1827, 0.7978846
    %v1892 = vmul.f32 %v1828, 0.7978846
    %v1893 = vmul.f32 %v1829, 0.7978846
    %v1894 = vmul.f32 %v1830, 0.7978846
    %v1895 = vmul.f32 %v1831, 0.7978846
    %v1896 = vmul.f32 %v1832, 0.7978846
    %v1897 = vmul.f32 %v1833, 0.7978846
    %v1898 = vmul.f32 %v1834, 0.7978846
    %v1899 = vmul.f32 %v1835, 0.7978846
    %v1900 = vmul.f32 %v1836, 0.7978846
    %v1901 = vmul.f32 %v1837, 0.7978846
    %v1902 = vmul.f32 %v1838, 0.7978846
    %v1903 = vmul.f32 %v1839, 0.7978846
    %v1904 = vmul.f32 %v1840, 0.7978846
    %v1905 = vmul.f32 %v1841, 0.7978846
    %v1906 = vmul.f32 %v1842, 0.7978846
    %v1907 = vmul.f32 %v1843, 0.7978846
    %v1908 = vmul.f32 %v1844, 0.7978846
    %v1909 = vmul.f32 %v1845, 0.7978846
    %v1910 = vmul.f32 %v1846, 0.7978846
    %v1911 = vmul.f32 %v1847, 0.7978846
    %v1912 = vmul.f32 %v1848, 0.7978846
    %v1913 = vmul.f32 %v1849, 0.7978846
    %v1914 = vmul.f32 %v1850, 0.7978846
    %v1915 = vmul.f32 %v1851, 0.7978846
    %v1916 = vmul.f32 %v1852, 0.7978846
    %v1917 = vmul.f32 %v1853, 0.7978846
    %v1918 = vmul.f32 %v1854, 0.7978846
    %v1919 = vmul.f32 %v1855, 0.7978846
    %v1920 = vmul.f32 %v1856, 0.7978846
    %v1921 = vmul.f32 %v1857, 0.7978846
    %v1922 = vmul.f32 %v1858, 0.7978846
    %v1923 = vmul.f32 %v1859, 0.7978846
    %v1924 = vmul.f32 %v1860, 0.7978846
    %v1925 = vmul.f32 %v1861, 0.7978846
    %v1926 = vmul.f32 %v1862, 0.7978846
    %v1927 = vmul.f32 %v1863, 0.7978846
    %v1928 = vmul.f32 %v1864, 0.7978846
    %v1929 = vmul.f32 %v1865, 0.7978846
    %v1930 = vmul.f32 %v1866, 0.7978846
    %v1931 = vmul.f32 %v1867, 0.7978846
    %v1932 = vmul.f32 %v1868, 0.7978846
    %v1933 = vmul.f32 %v1869, 0.7978846
    %v1934 = vtanh.pop %v1870
    %v1935 = vtanh.pop %v1871
    %v1936 = vtanh.pop %v1872
    %v1937 = vtanh.pop %v1873
    %v1938 = vtanh.pop %v1874
    %v1939 = vtanh.pop %v1875
    %v1940 = vtanh.pop %v1876
    %v1941 = vtanh.pop %v1877
    %v1942 = vtanh.pop %v1878
    %v1943 = vtanh.pop %v1879
    %v1944 = vtanh.pop %v1880
    %v1945 = vtanh.pop %v1881
    %v1946 = vtanh.pop %v1882
    %v1947 = vtanh.pop %v1883
    %v1948 = vtanh.pop %v1884
    %v1949 = vtanh.pop %v1885
    %v1950 = vtanh.pop %v1886
    %v1951 = vtanh.pop %v1887
    %v1952 = vtanh.pop %v1888
    %v1953 = vtanh.pop %v1889
    %v1954 = vtanh.pop %v1890
    %v1955 = vtanh.pop %v1891
    %v1956 = vtanh.pop %v1892
    %v1957 = vtanh.pop %v1893
    %v1958 = vtanh.pop %v1894
    %v1959 = vtanh.pop %v1895
    %v1960 = vtanh.pop %v1896
    %v1961 = vtanh.pop %v1897
    %v1962 = vtanh.pop %v1898
    %v1963 = vtanh.pop %v1899
    %v1964 = vtanh.pop %v1900
    %v1965 = vtanh.pop %v1901
    %v1966 = vtanh.pop %v1902
    %v1967 = vtanh.pop %v1903
    %v1968 = vtanh.pop %v1904
    %v1969 = vtanh.pop %v1905
    %v1970 = vtanh.pop %v1906
    %v1971 = vtanh.pop %v1907
    %v1972 = vtanh.pop %v1908
    %v1973 = vtanh.pop %v1909
    %v1974 = vtanh.pop %v1910
    %v1975 = vtanh.pop %v1911
    %v1976 = vtanh.pop %v1912
    %v1977 = vtanh.pop %v1913
    %v1978 = vtanh.pop %v1914
    %v1979 = vtanh.pop %v1915
    %v1980 = vtanh.pop %v1916
    %v1981 = vtanh.pop %v1917
    %v1982 = vtanh.pop %v1918
    %v1983 = vtanh.pop %v1919
    %v1984 = vtanh.pop %v1920
    %v1985 = vtanh.pop %v1921
    %v1986 = vtanh.pop %v1922
    %v1987 = vtanh.pop %v1923
    %v1988 = vtanh.pop %v1924
    %v1989 = vtanh.pop %v1925
    %v1990 = vtanh.pop %v1926
    %v1991 = vtanh.pop %v1927
    %v1992 = vtanh.pop %v1928
    %v1993 = vtanh.pop %v1929
    %v1994 = vtanh.pop %v1930
    %v1995 = vtanh.pop %v1931
    %v1996 = vtanh.pop %v1932
    %v1997 = vtanh.pop %v1933
    %v1998 = vadd.f32 %v1934, 1.0
    %v1999 = vadd.f32 %v1935, 1.0
    %v2000 = vadd.f32 %v1936, 1.0
    %v2001 = vadd.f32 %v1937, 1.0
    %v2002 = vadd.f32 %v1938, 1.0
    %v2003 = vadd.f32 %v1939, 1.0
    %v2004 = vadd.f32 %v1940, 1.0
    %v2005 = vadd.f32 %v1941, 1.0
    %v2006 = vadd.f32 %v1942, 1.0
    %v2007 = vadd.f32 %v1943, 1.0
    %v2008 = vadd.f32 %v1944, 1.0
    %v2009 = vadd.f32 %v1945, 1.0
    %v2010 = vadd.f32 %v1946, 1.0
    %v2011 = vadd.f32 %v1947, 1.0
    %v2012 = vadd.f32 %v1948, 1.0
    %v2013 = vadd.f32 %v1949, 1.0
    %v2014 = vadd.f32 %v1950, 1.0
    %v2015 = vadd.f32 %v1951, 1.0
    %v2016 = vadd.f32 %v1952, 1.0
    %v2017 = vadd.f32 %v1953, 1.0
    %v2018 = vadd.f32 %v1954, 1.0
    %v2019 = vadd.f32 %v1955, 1.0
    %v2020 = vadd.f32 %v1956, 1.0
    %v2021 = vadd.f32 %v1957, 1.0
    %v2022 = vadd.f32 %v1958, 1.0
    %v2023 = vadd.f32 %v1959, 1.0
    %v2024 = vadd.f32 %v1960, 1.0
    %v2025 = vadd.f32 %v1961, 1.0
    %v2026 = vadd.f32 %v1962, 1.0
    %v2027 = vadd.f32 %v1963, 1.0
    %v2028 = vadd.f32 %v1964, 1.0
    %v2029 = vadd.f32 %v1965, 1.0
    %v2030 = vadd.f32 %v1966, 1.0
    %v2031 = vadd.f32 %v1967, 1.0
    %v2032 = vadd.f32 %v1968, 1.0
    %v2033 = vadd.f32 %v1969, 1.0
    %v2034 = vadd.f32 %v1970, 1.0
    %v2035 = vadd.f32 %v1971, 1.0
    %v2036 = vadd.f32 %v1972, 1.0
    %v2037 = vadd.f32 %v1973, 1.0
    %v2038 = vadd.f32 %v1974, 1.0
    %v2039 = vadd.f32 %v1975, 1.0
    %v2040 = vadd.f32 %v1976, 1.0
    %v2041 = vadd.f32 %v1977, 1.0
    %v2042 = vadd.f32 %v1978, 1.0
    %v2043 = vadd.f32 %v1979, 1.0
    %v2044 = vadd.f32 %v1980, 1.0
    %v2045 = vadd.f32 %v1981, 1.0
    %v2046 = vadd.f32 %v1982, 1.0
    %v2047 = vadd.f32 %v1983, 1.0
    %v2048 = vadd.f32 %v1984, 1.0
    %v2049 = vadd.f32 %v1985, 1.0
    %v2050 = vadd.f32 %v1986, 1.0
    %v2051 = vadd.f32 %v1987, 1.0
    %v2052 = vadd.f32 %v1988, 1.0
    %v2053 = vadd.f32 %v1989, 1.0
    %v2054 = vadd.f32 %v1990, 1.0
    %v2055 = vadd.f32 %v1991, 1.0
    %v2056 = vadd.f32 %v1992, 1.0
    %v2057 = vadd.f32 %v1993, 1.0
    %v2058 = vadd.f32 %v1994, 1.0
    %v2059 = vadd.f32 %v1995, 1.0
    %v2060 = vadd.f32 %v1996, 1.0
    %v2061 = vadd.f32 %v1997, 1.0
    %v2062 = vmul.f32 %v1998, 0.5
    %v2063 = vmul.f32 %v1999, 0.5
    %v2064 = vmul.f32 %v2000, 0.5
    %v2065 = vmul.f32 %v2001, 0.5
    %v2066 = vmul.f32 %v2002, 0.5
    %v2067 = vmul.f32 %v2003, 0.5
    %v2068 = vmul.f32 %v2004, 0.5
    %v2069 = vmul.f32 %v2005, 0.5
    %v2070 = vmul.f32 %v2006, 0.5
    %v2071 = vmul.f32 %v2007, 0.5
    %v2072 = vmul.f32 %v2008, 0.5
    %v2073 = vmul.f32 %v2009, 0.5
    %v2074 = vmul.f32 %v2010, 0.5
    %v2075 = vmul.f32 %v2011, 0.5
    %v2076 = vmul.f32 %v2012, 0.5
    %v2077 = vmul.f32 %v2013, 0.5
    %v2078 = vmul.f32 %v2014, 0.5
    %v2079 = vmul.f32 %v2015, 0.5
    %v2080 = vmul.f32 %v2016, 0.5
    %v2081 = vmul.f32 %v2017, 0.5
    %v2082 = vmul.f32 %v2018, 0.5
    %v2083 = vmul.f32 %v2019, 0.5
    %v2084 = vmul.f32 %v2020, 0.5
    %v2085 = vmul.f32 %v2021, 0.5
    %v2086 = vmul.f32 %v2022, 0.5
    %v2087 = vmul.f32 %v2023, 0.5
    %v2088 = vmul.f32 %v2024, 0.5
    %v2089 = vmul.f32 %v2025, 0.5
    %v2090 = vmul.f32 %v2026, 0.5
    %v2091 = vmul.f32 %v2027, 0.5
    %v2092 = vmul.f32 %v2028, 0.5
    %v2093 = vmul.f32 %v2029, 0.5
    %v2094 = vmul.f32 %v2030, 0.5
    %v2095 = vmul.f32 %v2031, 0.5
    %v2096 = vmul.f32 %v2032, 0.5
    %v2097 = vmul.f32 %v2033, 0.5
    %v2098 = vmul.f32 %v2034, 0.5
    %v2099 = vmul.f32 %v2035, 0.5
    %v2100 = vmul.f32 %v2036, 0.5
    %v2101 = vmul.f32 %v2037, 0.5
    %v2102 = vmul.f32 %v2038, 0.5
    %v2103 = vmul.f32 %v2039, 0.5
    %v2104 = vmul.f32 %v2040, 0.5
    %v2105 = vmul.f32 %v2041, 0.5
    %v2106 = vmul.f32 %v2042, 0.5
    %v2107 = vmul.f32 %v2043, 0.5
    %v2108 = vmul.f32 %v2044, 0.5
    %v2109 = vmul.f32 %v2045, 0.5
    %v2110 = vmul.f32 %v2046, 0.5
    %v2111 = vmul.f32 %v2047, 0.5
    %v2112 = vmul.f32 %v2048, 0.5
    %v2113 = vmul.f32 %v2049, 0.5
    %v2114 = vmul.f32 %v2050, 0.5
    %v2115 = vmul.f32 %v2051, 0.5
    %v2116 = vmul.f32 %v2052, 0.5
    %v2117 = vmul.f32 %v2053, 0.5
    %v2118 = vmul.f32 %v2054, 0.5
    %v2119 = vmul.f32 %v2055, 0.5
    %v2120 = vmul.f32 %v2056, 0.5
    %v2121 = vmul.f32 %v2057, 0.5
    %v2122 = vmul.f32 %v2058, 0.5
    %v2123 = vmul.f32 %v2059, 0.5
    %v2124 = vmul.f32 %v2060, 0.5
    %v2125 = vmul.f32 %v2061, 0.5
    %v2126 = vmul.f32 %v1550, %v2062
    %v2127 = vmul.f32 %v1551, %v2063
    %v2128 = vmul.f32 %v1552, %v2064
    %v2129 = vmul.f32 %v1553, %v2065
    %v2130 = vmul.f32 %v1554, %v2066
    %v2131 = vmul.f32 %v1555, %v2067
    %v2132 = vmul.f32 %v1556, %v2068
    %v2133 = vmul.f32 %v1557, %v2069
    %v2134 = vmul.f32 %v1558, %v2070
    %v2135 = vmul.f32 %v1559, %v2071
    %v2136 = vmul.f32 %v1560, %v2072
    %v2137 = vmul.f32 %v1561, %v2073
    %v2138 = vmul.f32 %v1562, %v2074
    %v2139 = vmul.f32 %v1563, %v2075
    %v2140 = vmul.f32 %v1564, %v2076
    %v2141 = vmul.f32 %v1565, %v2077
    %v2142 = vmul.f32 %v1566, %v2078
    %v2143 = vmul.f32 %v1567, %v2079
    %v2144 = vmul.f32 %v1568, %v2080
    %v2145 = vmul.f32 %v1569, %v2081
    %v2146 = vmul.f32 %v1570, %v2082
    %v2147 = vmul.f32 %v1571, %v2083
    %v2148 = vmul.f32 %v1572, %v2084
    %v2149 = vmul.f32 %v1573, %v2085
    %v2150 = vmul.f32 %v1574, %v2086
    %v2151 = vmul.f32 %v1575, %v2087
    %v2152 = vmul.f32 %v1576, %v2088
    %v2153 = vmul.f32 %v1577, %v2089
    %v2154 = vmul.f32 %v1578, %v2090
    %v2155 = vmul.f32 %v1579, %v2091
    %v2156 = vmul.f32 %v1580, %v2092
    %v2157 = vmul.f32 %v1581, %v2093
    %v2158 = vmul.f32 %v1582, %v2094
    %v2159 = vmul.f32 %v1583, %v2095
    %v2160 = vmul.f32 %v1584, %v2096
    %v2161 = vmul.f32 %v1585, %v2097
    %v2162 = vmul.f32 %v1586, %v2098
    %v2163 = vmul.f32 %v1587, %v2099
    %v2164 = vmul.f32 %v1588, %v2100
    %v2165 = vmul.f32 %v1589, %v2101
    %v2166 = vmul.f32 %v1590, %v2102
    %v2167 = vmul.f32 %v1591, %v2103
    %v2168 = vmul.f32 %v1592, %v2104
    %v2169 = vmul.f32 %v1593, %v2105
    %v2170 = vmul.f32 %v1594, %v2106
    %v2171 = vmul.f32 %v1595, %v2107
    %v2172 = vmul.f32 %v1596, %v2108
    %v2173 = vmul.f32 %v1597, %v2109
    %v2174 = vmul.f32 %v1598, %v2110
    %v2175 = vmul.f32 %v1599, %v2111
    %v2176 = vmul.f32 %v1600, %v2112
    %v2177 = vmul.f32 %v1601, %v2113
    %v2178 = vmul.f32 %v1602, %v2114
    %v2179 = vmul.f32 %v1603, %v2115
    %v2180 = vmul.f32 %v1604, %v2116
    %v2181 = vmul.f32 %v1605, %v2117
    %v2182 = vmul.f32 %v1606, %v2118
    %v2183 = vmul.f32 %v1607, %v2119
    %v2184 = vmul.f32 %v1608, %v2120
    %v2185 = vmul.f32 %v1609, %v2121
    %v2186 = vmul.f32 %v1610, %v2122
    %v2187 = vmul.f32 %v1611, %v2123
    %v2188 = vmul.f32 %v1612, %v2124
    %v2189 = vmul.f32 %v1613, %v2125
    %v2190 = vpack.c.bf16 %v2130, %v2126
    %v2191 = vpack.c.bf16 %v2131, %v2127
    %v2192 = vpack.c.bf16 %v2132, %v2128
    %v2193 = vpack.c.bf16 %v2133, %v2129
    %v2194 = vpack.c.bf16 %v2138, %v2134
    %v2195 = vpack.c.bf16 %v2139, %v2135
    %v2196 = vpack.c.bf16 %v2140, %v2136
    %v2197 = vpack.c.bf16 %v2141, %v2137
    %v2198 = vpack.c.bf16 %v2146, %v2142
    %v2199 = vpack.c.bf16 %v2147, %v2143
    %v2200 = vpack.c.bf16 %v2148, %v2144
    %v2201 = vpack.c.bf16 %v2149, %v2145
    %v2202 = vpack.c.bf16 %v2154, %v2150
    %v2203 = vpack.c.bf16 %v2155, %v2151
    %v2204 = vpack.c.bf16 %v2156, %v2152
    %v2205 = vpack.c.bf16 %v2157, %v2153
    %v2206 = vpack.c.bf16 %v2162, %v2158
    %v2207 = vpack.c.bf16 %v2163, %v2159
    %v2208 = vpack.c.bf16 %v2164, %v2160
    %v2209 = vpack.c.bf16 %v2165, %v2161
    %v2210 = vpack.c.bf16 %v2170, %v2166
    %v2211 = vpack.c.bf16 %v2171, %v2167
    %v2212 = vpack.c.bf16 %v2172, %v2168
    %v2213 = vpack.c.bf16 %v2173, %v2169
    %v2214 = vpack.c.bf16 %v2178, %v2174
    %v2215 = vpack.c.bf16 %v2179, %v2175
    %v2216 = vpack.c.bf16 %v2180, %v2176
    %v2217 = vpack.c.bf16 %v2181, %v2177
    %v2218 = vpack.c.bf16 %v2186, %v2182
    %v2219 = vpack.c.bf16 %v2187, %v2183
    %v2220 = vpack.c.bf16 %v2188, %v2184
    %v2221 = vpack.c.bf16 %v2189, %v2185
    %v2254 = vunpack.c.l.b16 %v2190
    %v2255 = vunpack.c.l.b16 %v2191
    %v2256 = vunpack.c.l.b16 %v2192
    %v2257 = vunpack.c.l.b16 %v2193
    %v2258 = vunpack.c.h.b16 %v2190
    %v2259 = vunpack.c.h.b16 %v2191
    %v2260 = vunpack.c.h.b16 %v2192
    %v2261 = vunpack.c.h.b16 %v2193
    %v2262 = vunpack.c.l.b16 %v2194
    %v2263 = vunpack.c.l.b16 %v2195
    %v2264 = vunpack.c.l.b16 %v2196
    %v2265 = vunpack.c.l.b16 %v2197
    %v2266 = vunpack.c.h.b16 %v2194
    %v2267 = vunpack.c.h.b16 %v2195
    %v2268 = vunpack.c.h.b16 %v2196
    %v2269 = vunpack.c.h.b16 %v2197
    %v2270 = vunpack.c.l.b16 %v2198
    %v2271 = vunpack.c.l.b16 %v2199
    %v2272 = vunpack.c.l.b16 %v2200
    %v2273 = vunpack.c.l.b16 %v2201
    %v2274 = vunpack.c.h.b16 %v2198
    %v2275 = vunpack.c.h.b16 %v2199
    %v2276 = vunpack.c.h.b16 %v2200
    %v2277 = vunpack.c.h.b16 %v2201
    %v2278 = vunpack.c.l.b16 %v2202
    %v2279 = vunpack.c.l.b16 %v2203
    %v2280 = vunpack.c.l.b16 %v2204
    %v2281 = vunpack.c.l.b16 %v2205
    %v2282 = vunpack.c.h.b16 %v2202
    %v2283 = vunpack.c.h.b16 %v2203
    %v2284 = vunpack.c.h.b16 %v2204
    %v2285 = vunpack.c.h.b16 %v2205
    %v2286 = vunpack.c.l.b16 %v2206
    %v2287 = vunpack.c.l.b16 %v2207
    %v2288 = vunpack.c.l.b16 %v2208
    %v2289 = vunpack.c.l.b16 %v2209
    %v2290 = vunpack.c.h.b16 %v2206
    %v2291 = vunpack.c.h.b16 %v2207
    %v2292 = vunpack.c.h.b16 %v2208
    %v2293 = vunpack.c.h.b16 %v2209
    %v2294 = vunpack.c.l.b16 %v2210
    %v2295 = vunpack.c.l.b16 %v2211
    %v2296 = vunpack.c.l.b16 %v2212
    %v2297 = vunpack.c.l.b16 %v2213
    %v2298 = vunpack.c.h.b16 %v2210
    %v2299 = vunpack.c.h.b16 %v2211
    %v2300 = vunpack.c.h.b16 %v2212
    %v2301 = vunpack.c.h.b16 %v2213
    %v2302 = vunpack.c.l.b16 %v2214
    %v2303 = vunpack.c.l.b16 %v2215
    %v2304 = vunpack.c.l.b16 %v2216
    %v2305 = vunpack.c.l.b16 %v2217
    %v2306 = vunpack.c.h.b16 %v2214
    %v2307 = vunpack.c.h.b16 %v2215
    %v2308 = vunpack.c.h.b16 %v2216
    %v2309 = vunpack.c.h.b16 %v2217
    %v2310 = vunpack.c.l.b16 %v2218
    %v2311 = vunpack.c.l.b16 %v2219
    %v2312 = vunpack.c.l.b16 %v2220
    %v2313 = vunpack.c.l.b16 %v2221
    %v2314 = vunpack.c.h.b16 %v2218
    %v2315 = vunpack.c.h.b16 %v2219
    %v2316 = vunpack.c.h.b16 %v2220
    %v2317 = vunpack.c.h.b16 %v2221
    %v2318 = vpack.c.b16 %v2255, %v2254
    %v2319 = vpack.c.b16 %v2257, %v2256
    %v2320 = vpack.c.b16 %v2259, %v2258
    %v2321 = vpack.c.b16 %v2261, %v2260
    %v2322 = vpack.c.b16 %v2263, %v2262
    %v2323 = vpack.c.b16 %v2265, %v2264
    %v2324 = vpack.c.b16 %v2267, %v2266
    %v2325 = vpack.c.b16 %v2269, %v2268
    %v2326 = vpack.c.b16 %v2271, %v2270
    %v2327 = vpack.c.b16 %v2273, %v2272
    %v2328 = vpack.c.b16 %v2275, %v2274
    %v2329 = vpack.c.b16 %v2277, %v2276
    %v2330 = vpack.c.b16 %v2279, %v2278
    %v2331 = vpack.c.b16 %v2281, %v2280
    %v2332 = vpack.c.b16 %v2283, %v2282
    %v2333 = vpack.c.b16 %v2285, %v2284
    %v2334 = vpack.c.b16 %v2287, %v2286
    %v2335 = vpack.c.b16 %v2289, %v2288
    %v2336 = vpack.c.b16 %v2291, %v2290
    %v2337 = vpack.c.b16 %v2293, %v2292
    %v2338 = vpack.c.b16 %v2295, %v2294
    %v2339 = vpack.c.b16 %v2297, %v2296
    %v2340 = vpack.c.b16 %v2299, %v2298
    %v2341 = vpack.c.b16 %v2301, %v2300
    %v2342 = vpack.c.b16 %v2303, %v2302
    %v2343 = vpack.c.b16 %v2305, %v2304
    %v2344 = vpack.c.b16 %v2307, %v2306
    %v2345 = vpack.c.b16 %v2309, %v2308
    %v2346 = vpack.c.b16 %v2311, %v2310
    %v2347 = vpack.c.b16 %v2313, %v2312
    %v2348 = vpack.c.b16 %v2315, %v2314
    %v2349 = vpack.c.b16 %v2317, %v2316
    %2382 = vst [vmem:[%s4] sm:$0xff] %v2318
    %2383 = vst [vmem:[%s4 + $0x8] sm:$0xff] %v2319
    %2384 = vst [vmem:[%s4 + $0x10] sm:$0xff] %v2320
    %2385 = vst [vmem:[%s4 + $0x18] sm:$0xff] %v2321
    %2386 = vst [vmem:[%s4 + $0x20] sm:$0xff] %v2322
    %2387 = vst [vmem:[%s4 + $0x28] sm:$0xff] %v2323
    %2388 = vst [vmem:[%s4 + $0x30] sm:$0xff] %v2324
    %2389 = vst [vmem:[%s4 + $0x38] sm:$0xff] %v2325
    %2390 = vst [vmem:[%s4 + $0x40] sm:$0xff] %v2326
    %2391 = vst [vmem:[%s4 + $0x48] sm:$0xff] %v2327
    %2392 = vst [vmem:[%s4 + $0x50] sm:$0xff] %v2328
    %2393 = vst [vmem:[%s4 + $0x58] sm:$0xff] %v2329
    %2394 = vst [vmem:[%s4 + $0x60] sm:$0xff] %v2330
    %2395 = vst [vmem:[%s4 + $0x68] sm:$0xff] %v2331
    %2396 = vst [vmem:[%s4 + $0x70] sm:$0xff] %v2332
    %2397 = vst [vmem:[%s4 + $0x78] sm:$0xff] %v2333
    %2398 = vst [vmem:[%s4 + $0x80] sm:$0xff] %v2334
    %2399 = vst [vmem:[%s4 + $0x88] sm:$0xff] %v2335
    %2400 = vst [vmem:[%s4 + $0x90] sm:$0xff] %v2336
    %2401 = vst [vmem:[%s4 + $0x98] sm:$0xff] %v2337
    %2402 = vst [vmem:[%s4 + $0xa0] sm:$0xff] %v2338
    %2403 = vst [vmem:[%s4 + $0xa8] sm:$0xff] %v2339
    %2404 = vst [vmem:[%s4 + $0xb0] sm:$0xff] %v2340
    %2405 = vst [vmem:[%s4 + $0xb8] sm:$0xff] %v2341
    %2406 = vst [vmem:[%s4 + $0xc0] sm:$0xff] %v2342
    %2407 = vst [vmem:[%s4 + $0xc8] sm:$0xff] %v2343
    %2408 = vst [vmem:[%s4 + $0xd0] sm:$0xff] %v2344
    %2409 = vst [vmem:[%s4 + $0xd8] sm:$0xff] %v2345
    %2410 = vst [vmem:[%s4 + $0xe0] sm:$0xff] %v2346
    %2411 = vst [vmem:[%s4 + $0xe8] sm:$0xff] %v2347
    %2412 = vst [vmem:[%s4 + $0xf0] sm:$0xff] %v2348
    %2413 = vst [vmem:[%s4 + $0xf8] sm:$0xff] %v2349
  $region29: #{forward.3} parent=0 // pred_fallthru
    _
  // Predicated region
  $region30: #{forward.3} parent=0 // pred_check
    _
  $region31: #{forward.3} parent=0 // pred_check_branch
    %2415 = sbr.rel (0) target = $region33
  $region32: #{forward.3} parent=0 // pred_region
    _
  $region33: #{forward.3} parent=0 // pred_fallthru
    _
  // Predicated region
  $region34: #{forward.3} parent=0 // pred_check
    _
  $region35: #{forward.3} parent=0 // pred_check_branch
    %2417 = sbr.rel (0) target = $region37
  $region36: #{forward.3} parent=0 // pred_region
    _
  $region37: #{forward.3} parent=0 // pred_fallthru
    _

</llo_original>
